<compile_context>
chip_gen: v7x
topology: tpu7x:2x2x1
jax: 0.10.0
libtpu: 0.0.40
codegen_flags: <defaults>
</compile_context>

<pallas_src>
import jax
import jax.numpy as jnp
from jax import lax
from jax.experimental import pallas as pl
from jax.experimental.pallas import tpu as pltpu

N_HEADS = 8  # nn.MultiheadAttention(hidden_size, 8)


def _sigmoid(x):
    # 1 / (1 + exp(-x)) with the divide pushed to the EUP reciprocal slot.
    return pl.reciprocal(1.0 + jnp.exp(-x), approx=True)


def decoder_kernel(emb_ref, key_ref, ctx_ref, h0_ref, h1_ref,
                   wq_ref, bq_ref, wk_ref, bk_ref, wv_ref, bv_ref,
                   wo_ref, bo_ref,
                   w0e_ref, w0c_ref, bi0_ref, w0h_ref, bh0_ref,
                   w1i_ref, bi1_ref, w1h_ref, bh1_ref,
                   wout_ref, bout_ref,
                   logp_ref, h0_out_ref, h1_out_ref):
    # Block shapes (per grid step = one batch tile of TB rows):
    #   emb_ref (TB,E)  key_ref (TB,H)  ctx_ref (S,TB,H)  h0/h1 (TB,H)
    #   weights: full arrays; gate weights stacked [3, in, H] (r, z, n).
    S, TB, H = ctx_ref.shape
    hd = H // N_HEADS
    scale = 1.0 / float(hd) ** 0.5

    def dot(a, b):
        return jnp.dot(a, b, preferred_element_type=jnp.float32)

    # ---- multi-head attention (single query token, all heads at once) ----
    ctx = ctx_ref[...]                                             # [S, TB, H]
    q = (dot(key_ref[...], wq_ref[...]) + bq_ref[...]) * scale     # [TB, H]

    # batched projections over the source axis: [S, TB, H] @ [H, H]
    wk_b = jnp.broadcast_to(wk_ref[...], (S, H, H))
    wv_b = jnp.broadcast_to(wv_ref[...], (S, H, H))
    k = jnp.einsum('sbh,shk->sbk', ctx, wk_b,
                   preferred_element_type=jnp.float32) + bk_ref[...]
    v = jnp.einsum('sbh,shk->sbk', ctx, wv_b,
                   preferred_element_type=jnp.float32) + bv_ref[...]

    # head-membership masks from 2-D iota (no integer division needed)
    lane = lax.broadcasted_iota(jnp.int32, (H, N_HEADS), 0)
    head = lax.broadcasted_iota(jnp.int32, (H, N_HEADS), 1)
    mask_hn = ((lane >= head * hd) & (lane < (head + 1) * hd)).astype(jnp.float32)
    head2 = lax.broadcasted_iota(jnp.int32, (N_HEADS, H), 0)
    lane2 = lax.broadcasted_iota(jnp.int32, (N_HEADS, H), 1)
    mask_nh = ((lane2 >= head2 * hd) & (lane2 < (head2 + 1) * hd)).astype(jnp.float32)

    # scores[s, b, n] = sum_{h in head n} q[b, h] * k[s, b, h]
    scores = jnp.einsum('sbh,shn->sbn', k * q[None, :, :],
                        jnp.broadcast_to(mask_hn, (S, H, N_HEADS)),
                        preferred_element_type=jnp.float32)        # [S, TB, N]

    # one softmax over the source axis for every (batch, head) pair
    mmax = jnp.max(scores, axis=0, keepdims=True)
    p = jnp.exp(scores - mmax)
    p = p * pl.reciprocal(jnp.sum(p, axis=0, keepdims=True), approx=True)

    # broadcast head probabilities back to feature lanes, weighted sum over S
    p_full = jnp.einsum('sbn,snh->sbh', p,
                        jnp.broadcast_to(mask_nh, (S, N_HEADS, H)),
                        preferred_element_type=jnp.float32)        # [S, TB, H]
    attn = jnp.sum(p_full * v, axis=0)                             # [TB, H]
    context = dot(attn, wo_ref[...]) + bo_ref[...]                 # [TB, H]

    # ---- 2-layer GRU, single time step (PyTorch gate order: r, z, n) ----
    # rnn_input = cat([embedded, context]) is never materialized: layer-0 W_ih
    # was pre-split into an embedding part (w0e) and a context part (w0c).
    emb = emb_ref[...]                                             # [TB, E]
    h0 = h0_ref[...]
    h1 = h1_ref[...]

    gi_r = dot(emb, w0e_ref[0]) + dot(context, w0c_ref[0]) + bi0_ref[0]
    gi_z = dot(emb, w0e_ref[1]) + dot(context, w0c_ref[1]) + bi0_ref[1]
    gi_n = dot(emb, w0e_ref[2]) + dot(context, w0c_ref[2]) + bi0_ref[2]
    gh_r = dot(h0, w0h_ref[0]) + bh0_ref[0]
    gh_z = dot(h0, w0h_ref[1]) + bh0_ref[1]
    gh_n = dot(h0, w0h_ref[2]) + bh0_ref[2]
    r0 = _sigmoid(gi_r + gh_r)
    z0 = _sigmoid(gi_z + gh_z)
    n0 = jnp.tanh(gi_n + r0 * gh_n)
    h0_new = (1.0 - z0) * n0 + z0 * h0

    # TODO(synk): nn.GRU inter-layer dropout (p=0.5) is training-only; omitted.
    gi_r1 = dot(h0_new, w1i_ref[0]) + bi1_ref[0]
    gi_z1 = dot(h0_new, w1i_ref[1]) + bi1_ref[1]
    gi_n1 = dot(h0_new, w1i_ref[2]) + bi1_ref[2]
    gh_r1 = dot(h1, w1h_ref[0]) + bh1_ref[0]
    gh_z1 = dot(h1, w1h_ref[1]) + bh1_ref[1]
    gh_n1 = dot(h1, w1h_ref[2]) + bh1_ref[2]
    r1 = _sigmoid(gi_r1 + gh_r1)
    z1 = _sigmoid(gi_z1 + gh_z1)
    n1 = jnp.tanh(gi_n1 + r1 * gh_n1)
    h1_new = (1.0 - z1) * n1 + z1 * h1

    # ---- output projection + log_softmax (dense [TB, V] store) ----
    # TODO(synk): for realistic vocab sizes tile this matmul over a V grid
    # axis with a streaming logsumexp and an explicit vmem_limit_bytes.
    logits = dot(h1_new, wout_ref[...]) + bout_ref[...]            # [TB, V]
    mx = jnp.max(logits, axis=-1, keepdims=True)
    sh = logits - mx
    lse = jnp.log(jnp.sum(jnp.exp(sh), axis=-1, keepdims=True))

    logp_ref[...] = sh - lse
    h0_out_ref[...] = h0_new
    h1_out_ref[...] = h1_new


def _row_spec(tb, cols):
    return pl.BlockSpec((tb, cols), lambda b: (b, 0))


def _full_spec(shape):
    nd = len(shape)
    return pl.BlockSpec(tuple(shape), lambda b, _nd=nd: (0,) * _nd)


def decoder_forward(params, inpt, last_hidden, context_encoder, n_layer=2):
    """inpt: [B] int32, last_hidden: [L, B, H], context_encoder: [S, B, H]."""
    embed_tab = params["embed"]
    E = embed_tab.shape[1]
    L, B, H = last_hidden.shape
    assert L >= n_layer, "last_hidden must carry at least n_layer layers"
    S = context_encoder.shape[0]
    V = params["out_w_t"].shape[1]

    # glue (cheap XLA ops): embedding gather + hidden-sum query.  The encoder
    # context stays seq-first [S, B, H] -- no transpose / extra HBM roundtrip.
    embedded = embed_tab[inpt]                     # [B, E]
    key = jnp.sum(last_hidden, axis=0)             # [B, H]
    h_in = last_hidden[-n_layer:]
    h0, h1 = h_in[0], h_in[1]                      # [B, H] each

    TB = B if B <= 128 else 128                    # whole batch in one step here
    assert B % TB == 0
    grid = (B // TB,)

    weights = (params["wq_t"], params["bq"], params["wk_t"], params["bk"],
               params["wv_t"], params["bv"], params["wo_t"], params["bo"],
               params["w0e"], params["w0c"], params["bi0"],
               params["w0h"], params["bh0"],
               params["w1i"], params["bi1"], params["w1h"], params["bh1"],
               params["out_w_t"], params["out_b"])
    inputs = (embedded, key, context_encoder, h0, h1) + weights

    in_specs = ([_row_spec(TB, E),
                 _row_spec(TB, H),
                 pl.BlockSpec((S, TB, H), lambda b: (0, b, 0)),
                 _row_spec(TB, H),
                 _row_spec(TB, H)]
                + [_full_spec(w.shape) for w in weights])

    out_shapes = (jax.ShapeDtypeStruct((B, V), jnp.float32),
                  jax.ShapeDtypeStruct((B, H), jnp.float32),
                  jax.ShapeDtypeStruct((B, H), jnp.float32))
    out_specs = [_row_spec(TB, V), _row_spec(TB, H), _row_spec(TB, H)]

    logp, h0n, h1n = pl.pallas_call(
        decoder_kernel,
        grid=grid,
        in_specs=in_specs,
        out_specs=out_specs,
        out_shape=out_shapes,
        compiler_params=pltpu.CompilerParams(
            dimension_semantics=("parallel",)),    # batch tiles are independent
    )(*inputs)

    hidden = jnp.stack([h0n, h1n], axis=0)          # [n_layer, B, H]
    # PyTorch: hidden.squeeze(0) is a no-op for n_layer == 2
    return logp, hidden


def init_params(rng, E, H, V):
    ks = jax.random.split(rng, 12)

    def rnd(k, shape, scale=0.1):
        return (scale * jax.random.normal(k, shape)).astype(jnp.float32)

    embed = rnd(ks[0], (V, E), 0.5)
    # nn.MultiheadAttention(H, 8): in_proj [3H, H] (+bias), out_proj [H, H] (+bias)
    in_proj_w = rnd(ks[1], (3 * H, H))
    in_proj_b = rnd(ks[2], (3 * H,), 0.01)
    wq, wk, wv = in_proj_w[:H], in_proj_w[H:2 * H], in_proj_w[2 * H:]
    bq, bk, bv = in_proj_b[:H], in_proj_b[H:2 * H], in_proj_b[2 * H:]
    out_proj_w = rnd(ks[3], (H, H))
    out_proj_b = rnd(ks[4], (H,), 0.01)
    # nn.GRU(H + E, H, num_layers=2); rnn_input = cat([embedded, context]):
    # columns [:E] of weight_ih_l0 act on the embedding, [E:] on the context.
    w_ih0 = rnd(ks[5], (3 * H, E + H))
    w_hh0 = rnd(ks[6], (3 * H, H))
    b_ih0 = jnp.zeros((3 * H,), jnp.float32)   # init_weight(): bias_ih_l0 = 0
    b_hh0 = jnp.zeros((3 * H,), jnp.float32)   # init_weight(): bias_hh_l0 = 0
    w_ih1 = rnd(ks[7], (3 * H, H))
    w_hh1 = rnd(ks[8], (3 * H, H))
    b_ih1 = rnd(ks[9], (3 * H,), 0.01)
    b_hh1 = rnd(ks[10], (3 * H,), 0.01)
    # nn.Linear(H, V)
    out_w = rnd(ks[11], (V, H))
    out_b = jnp.zeros((V,), jnp.float32)

    def gate_w(w):   # [3H, in] (PyTorch r,z,n rows) -> [3, in, H] for x @ W
        return jnp.stack([w[g * H:(g + 1) * H, :].T for g in range(3)], axis=0)

    def gate_b(b):   # [3H] -> [3, 1, H]
        return jnp.stack([b[g * H:(g + 1) * H].reshape(1, H) for g in range(3)],
                         axis=0)

    row = lambda x: x.reshape(1, -1)
    return dict(
        embed=embed,
        wq_t=wq.T, bq=row(bq), wk_t=wk.T, bk=row(bk), wv_t=wv.T, bv=row(bv),
        wo_t=out_proj_w.T, bo=row(out_proj_b),
        w0e=gate_w(w_ih0[:, :E]), w0c=gate_w(w_ih0[:, E:]), bi0=gate_b(b_ih0),
        w0h=gate_w(w_hh0), bh0=gate_b(b_hh0),
        w1i=gate_w(w_ih1), bi1=gate_b(b_ih1),
        w1h=gate_w(w_hh1), bh1=gate_b(b_hh1),
        out_w_t=out_w.T, out_b=row(out_b),
    )


if __name__ == "__main__":
    embed_size, hidden_size, output_size = 32, 32, 64
    n_layer, batch, src_len = 2, 4, 8

    rng = jax.random.PRNGKey(0)
    rng, pk, ik, hk, ck = jax.random.split(rng, 5)
    params = init_params(pk, embed_size, hidden_size, output_size)

    inpt = jax.random.randint(ik, (batch,), 0, output_size, dtype=jnp.int32)
    last_hidden = 0.1 * jax.random.normal(
        hk, (n_layer, batch, hidden_size), dtype=jnp.float32)
    context_encoder = 0.1 * jax.random.normal(
        ck, (src_len, batch, hidden_size), dtype=jnp.float32)

    output, hidden = decoder_forward(params, inpt, last_hidden,
                                     context_encoder, n_layer=n_layer)
    jax.block_until_ready((output, hidden))

    assert output.shape == (batch, output_size)
    assert hidden.shape == (n_layer, batch, hidden_size)
    assert bool(jnp.all(jnp.isfinite(output))) and bool(jnp.all(jnp.isfinite(hidden)))
    # log_softmax rows must (log-)sum to ~1
    assert bool(jnp.allclose(jnp.sum(jnp.exp(output), axis=1), 1.0, atol=1e-4))
    print("KERNEL_OK")
</pallas_src>

<mosaic_0001>
module attributes {stable_mosaic.version = 11 : i64} {
  func.func @decoder_kernel(%arg0: i32, %arg1: memref<4x32xf32, #tpu.memory_space<vmem>>, %arg2: memref<4x32xf32, #tpu.memory_space<vmem>>, %arg3: memref<8x4x32xf32, #tpu.memory_space<vmem>>, %arg4: memref<4x32xf32, #tpu.memory_space<vmem>>, %arg5: memref<4x32xf32, #tpu.memory_space<vmem>>, %arg6: memref<32x32xf32, #tpu.memory_space<vmem>>, %arg7: memref<1x32xf32, #tpu.memory_space<vmem>>, %arg8: memref<32x32xf32, #tpu.memory_space<vmem>>, %arg9: memref<1x32xf32, #tpu.memory_space<vmem>>, %arg10: memref<32x32xf32, #tpu.memory_space<vmem>>, %arg11: memref<1x32xf32, #tpu.memory_space<vmem>>, %arg12: memref<32x32xf32, #tpu.memory_space<vmem>>, %arg13: memref<1x32xf32, #tpu.memory_space<vmem>>, %arg14: memref<3x32x32xf32, #tpu.memory_space<vmem>>, %arg15: memref<3x32x32xf32, #tpu.memory_space<vmem>>, %arg16: memref<3x1x32xf32, #tpu.memory_space<vmem>>, %arg17: memref<3x32x32xf32, #tpu.memory_space<vmem>>, %arg18: memref<3x1x32xf32, #tpu.memory_space<vmem>>, %arg19: memref<3x32x32xf32, #tpu.memory_space<vmem>>, %arg20: memref<3x1x32xf32, #tpu.memory_space<vmem>>, %arg21: memref<3x32x32xf32, #tpu.memory_space<vmem>>, %arg22: memref<3x1x32xf32, #tpu.memory_space<vmem>>, %arg23: memref<32x64xf32, #tpu.memory_space<vmem>>, %arg24: memref<1x64xf32, #tpu.memory_space<vmem>>, %arg25: memref<4x64xf32, #tpu.memory_space<vmem>>, %arg26: memref<4x32xf32, #tpu.memory_space<vmem>>, %arg27: memref<4x32xf32, #tpu.memory_space<vmem>>) attributes {dimension_semantics = [#tpu.dimension_semantics<parallel>], iteration_bounds = array<i64: 1>, scalar_prefetch = 0 : i64, scratch_operands = 0 : i64, tpu.core_type = #tpu.core_type<tc>, window_params = [{transform_indices = @transform_0, window_bounds = array<i64: 4, 32>}, {transform_indices = @transform_1, window_bounds = array<i64: 4, 32>}, {transform_indices = @transform_2, window_bounds = array<i64: 8, 4, 32>}, {transform_indices = @transform_3, window_bounds = array<i64: 4, 32>}, {transform_indices = @transform_4, window_bounds = array<i64: 4, 32>}, {pipeline_mode = #tpu.pipeline_mode<synchronous>, transform_indices = @transform_5, window_bounds = array<i64: 32, 32>}, {pipeline_mode = #tpu.pipeline_mode<synchronous>, transform_indices = @transform_6, window_bounds = array<i64: 1, 32>}, {pipeline_mode = #tpu.pipeline_mode<synchronous>, transform_indices = @transform_7, window_bounds = array<i64: 32, 32>}, {pipeline_mode = #tpu.pipeline_mode<synchronous>, transform_indices = @transform_8, window_bounds = array<i64: 1, 32>}, {pipeline_mode = #tpu.pipeline_mode<synchronous>, transform_indices = @transform_9, window_bounds = array<i64: 32, 32>}, {pipeline_mode = #tpu.pipeline_mode<synchronous>, transform_indices = @transform_10, window_bounds = array<i64: 1, 32>}, {pipeline_mode = #tpu.pipeline_mode<synchronous>, transform_indices = @transform_11, window_bounds = array<i64: 32, 32>}, {pipeline_mode = #tpu.pipeline_mode<synchronous>, transform_indices = @transform_12, window_bounds = array<i64: 1, 32>}, {pipeline_mode = #tpu.pipeline_mode<synchronous>, transform_indices = @transform_13, window_bounds = array<i64: 3, 32, 32>}, {pipeline_mode = #tpu.pipeline_mode<synchronous>, transform_indices = @transform_14, window_bounds = array<i64: 3, 32, 32>}, {pipeline_mode = #tpu.pipeline_mode<synchronous>, transform_indices = @transform_15, window_bounds = array<i64: 3, 1, 32>}, {pipeline_mode = #tpu.pipeline_mode<synchronous>, transform_indices = @transform_16, window_bounds = array<i64: 3, 32, 32>}, {pipeline_mode = #tpu.pipeline_mode<synchronous>, transform_indices = @transform_17, window_bounds = array<i64: 3, 1, 32>}, {pipeline_mode = #tpu.pipeline_mode<synchronous>, transform_indices = @transform_18, window_bounds = array<i64: 3, 32, 32>}, {pipeline_mode = #tpu.pipeline_mode<synchronous>, transform_indices = @transform_19, window_bounds = array<i64: 3, 1, 32>}, {pipeline_mode = #tpu.pipeline_mode<synchronous>, transform_indices = @transform_20, window_bounds = array<i64: 3, 32, 32>}, {pipeline_mode = #tpu.pipeline_mode<synchronous>, transform_indices = @transform_21, window_bounds = array<i64: 3, 1, 32>}, {pipeline_mode = #tpu.pipeline_mode<synchronous>, transform_indices = @transform_22, window_bounds = array<i64: 32, 64>}, {pipeline_mode = #tpu.pipeline_mode<synchronous>, transform_indices = @transform_23, window_bounds = array<i64: 1, 64>}, {transform_indices = @transform_24, window_bounds = array<i64: 4, 64>}, {transform_indices = @transform_25, window_bounds = array<i64: 4, 32>}, {transform_indices = @transform_26, window_bounds = array<i64: 4, 32>}]} {
    %c0 = arith.constant 0 : index
    %c0_0 = arith.constant 0 : index
    %c0_1 = arith.constant 0 : index
    %0 = vector.load %arg3[%c0, %c0_0, %c0_1] : memref<8x4x32xf32, #tpu.memory_space<vmem>>, vector<8x4x32xf32>
    %c0_2 = arith.constant 0 : index
    %c0_3 = arith.constant 0 : index
    %1 = vector.load %arg2[%c0_2, %c0_3] : memref<4x32xf32, #tpu.memory_space<vmem>>, vector<4x32xf32>
    %c0_4 = arith.constant 0 : index
    %c0_5 = arith.constant 0 : index
    %2 = vector.load %arg6[%c0_4, %c0_5] : memref<32x32xf32, #tpu.memory_space<vmem>>, vector<32x32xf32>
    %cst = arith.constant dense<0.000000e+00> : vector<4x32xf32>
    %3 = tpu.matmul %1, %2, %cst {dimension_numbers = #tpu.dot_dimension_numbers<[1], [0], [0], [1], [0, 0, 1, 1], [], []>} : vector<4x32xf32>, vector<32x32xf32>, vector<4x32xf32> -> vector<4x32xf32>
    %c0_6 = arith.constant 0 : index
    %c0_7 = arith.constant 0 : index
    %4 = vector.load %arg7[%c0_6, %c0_7] : memref<1x32xf32, #tpu.memory_space<vmem>>, vector<1x32xf32>
    %5 = vector.broadcast %4 : vector<1x32xf32> to vector<4x32xf32>
    %6 = arith.addf %3, %5 : vector<4x32xf32>
    %cst_8 = arith.constant 5.000000e-01 : f32
    %7 = vector.broadcast %cst_8 : f32 to vector<4x32xf32>
    %8 = arith.mulf %6, %7 : vector<4x32xf32>
    %c0_9 = arith.constant 0 : index
    %c0_10 = arith.constant 0 : index
    %9 = vector.load %arg8[%c0_9, %c0_10] : memref<32x32xf32, #tpu.memory_space<vmem>>, vector<32x32xf32>
    %10 = vector.shape_cast %9 : vector<32x32xf32> to vector<1x32x32xf32>
    %11 = vector.broadcast %10 : vector<1x32x32xf32> to vector<8x32x32xf32>
    %c0_11 = arith.constant 0 : index
    %c0_12 = arith.constant 0 : index
    %12 = vector.load %arg10[%c0_11, %c0_12] : memref<32x32xf32, #tpu.memory_space<vmem>>, vector<32x32xf32>
    %13 = vector.shape_cast %12 : vector<32x32xf32> to vector<1x32x32xf32>
    %14 = vector.broadcast %13 : vector<1x32x32xf32> to vector<8x32x32xf32>
    "tpu.trace_start"() <{level = 10 : i32, message = "sbh,shk->sbk"}> : () -> ()
    %cst_13 = arith.constant dense<0.000000e+00> : vector<8x4x32xf32>
    %15 = tpu.matmul %0, %11, %cst_13 {dimension_numbers = #tpu.dot_dimension_numbers<[2], [1], [1], [2], [0, 0, 0, 1, 1, 2], [0], [0]>} : vector<8x4x32xf32>, vector<8x32x32xf32>, vector<8x4x32xf32> -> vector<8x4x32xf32>
    "tpu.trace_stop"() : () -> ()
    %c0_14 = arith.constant 0 : index
    %c0_15 = arith.constant 0 : index
    %16 = vector.load %arg9[%c0_14, %c0_15] : memref<1x32xf32, #tpu.memory_space<vmem>>, vector<1x32xf32>
    %17 = vector.shape_cast %16 : vector<1x32xf32> to vector<1x1x32xf32>
    %18 = vector.broadcast %17 : vector<1x1x32xf32> to vector<8x4x32xf32>
    %19 = arith.addf %15, %18 : vector<8x4x32xf32>
    "tpu.trace_start"() <{level = 10 : i32, message = "sbh,shk->sbk"}> : () -> ()
    %cst_16 = arith.constant dense<0.000000e+00> : vector<8x4x32xf32>
    %20 = tpu.matmul %0, %14, %cst_16 {dimension_numbers = #tpu.dot_dimension_numbers<[2], [1], [1], [2], [0, 0, 0, 1, 1, 2], [0], [0]>} : vector<8x4x32xf32>, vector<8x32x32xf32>, vector<8x4x32xf32> -> vector<8x4x32xf32>
    "tpu.trace_stop"() : () -> ()
    %c0_17 = arith.constant 0 : index
    %c0_18 = arith.constant 0 : index
    %21 = vector.load %arg11[%c0_17, %c0_18] : memref<1x32xf32, #tpu.memory_space<vmem>>, vector<1x32xf32>
    %22 = vector.shape_cast %21 : vector<1x32xf32> to vector<1x1x32xf32>
    %23 = vector.broadcast %22 : vector<1x1x32xf32> to vector<8x4x32xf32>
    %24 = arith.addf %20, %23 : vector<8x4x32xf32>
    %25 = tpu.iota {dimensions = array<i32: 0>} : vector<32x8xi32>
    %26 = tpu.iota {dimensions = array<i32: 1>} : vector<32x8xi32>
    %c4_i32 = arith.constant 4 : i32
    %27 = vector.broadcast %c4_i32 : i32 to vector<32x8xi32>
    %28 = arith.muli %26, %27 : vector<32x8xi32>
    %29 = arith.cmpi sge, %25, %28 : vector<32x8xi32>
    %c1_i32 = arith.constant 1 : i32
    %30 = vector.broadcast %c1_i32 : i32 to vector<32x8xi32>
    %31 = arith.addi %26, %30 : vector<32x8xi32>
    %c4_i32_19 = arith.constant 4 : i32
    %32 = vector.broadcast %c4_i32_19 : i32 to vector<32x8xi32>
    %33 = arith.muli %31, %32 : vector<32x8xi32>
    %34 = arith.cmpi slt, %25, %33 : vector<32x8xi32>
    %35 = arith.andi %29, %34 : vector<32x8xi1>
    %36 = arith.extui %35 : vector<32x8xi1> to vector<32x8xi32>
    %37 = arith.sitofp %36 : vector<32x8xi32> to vector<32x8xf32>
    %38 = tpu.iota {dimensions = array<i32: 0>} : vector<8x32xi32>
    %39 = tpu.iota {dimensions = array<i32: 1>} : vector<8x32xi32>
    %c4_i32_20 = arith.constant 4 : i32
    %40 = vector.broadcast %c4_i32_20 : i32 to vector<8x32xi32>
    %41 = arith.muli %38, %40 : vector<8x32xi32>
    %42 = arith.cmpi sge, %39, %41 : vector<8x32xi32>
    %c1_i32_21 = arith.constant 1 : i32
    %43 = vector.broadcast %c1_i32_21 : i32 to vector<8x32xi32>
    %44 = arith.addi %38, %43 : vector<8x32xi32>
    %c4_i32_22 = arith.constant 4 : i32
    %45 = vector.broadcast %c4_i32_22 : i32 to vector<8x32xi32>
    %46 = arith.muli %44, %45 : vector<8x32xi32>
    %47 = arith.cmpi slt, %39, %46 : vector<8x32xi32>
    %48 = arith.andi %42, %47 : vector<8x32xi1>
    %49 = arith.extui %48 : vector<8x32xi1> to vector<8x32xi32>
    %50 = arith.sitofp %49 : vector<8x32xi32> to vector<8x32xf32>
    %51 = vector.shape_cast %8 : vector<4x32xf32> to vector<1x4x32xf32>
    %52 = vector.broadcast %51 : vector<1x4x32xf32> to vector<8x4x32xf32>
    %53 = arith.mulf %19, %52 : vector<8x4x32xf32>
    %54 = vector.shape_cast %37 : vector<32x8xf32> to vector<1x32x8xf32>
    %55 = vector.broadcast %54 : vector<1x32x8xf32> to vector<8x32x8xf32>
    "tpu.trace_start"() <{level = 10 : i32, message = "sbh,shn->sbn"}> : () -> ()
    %cst_23 = arith.constant dense<0.000000e+00> : vector<8x4x8xf32>
    %56 = tpu.matmul %53, %55, %cst_23 {dimension_numbers = #tpu.dot_dimension_numbers<[2], [1], [1], [2], [0, 0, 0, 1, 1, 2], [0], [0]>} : vector<8x4x32xf32>, vector<8x32x8xf32>, vector<8x4x8xf32> -> vector<8x4x8xf32>
    "tpu.trace_stop"() : () -> ()
    %cst_24 = arith.constant dense<0xFF800000> : vector<4x8xf32>
    %57 = vector.multi_reduction <maximumf>, %56, %cst_24 [0] : vector<8x4x8xf32> to vector<4x8xf32>
    %58 = vector.shape_cast %57 : vector<4x8xf32> to vector<1x4x8xf32>
    %59 = vector.broadcast %58 : vector<1x4x8xf32> to vector<8x4x8xf32>
    %60 = arith.subf %56, %59 : vector<8x4x8xf32>
    %61 = math.exp %60 : vector<8x4x8xf32>
    %cst_25 = arith.constant dense<0.000000e+00> : vector<4x8xf32>
    %62 = vector.multi_reduction <add>, %61, %cst_25 [0] : vector<8x4x8xf32> to vector<4x8xf32>
    %63 = vector.shape_cast %62 : vector<4x8xf32> to vector<1x4x8xf32>
    %64 = tpu.reciprocal %63 {approx = true} : vector<1x4x8xf32> -> vector<1x4x8xf32>
    %65 = vector.broadcast %64 : vector<1x4x8xf32> to vector<8x4x8xf32>
    %66 = arith.mulf %61, %65 : vector<8x4x8xf32>
    %67 = vector.shape_cast %50 : vector<8x32xf32> to vector<1x8x32xf32>
    %68 = vector.broadcast %67 : vector<1x8x32xf32> to vector<8x8x32xf32>
    "tpu.trace_start"() <{level = 10 : i32, message = "sbn,snh->sbh"}> : () -> ()
    %cst_26 = arith.constant dense<0.000000e+00> : vector<8x4x32xf32>
    %69 = tpu.matmul %66, %68, %cst_26 {dimension_numbers = #tpu.dot_dimension_numbers<[2], [1], [1], [2], [0, 0, 0, 1, 1, 2], [0], [0]>} : vector<8x4x8xf32>, vector<8x8x32xf32>, vector<8x4x32xf32> -> vector<8x4x32xf32>
    "tpu.trace_stop"() : () -> ()
    %70 = arith.mulf %69, %24 : vector<8x4x32xf32>
    %cst_27 = arith.constant dense<0.000000e+00> : vector<4x32xf32>
    %71 = vector.multi_reduction <add>, %70, %cst_27 [0] : vector<8x4x32xf32> to vector<4x32xf32>
    %c0_28 = arith.constant 0 : index
    %c0_29 = arith.constant 0 : index
    %72 = vector.load %arg12[%c0_28, %c0_29] : memref<32x32xf32, #tpu.memory_space<vmem>>, vector<32x32xf32>
    %cst_30 = arith.constant dense<0.000000e+00> : vector<4x32xf32>
    %73 = tpu.matmul %71, %72, %cst_30 {dimension_numbers = #tpu.dot_dimension_numbers<[1], [0], [0], [1], [0, 0, 1, 1], [], []>} : vector<4x32xf32>, vector<32x32xf32>, vector<4x32xf32> -> vector<4x32xf32>
    %c0_31 = arith.constant 0 : index
    %c0_32 = arith.constant 0 : index
    %74 = vector.load %arg13[%c0_31, %c0_32] : memref<1x32xf32, #tpu.memory_space<vmem>>, vector<1x32xf32>
    %75 = vector.broadcast %74 : vector<1x32xf32> to vector<4x32xf32>
    %76 = arith.addf %73, %75 : vector<4x32xf32>
    %c0_33 = arith.constant 0 : index
    %c0_34 = arith.constant 0 : index
    %77 = vector.load %arg1[%c0_33, %c0_34] : memref<4x32xf32, #tpu.memory_space<vmem>>, vector<4x32xf32>
    %c0_35 = arith.constant 0 : index
    %c0_36 = arith.constant 0 : index
    %78 = vector.load %arg4[%c0_35, %c0_36] : memref<4x32xf32, #tpu.memory_space<vmem>>, vector<4x32xf32>
    %c0_37 = arith.constant 0 : index
    %c0_38 = arith.constant 0 : index
    %79 = vector.load %arg5[%c0_37, %c0_38] : memref<4x32xf32, #tpu.memory_space<vmem>>, vector<4x32xf32>
    %c0_39 = arith.constant 0 : index
    %c0_40 = arith.constant 0 : index
    %c0_41 = arith.constant 0 : index
    %80 = vector.load %arg14[%c0_39, %c0_40, %c0_41] : memref<3x32x32xf32, #tpu.memory_space<vmem>>, vector<1x32x32xf32>
    %81 = vector.shape_cast %80 : vector<1x32x32xf32> to vector<32x32xf32>
    %cst_42 = arith.constant dense<0.000000e+00> : vector<4x32xf32>
    %82 = tpu.matmul %77, %81, %cst_42 {dimension_numbers = #tpu.dot_dimension_numbers<[1], [0], [0], [1], [0, 0, 1, 1], [], []>} : vector<4x32xf32>, vector<32x32xf32>, vector<4x32xf32> -> vector<4x32xf32>
    %c0_43 = arith.constant 0 : index
    %c0_44 = arith.constant 0 : index
    %c0_45 = arith.constant 0 : index
    %83 = vector.load %arg15[%c0_43, %c0_44, %c0_45] : memref<3x32x32xf32, #tpu.memory_space<vmem>>, vector<1x32x32xf32>
    %84 = vector.shape_cast %83 : vector<1x32x32xf32> to vector<32x32xf32>
    %cst_46 = arith.constant dense<0.000000e+00> : vector<4x32xf32>
    %85 = tpu.matmul %76, %84, %cst_46 {dimension_numbers = #tpu.dot_dimension_numbers<[1], [0], [0], [1], [0, 0, 1, 1], [], []>} : vector<4x32xf32>, vector<32x32xf32>, vector<4x32xf32> -> vector<4x32xf32>
    %86 = arith.addf %82, %85 : vector<4x32xf32>
    %c0_47 = arith.constant 0 : index
    %c0_48 = arith.constant 0 : index
    %c0_49 = arith.constant 0 : index
    %87 = vector.load %arg16[%c0_47, %c0_48, %c0_49] : memref<3x1x32xf32, #tpu.memory_space<vmem>>, vector<1x1x32xf32>
    %88 = vector.shape_cast %87 : vector<1x1x32xf32> to vector<1x32xf32>
    %89 = vector.broadcast %88 : vector<1x32xf32> to vector<4x32xf32>
    %90 = arith.addf %86, %89 : vector<4x32xf32>
    %c1 = arith.constant 1 : index
    %c0_50 = arith.constant 0 : index
    %c0_51 = arith.constant 0 : index
    %91 = vector.load %arg14[%c1, %c0_50, %c0_51] : memref<3x32x32xf32, #tpu.memory_space<vmem>>, vector<1x32x32xf32>
    %92 = vector.shape_cast %91 : vector<1x32x32xf32> to vector<32x32xf32>
    %cst_52 = arith.constant dense<0.000000e+00> : vector<4x32xf32>
    %93 = tpu.matmul %77, %92, %cst_52 {dimension_numbers = #tpu.dot_dimension_numbers<[1], [0], [0], [1], [0, 0, 1, 1], [], []>} : vector<4x32xf32>, vector<32x32xf32>, vector<4x32xf32> -> vector<4x32xf32>
    %c1_53 = arith.constant 1 : index
    %c0_54 = arith.constant 0 : index
    %c0_55 = arith.constant 0 : index
    %94 = vector.load %arg15[%c1_53, %c0_54, %c0_55] : memref<3x32x32xf32, #tpu.memory_space<vmem>>, vector<1x32x32xf32>
    %95 = vector.shape_cast %94 : vector<1x32x32xf32> to vector<32x32xf32>
    %cst_56 = arith.constant dense<0.000000e+00> : vector<4x32xf32>
    %96 = tpu.matmul %76, %95, %cst_56 {dimension_numbers = #tpu.dot_dimension_numbers<[1], [0], [0], [1], [0, 0, 1, 1], [], []>} : vector<4x32xf32>, vector<32x32xf32>, vector<4x32xf32> -> vector<4x32xf32>
    %97 = arith.addf %93, %96 : vector<4x32xf32>
    %c1_57 = arith.constant 1 : index
    %c0_58 = arith.constant 0 : index
    %c0_59 = arith.constant 0 : index
    %98 = vector.load %arg16[%c1_57, %c0_58, %c0_59] : memref<3x1x32xf32, #tpu.memory_space<vmem>>, vector<1x1x32xf32>
    %99 = vector.shape_cast %98 : vector<1x1x32xf32> to vector<1x32xf32>
    %100 = vector.broadcast %99 : vector<1x32xf32> to vector<4x32xf32>
    %101 = arith.addf %97, %100 : vector<4x32xf32>
    %c2 = arith.constant 2 : index
    %c0_60 = arith.constant 0 : index
    %c0_61 = arith.constant 0 : index
    %102 = vector.load %arg14[%c2, %c0_60, %c0_61] : memref<3x32x32xf32, #tpu.memory_space<vmem>>, vector<1x32x32xf32>
    %103 = vector.shape_cast %102 : vector<1x32x32xf32> to vector<32x32xf32>
    %cst_62 = arith.constant dense<0.000000e+00> : vector<4x32xf32>
    %104 = tpu.matmul %77, %103, %cst_62 {dimension_numbers = #tpu.dot_dimension_numbers<[1], [0], [0], [1], [0, 0, 1, 1], [], []>} : vector<4x32xf32>, vector<32x32xf32>, vector<4x32xf32> -> vector<4x32xf32>
    %c2_63 = arith.constant 2 : index
    %c0_64 = arith.constant 0 : index
    %c0_65 = arith.constant 0 : index
    %105 = vector.load %arg15[%c2_63, %c0_64, %c0_65] : memref<3x32x32xf32, #tpu.memory_space<vmem>>, vector<1x32x32xf32>
    %106 = vector.shape_cast %105 : vector<1x32x32xf32> to vector<32x32xf32>
    %cst_66 = arith.constant dense<0.000000e+00> : vector<4x32xf32>
    %107 = tpu.matmul %76, %106, %cst_66 {dimension_numbers = #tpu.dot_dimension_numbers<[1], [0], [0], [1], [0, 0, 1, 1], [], []>} : vector<4x32xf32>, vector<32x32xf32>, vector<4x32xf32> -> vector<4x32xf32>
    %108 = arith.addf %104, %107 : vector<4x32xf32>
    %c2_67 = arith.constant 2 : index
    %c0_68 = arith.constant 0 : index
    %c0_69 = arith.constant 0 : index
    %109 = vector.load %arg16[%c2_67, %c0_68, %c0_69] : memref<3x1x32xf32, #tpu.memory_space<vmem>>, vector<1x1x32xf32>
    %110 = vector.shape_cast %109 : vector<1x1x32xf32> to vector<1x32xf32>
    %111 = vector.broadcast %110 : vector<1x32xf32> to vector<4x32xf32>
    %112 = arith.addf %108, %111 : vector<4x32xf32>
    %c0_70 = arith.constant 0 : index
    %c0_71 = arith.constant 0 : index
    %c0_72 = arith.constant 0 : index
    %113 = vector.load %arg17[%c0_70, %c0_71, %c0_72] : memref<3x32x32xf32, #tpu.memory_space<vmem>>, vector<1x32x32xf32>
    %114 = vector.shape_cast %113 : vector<1x32x32xf32> to vector<32x32xf32>
    %cst_73 = arith.constant dense<0.000000e+00> : vector<4x32xf32>
    %115 = tpu.matmul %78, %114, %cst_73 {dimension_numbers = #tpu.dot_dimension_numbers<[1], [0], [0], [1], [0, 0, 1, 1], [], []>} : vector<4x32xf32>, vector<32x32xf32>, vector<4x32xf32> -> vector<4x32xf32>
    %c0_74 = arith.constant 0 : index
    %c0_75 = arith.constant 0 : index
    %c0_76 = arith.constant 0 : index
    %116 = vector.load %arg18[%c0_74, %c0_75, %c0_76] : memref<3x1x32xf32, #tpu.memory_space<vmem>>, vector<1x1x32xf32>
    %117 = vector.shape_cast %116 : vector<1x1x32xf32> to vector<1x32xf32>
    %118 = vector.broadcast %117 : vector<1x32xf32> to vector<4x32xf32>
    %119 = arith.addf %115, %118 : vector<4x32xf32>
    %c1_77 = arith.constant 1 : index
    %c0_78 = arith.constant 0 : index
    %c0_79 = arith.constant 0 : index
    %120 = vector.load %arg17[%c1_77, %c0_78, %c0_79] : memref<3x32x32xf32, #tpu.memory_space<vmem>>, vector<1x32x32xf32>
    %121 = vector.shape_cast %120 : vector<1x32x32xf32> to vector<32x32xf32>
    %cst_80 = arith.constant dense<0.000000e+00> : vector<4x32xf32>
    %122 = tpu.matmul %78, %121, %cst_80 {dimension_numbers = #tpu.dot_dimension_numbers<[1], [0], [0], [1], [0, 0, 1, 1], [], []>} : vector<4x32xf32>, vector<32x32xf32>, vector<4x32xf32> -> vector<4x32xf32>
    %c1_81 = arith.constant 1 : index
    %c0_82 = arith.constant 0 : index
    %c0_83 = arith.constant 0 : index
    %123 = vector.load %arg18[%c1_81, %c0_82, %c0_83] : memref<3x1x32xf32, #tpu.memory_space<vmem>>, vector<1x1x32xf32>
    %124 = vector.shape_cast %123 : vector<1x1x32xf32> to vector<1x32xf32>
    %125 = vector.broadcast %124 : vector<1x32xf32> to vector<4x32xf32>
    %126 = arith.addf %122, %125 : vector<4x32xf32>
    %c2_84 = arith.constant 2 : index
    %c0_85 = arith.constant 0 : index
    %c0_86 = arith.constant 0 : index
    %127 = vector.load %arg17[%c2_84, %c0_85, %c0_86] : memref<3x32x32xf32, #tpu.memory_space<vmem>>, vector<1x32x32xf32>
    %128 = vector.shape_cast %127 : vector<1x32x32xf32> to vector<32x32xf32>
    %cst_87 = arith.constant dense<0.000000e+00> : vector<4x32xf32>
    %129 = tpu.matmul %78, %128, %cst_87 {dimension_numbers = #tpu.dot_dimension_numbers<[1], [0], [0], [1], [0, 0, 1, 1], [], []>} : vector<4x32xf32>, vector<32x32xf32>, vector<4x32xf32> -> vector<4x32xf32>
    %c2_88 = arith.constant 2 : index
    %c0_89 = arith.constant 0 : index
    %c0_90 = arith.constant 0 : index
    %130 = vector.load %arg18[%c2_88, %c0_89, %c0_90] : memref<3x1x32xf32, #tpu.memory_space<vmem>>, vector<1x1x32xf32>
    %131 = vector.shape_cast %130 : vector<1x1x32xf32> to vector<1x32xf32>
    %132 = vector.broadcast %131 : vector<1x32xf32> to vector<4x32xf32>
    %133 = arith.addf %129, %132 : vector<4x32xf32>
    %134 = arith.addf %90, %119 : vector<4x32xf32>
    %cst_91 = arith.constant 0.000000e+00 : f32
    %135 = vector.broadcast %cst_91 : f32 to vector<4x32xf32>
    %136 = arith.subf %135, %134 : vector<4x32xf32>
    %137 = math.exp %136 : vector<4x32xf32>
    %cst_92 = arith.constant 1.000000e+00 : f32
    %138 = vector.broadcast %cst_92 : f32 to vector<4x32xf32>
    %139 = arith.addf %138, %137 : vector<4x32xf32>
    %140 = tpu.reciprocal %139 {approx = true} : vector<4x32xf32> -> vector<4x32xf32>
    %141 = arith.addf %101, %126 : vector<4x32xf32>
    %cst_93 = arith.constant 0.000000e+00 : f32
    %142 = vector.broadcast %cst_93 : f32 to vector<4x32xf32>
    %143 = arith.subf %142, %141 : vector<4x32xf32>
    %144 = math.exp %143 : vector<4x32xf32>
    %cst_94 = arith.constant 1.000000e+00 : f32
    %145 = vector.broadcast %cst_94 : f32 to vector<4x32xf32>
    %146 = arith.addf %145, %144 : vector<4x32xf32>
    %147 = tpu.reciprocal %146 {approx = true} : vector<4x32xf32> -> vector<4x32xf32>
    %148 = arith.mulf %140, %133 : vector<4x32xf32>
    %149 = arith.addf %112, %148 : vector<4x32xf32>
    %150 = math.tanh %149 : vector<4x32xf32>
    %cst_95 = arith.constant 1.000000e+00 : f32
    %151 = vector.broadcast %cst_95 : f32 to vector<4x32xf32>
    %152 = arith.subf %151, %147 : vector<4x32xf32>
    %153 = arith.mulf %152, %150 : vector<4x32xf32>
    %154 = arith.mulf %147, %78 : vector<4x32xf32>
    %155 = arith.addf %153, %154 : vector<4x32xf32>
    %c0_96 = arith.constant 0 : index
    %c0_97 = arith.constant 0 : index
    %c0_98 = arith.constant 0 : index
    %156 = vector.load %arg19[%c0_96, %c0_97, %c0_98] : memref<3x32x32xf32, #tpu.memory_space<vmem>>, vector<1x32x32xf32>
    %157 = vector.shape_cast %156 : vector<1x32x32xf32> to vector<32x32xf32>
    %cst_99 = arith.constant dense<0.000000e+00> : vector<4x32xf32>
    %158 = tpu.matmul %155, %157, %cst_99 {dimension_numbers = #tpu.dot_dimension_numbers<[1], [0], [0], [1], [0, 0, 1, 1], [], []>} : vector<4x32xf32>, vector<32x32xf32>, vector<4x32xf32> -> vector<4x32xf32>
    %c0_100 = arith.constant 0 : index
    %c0_101 = arith.constant 0 : index
    %c0_102 = arith.constant 0 : index
    %159 = vector.load %arg20[%c0_100, %c0_101, %c0_102] : memref<3x1x32xf32, #tpu.memory_space<vmem>>, vector<1x1x32xf32>
    %160 = vector.shape_cast %159 : vector<1x1x32xf32> to vector<1x32xf32>
    %161 = vector.broadcast %160 : vector<1x32xf32> to vector<4x32xf32>
    %162 = arith.addf %158, %161 : vector<4x32xf32>
    %c1_103 = arith.constant 1 : index
    %c0_104 = arith.constant 0 : index
    %c0_105 = arith.constant 0 : index
    %163 = vector.load %arg19[%c1_103, %c0_104, %c0_105] : memref<3x32x32xf32, #tpu.memory_space<vmem>>, vector<1x32x32xf32>
    %164 = vector.shape_cast %163 : vector<1x32x32xf32> to vector<32x32xf32>
    %cst_106 = arith.constant dense<0.000000e+00> : vector<4x32xf32>
    %165 = tpu.matmul %155, %164, %cst_106 {dimension_numbers = #tpu.dot_dimension_numbers<[1], [0], [0], [1], [0, 0, 1, 1], [], []>} : vector<4x32xf32>, vector<32x32xf32>, vector<4x32xf32> -> vector<4x32xf32>
    %c1_107 = arith.constant 1 : index
    %c0_108 = arith.constant 0 : index
    %c0_109 = arith.constant 0 : index
    %166 = vector.load %arg20[%c1_107, %c0_108, %c0_109] : memref<3x1x32xf32, #tpu.memory_space<vmem>>, vector<1x1x32xf32>
    %167 = vector.shape_cast %166 : vector<1x1x32xf32> to vector<1x32xf32>
    %168 = vector.broadcast %167 : vector<1x32xf32> to vector<4x32xf32>
    %169 = arith.addf %165, %168 : vector<4x32xf32>
    %c2_110 = arith.constant 2 : index
    %c0_111 = arith.constant 0 : index
    %c0_112 = arith.constant 0 : index
    %170 = vector.load %arg19[%c2_110, %c0_111, %c0_112] : memref<3x32x32xf32, #tpu.memory_space<vmem>>, vector<1x32x32xf32>
    %171 = vector.shape_cast %170 : vector<1x32x32xf32> to vector<32x32xf32>
    %cst_113 = arith.constant dense<0.000000e+00> : vector<4x32xf32>
    %172 = tpu.matmul %155, %171, %cst_113 {dimension_numbers = #tpu.dot_dimension_numbers<[1], [0], [0], [1], [0, 0, 1, 1], [], []>} : vector<4x32xf32>, vector<32x32xf32>, vector<4x32xf32> -> vector<4x32xf32>
    %c2_114 = arith.constant 2 : index
    %c0_115 = arith.constant 0 : index
    %c0_116 = arith.constant 0 : index
    %173 = vector.load %arg20[%c2_114, %c0_115, %c0_116] : memref<3x1x32xf32, #tpu.memory_space<vmem>>, vector<1x1x32xf32>
    %174 = vector.shape_cast %173 : vector<1x1x32xf32> to vector<1x32xf32>
    %175 = vector.broadcast %174 : vector<1x32xf32> to vector<4x32xf32>
    %176 = arith.addf %172, %175 : vector<4x32xf32>
    %c0_117 = arith.constant 0 : index
    %c0_118 = arith.constant 0 : index
    %c0_119 = arith.constant 0 : index
    %177 = vector.load %arg21[%c0_117, %c0_118, %c0_119] : memref<3x32x32xf32, #tpu.memory_space<vmem>>, vector<1x32x32xf32>
    %178 = vector.shape_cast %177 : vector<1x32x32xf32> to vector<32x32xf32>
    %cst_120 = arith.constant dense<0.000000e+00> : vector<4x32xf32>
    %179 = tpu.matmul %79, %178, %cst_120 {dimension_numbers = #tpu.dot_dimension_numbers<[1], [0], [0], [1], [0, 0, 1, 1], [], []>} : vector<4x32xf32>, vector<32x32xf32>, vector<4x32xf32> -> vector<4x32xf32>
    %c0_121 = arith.constant 0 : index
    %c0_122 = arith.constant 0 : index
    %c0_123 = arith.constant 0 : index
    %180 = vector.load %arg22[%c0_121, %c0_122, %c0_123] : memref<3x1x32xf32, #tpu.memory_space<vmem>>, vector<1x1x32xf32>
    %181 = vector.shape_cast %180 : vector<1x1x32xf32> to vector<1x32xf32>
    %182 = vector.broadcast %181 : vector<1x32xf32> to vector<4x32xf32>
    %183 = arith.addf %179, %182 : vector<4x32xf32>
    %c1_124 = arith.constant 1 : index
    %c0_125 = arith.constant 0 : index
    %c0_126 = arith.constant 0 : index
    %184 = vector.load %arg21[%c1_124, %c0_125, %c0_126] : memref<3x32x32xf32, #tpu.memory_space<vmem>>, vector<1x32x32xf32>
    %185 = vector.shape_cast %184 : vector<1x32x32xf32> to vector<32x32xf32>
    %cst_127 = arith.constant dense<0.000000e+00> : vector<4x32xf32>
    %186 = tpu.matmul %79, %185, %cst_127 {dimension_numbers = #tpu.dot_dimension_numbers<[1], [0], [0], [1], [0, 0, 1, 1], [], []>} : vector<4x32xf32>, vector<32x32xf32>, vector<4x32xf32> -> vector<4x32xf32>
    %c1_128 = arith.constant 1 : index
    %c0_129 = arith.constant 0 : index
    %c0_130 = arith.constant 0 : index
    %187 = vector.load %arg22[%c1_128, %c0_129, %c0_130] : memref<3x1x32xf32, #tpu.memory_space<vmem>>, vector<1x1x32xf32>
    %188 = vector.shape_cast %187 : vector<1x1x32xf32> to vector<1x32xf32>
    %189 = vector.broadcast %188 : vector<1x32xf32> to vector<4x32xf32>
    %190 = arith.addf %186, %189 : vector<4x32xf32>
    %c2_131 = arith.constant 2 : index
    %c0_132 = arith.constant 0 : index
    %c0_133 = arith.constant 0 : index
    %191 = vector.load %arg21[%c2_131, %c0_132, %c0_133] : memref<3x32x32xf32, #tpu.memory_space<vmem>>, vector<1x32x32xf32>
    %192 = vector.shape_cast %191 : vector<1x32x32xf32> to vector<32x32xf32>
    %cst_134 = arith.constant dense<0.000000e+00> : vector<4x32xf32>
    %193 = tpu.matmul %79, %192, %cst_134 {dimension_numbers = #tpu.dot_dimension_numbers<[1], [0], [0], [1], [0, 0, 1, 1], [], []>} : vector<4x32xf32>, vector<32x32xf32>, vector<4x32xf32> -> vector<4x32xf32>
    %c2_135 = arith.constant 2 : index
    %c0_136 = arith.constant 0 : index
    %c0_137 = arith.constant 0 : index
    %194 = vector.load %arg22[%c2_135, %c0_136, %c0_137] : memref<3x1x32xf32, #tpu.memory_space<vmem>>, vector<1x1x32xf32>
    %195 = vector.shape_cast %194 : vector<1x1x32xf32> to vector<1x32xf32>
    %196 = vector.broadcast %195 : vector<1x32xf32> to vector<4x32xf32>
    %197 = arith.addf %193, %196 : vector<4x32xf32>
    %198 = arith.addf %162, %183 : vector<4x32xf32>
    %cst_138 = arith.constant 0.000000e+00 : f32
    %199 = vector.broadcast %cst_138 : f32 to vector<4x32xf32>
    %200 = arith.subf %199, %198 : vector<4x32xf32>
    %201 = math.exp %200 : vector<4x32xf32>
    %cst_139 = arith.constant 1.000000e+00 : f32
    %202 = vector.broadcast %cst_139 : f32 to vector<4x32xf32>
    %203 = arith.addf %202, %201 : vector<4x32xf32>
    %204 = tpu.reciprocal %203 {approx = true} : vector<4x32xf32> -> vector<4x32xf32>
    %205 = arith.addf %169, %190 : vector<4x32xf32>
    %cst_140 = arith.constant 0.000000e+00 : f32
    %206 = vector.broadcast %cst_140 : f32 to vector<4x32xf32>
    %207 = arith.subf %206, %205 : vector<4x32xf32>
    %208 = math.exp %207 : vector<4x32xf32>
    %cst_141 = arith.constant 1.000000e+00 : f32
    %209 = vector.broadcast %cst_141 : f32 to vector<4x32xf32>
    %210 = arith.addf %209, %208 : vector<4x32xf32>
    %211 = tpu.reciprocal %210 {approx = true} : vector<4x32xf32> -> vector<4x32xf32>
    %212 = arith.mulf %204, %197 : vector<4x32xf32>
    %213 = arith.addf %176, %212 : vector<4x32xf32>
    %214 = math.tanh %213 : vector<4x32xf32>
    %cst_142 = arith.constant 1.000000e+00 : f32
    %215 = vector.broadcast %cst_142 : f32 to vector<4x32xf32>
    %216 = arith.subf %215, %211 : vector<4x32xf32>
    %217 = arith.mulf %216, %214 : vector<4x32xf32>
    %218 = arith.mulf %211, %79 : vector<4x32xf32>
    %219 = arith.addf %217, %218 : vector<4x32xf32>
    %c0_143 = arith.constant 0 : index
    %c0_144 = arith.constant 0 : index
    %220 = vector.load %arg23[%c0_143, %c0_144] : memref<32x64xf32, #tpu.memory_space<vmem>>, vector<32x64xf32>
    %cst_145 = arith.constant dense<0.000000e+00> : vector<4x64xf32>
    %221 = tpu.matmul %219, %220, %cst_145 {dimension_numbers = #tpu.dot_dimension_numbers<[1], [0], [0], [1], [0, 0, 1, 1], [], []>} : vector<4x32xf32>, vector<32x64xf32>, vector<4x64xf32> -> vector<4x64xf32>
    %c0_146 = arith.constant 0 : index
    %c0_147 = arith.constant 0 : index
    %222 = vector.load %arg24[%c0_146, %c0_147] : memref<1x64xf32, #tpu.memory_space<vmem>>, vector<1x64xf32>
    %223 = vector.broadcast %222 : vector<1x64xf32> to vector<4x64xf32>
    %224 = arith.addf %221, %223 : vector<4x64xf32>
    %cst_148 = arith.constant dense<0xFF800000> : vector<4xf32>
    %225 = vector.multi_reduction <maximumf>, %224, %cst_148 [1] : vector<4x64xf32> to vector<4xf32>
    %226 = vector.shape_cast %225 : vector<4xf32> to vector<4x1xf32>
    %227 = vector.broadcast %226 : vector<4x1xf32> to vector<4x64xf32>
    %228 = arith.subf %224, %227 : vector<4x64xf32>
    %229 = math.exp %228 : vector<4x64xf32>
    %cst_149 = arith.constant dense<0.000000e+00> : vector<4xf32>
    %230 = vector.multi_reduction <add>, %229, %cst_149 [1] : vector<4x64xf32> to vector<4xf32>
    %231 = vector.shape_cast %230 : vector<4xf32> to vector<4x1xf32>
    %232 = math.log %231 : vector<4x1xf32>
    %233 = vector.broadcast %232 : vector<4x1xf32> to vector<4x64xf32>
    %234 = arith.subf %228, %233 : vector<4x64xf32>
    %c0_150 = arith.constant 0 : index
    %c0_151 = arith.constant 0 : index
    %235 = vector.load %arg25[%c0_150, %c0_151] : memref<4x64xf32, #tpu.memory_space<vmem>>, vector<4x64xf32>
    tpu.vector_store %arg25[%c0_150, %c0_151], %234 {strides = array<i32>} : memref<4x64xf32, #tpu.memory_space<vmem>>, vector<4x64xf32>,
    %c0_152 = arith.constant 0 : index
    %c0_153 = arith.constant 0 : index
    %236 = vector.load %arg26[%c0_152, %c0_153] : memref<4x32xf32, #tpu.memory_space<vmem>>, vector<4x32xf32>
    tpu.vector_store %arg26[%c0_152, %c0_153], %155 {strides = array<i32>} : memref<4x32xf32, #tpu.memory_space<vmem>>, vector<4x32xf32>,
    %c0_154 = arith.constant 0 : index
    %c0_155 = arith.constant 0 : index
    %237 = vector.load %arg27[%c0_154, %c0_155] : memref<4x32xf32, #tpu.memory_space<vmem>>, vector<4x32xf32>
    tpu.vector_store %arg27[%c0_154, %c0_155], %219 {strides = array<i32>} : memref<4x32xf32, #tpu.memory_space<vmem>>, vector<4x32xf32>,
    return
  }
  func.func @transform_0(%arg0: i32) -> (i32, i32) {
    %c0_i32 = arith.constant 0 : i32
    %c0_i32_0 = arith.constant 0 : i32
    return %arg0, %c0_i32 : i32, i32
  }
  func.func @transform_1(%arg0: i32) -> (i32, i32) {
    %c0_i32 = arith.constant 0 : i32
    %c0_i32_0 = arith.constant 0 : i32
    return %arg0, %c0_i32 : i32, i32
  }
  func.func @transform_2(%arg0: i32) -> (i32, i32, i32) {
    %c0_i32 = arith.constant 0 : i32
    %c0_i32_0 = arith.constant 0 : i32
    %c0_i32_1 = arith.constant 0 : i32
    return %c0_i32, %arg0, %c0_i32_0 : i32, i32, i32
  }
  func.func @transform_3(%arg0: i32) -> (i32, i32) {
    %c0_i32 = arith.constant 0 : i32
    %c0_i32_0 = arith.constant 0 : i32
    return %arg0, %c0_i32 : i32, i32
  }
  func.func @transform_4(%arg0: i32) -> (i32, i32) {
    %c0_i32 = arith.constant 0 : i32
    %c0_i32_0 = arith.constant 0 : i32
    return %arg0, %c0_i32 : i32, i32
  }
  func.func @transform_5(%arg0: i32) -> (i32, i32) {
    %c0_i32 = arith.constant 0 : i32
    %c0_i32_0 = arith.constant 0 : i32
    %c0_i32_1 = arith.constant 0 : i32
    return %c0_i32, %c0_i32_0 : i32, i32
  }
  func.func @transform_6(%arg0: i32) -> (i32, i32) {
    %c0_i32 = arith.constant 0 : i32
    %c0_i32_0 = arith.constant 0 : i32
    %c0_i32_1 = arith.constant 0 : i32
    return %c0_i32, %c0_i32_0 : i32, i32
  }
  func.func @transform_7(%arg0: i32) -> (i32, i32) {
    %c0_i32 = arith.constant 0 : i32
    %c0_i32_0 = arith.constant 0 : i32
    %c0_i32_1 = arith.constant 0 : i32
    return %c0_i32, %c0_i32_0 : i32, i32
  }
  func.func @transform_8(%arg0: i32) -> (i32, i32) {
    %c0_i32 = arith.constant 0 : i32
    %c0_i32_0 = arith.constant 0 : i32
    %c0_i32_1 = arith.constant 0 : i32
    return %c0_i32, %c0_i32_0 : i32, i32
  }
  func.func @transform_9(%arg0: i32) -> (i32, i32) {
    %c0_i32 = arith.constant 0 : i32
    %c0_i32_0 = arith.constant 0 : i32
    %c0_i32_1 = arith.constant 0 : i32
    return %c0_i32, %c0_i32_0 : i32, i32
  }
  func.func @transform_10(%arg0: i32) -> (i32, i32) {
    %c0_i32 = arith.constant 0 : i32
    %c0_i32_0 = arith.constant 0 : i32
    %c0_i32_1 = arith.constant 0 : i32
    return %c0_i32, %c0_i32_0 : i32, i32
  }
  func.func @transform_11(%arg0: i32) -> (i32, i32) {
    %c0_i32 = arith.constant 0 : i32
    %c0_i32_0 = arith.constant 0 : i32
    %c0_i32_1 = arith.constant 0 : i32
    return %c0_i32, %c0_i32_0 : i32, i32
  }
  func.func @transform_12(%arg0: i32) -> (i32, i32) {
    %c0_i32 = arith.constant 0 : i32
    %c0_i32_0 = arith.constant 0 : i32
    %c0_i32_1 = arith.constant 0 : i32
    return %c0_i32, %c0_i32_0 : i32, i32
  }
  func.func @transform_13(%arg0: i32) -> (i32, i32, i32) {
    %c0_i32 = arith.constant 0 : i32
    %c0_i32_0 = arith.constant 0 : i32
    %c0_i32_1 = arith.constant 0 : i32
    %c0_i32_2 = arith.constant 0 : i32
    return %c0_i32, %c0_i32_0, %c0_i32_1 : i32, i32, i32
  }
  func.func @transform_14(%arg0: i32) -> (i32, i32, i32) {
    %c0_i32 = arith.constant 0 : i32
    %c0_i32_0 = arith.constant 0 : i32
    %c0_i32_1 = arith.constant 0 : i32
    %c0_i32_2 = arith.constant 0 : i32
    return %c0_i32, %c0_i32_0, %c0_i32_1 : i32, i32, i32
  }
  func.func @transform_15(%arg0: i32) -> (i32, i32, i32) {
    %c0_i32 = arith.constant 0 : i32
    %c0_i32_0 = arith.constant 0 : i32
    %c0_i32_1 = arith.constant 0 : i32
    %c0_i32_2 = arith.constant 0 : i32
    return %c0_i32, %c0_i32_0, %c0_i32_1 : i32, i32, i32
  }
  func.func @transform_16(%arg0: i32) -> (i32, i32, i32) {
    %c0_i32 = arith.constant 0 : i32
    %c0_i32_0 = arith.constant 0 : i32
    %c0_i32_1 = arith.constant 0 : i32
    %c0_i32_2 = arith.constant 0 : i32
    return %c0_i32, %c0_i32_0, %c0_i32_1 : i32, i32, i32
  }
  func.func @transform_17(%arg0: i32) -> (i32, i32, i32) {
    %c0_i32 = arith.constant 0 : i32
    %c0_i32_0 = arith.constant 0 : i32
    %c0_i32_1 = arith.constant 0 : i32
    %c0_i32_2 = arith.constant 0 : i32
    return %c0_i32, %c0_i32_0, %c0_i32_1 : i32, i32, i32
  }
  func.func @transform_18(%arg0: i32) -> (i32, i32, i32) {
    %c0_i32 = arith.constant 0 : i32
    %c0_i32_0 = arith.constant 0 : i32
    %c0_i32_1 = arith.constant 0 : i32
    %c0_i32_2 = arith.constant 0 : i32
    return %c0_i32, %c0_i32_0, %c0_i32_1 : i32, i32, i32
  }
  func.func @transform_19(%arg0: i32) -> (i32, i32, i32) {
    %c0_i32 = arith.constant 0 : i32
    %c0_i32_0 = arith.constant 0 : i32
    %c0_i32_1 = arith.constant 0 : i32
    %c0_i32_2 = arith.constant 0 : i32
    return %c0_i32, %c0_i32_0, %c0_i32_1 : i32, i32, i32
  }
  func.func @transform_20(%arg0: i32) -> (i32, i32, i32) {
    %c0_i32 = arith.constant 0 : i32
    %c0_i32_0 = arith.constant 0 : i32
    %c0_i32_1 = arith.constant 0 : i32
    %c0_i32_2 = arith.constant 0 : i32
    return %c0_i32, %c0_i32_0, %c0_i32_1 : i32, i32, i32
  }
  func.func @transform_21(%arg0: i32) -> (i32, i32, i32) {
    %c0_i32 = arith.constant 0 : i32
    %c0_i32_0 = arith.constant 0 : i32
    %c0_i32_1 = arith.constant 0 : i32
    %c0_i32_2 = arith.constant 0 : i32
    return %c0_i32, %c0_i32_0, %c0_i32_1 : i32, i32, i32
  }
  func.func @transform_22(%arg0: i32) -> (i32, i32) {
    %c0_i32 = arith.constant 0 : i32
    %c0_i32_0 = arith.constant 0 : i32
    %c0_i32_1 = arith.constant 0 : i32
    return %c0_i32, %c0_i32_0 : i32, i32
  }
  func.func @transform_23(%arg0: i32) -> (i32, i32) {
    %c0_i32 = arith.constant 0 : i32
    %c0_i32_0 = arith.constant 0 : i32
    %c0_i32_1 = arith.constant 0 : i32
    return %c0_i32, %c0_i32_0 : i32, i32
  }
  func.func @transform_24(%arg0: i32) -> (i32, i32) {
    %c0_i32 = arith.constant 0 : i32
    %c0_i32_0 = arith.constant 0 : i32
    return %arg0, %c0_i32 : i32, i32
  }
  func.func @transform_25(%arg0: i32) -> (i32, i32) {
    %c0_i32 = arith.constant 0 : i32
    %c0_i32_0 = arith.constant 0 : i32
    return %arg0, %c0_i32 : i32, i32
  }
  func.func @transform_26(%arg0: i32) -> (i32, i32) {
    %c0_i32 = arith.constant 0 : i32
    %c0_i32_0 = arith.constant 0 : i32
    return %arg0, %c0_i32 : i32, i32
  }
}

</mosaic_0001>

<llo_original>
// kernel: tpu_custom_call.1
$region0: #{tpu_custom_call.1}
  #allocation0 [shape = 'u32[]', space=smem, size = 0x4, offset = 0x4, fixed_abs, tag = 'smem constant byte address 0x4 - core index']
  #allocation1 [shape = 'u32[144,128]{1,0:T(1,128)}', space=vmem, size = 0x12000, scoped, tag = 'internal scratch']
  %s0 = inlined_call_operand.hbm [shape: f32[4,32], index: 0, kind: input, shape index: {}]
  %s1 = inlined_call_operand.hbm [shape: f32[4,32], index: 1, kind: input, shape index: {}]
  %s2 = inlined_call_operand.hbm [shape: f32[8,4,32], index: 2, kind: input, shape index: {}]
  %s3 = inlined_call_operand.hbm [shape: f32[4,32], index: 3, kind: input, shape index: {}]
  %s4 = inlined_call_operand.hbm [shape: f32[4,32], index: 4, kind: input, shape index: {}]
  %s5 = inlined_call_operand.hbm [shape: f32[32,32], index: 5, kind: input, shape index: {}]
  %s6 = inlined_call_operand.hbm [shape: f32[1,32], index: 6, kind: input, shape index: {}]
  %s7 = inlined_call_operand.hbm [shape: f32[32,32], index: 7, kind: input, shape index: {}]
  %s8 = inlined_call_operand.hbm [shape: f32[1,32], index: 8, kind: input, shape index: {}]
  %s9 = inlined_call_operand.vmem [shape: f32[32,32], index: 9, kind: input, shape index: {}]
  %s10 = inlined_call_operand.hbm [shape: f32[1,32], index: 10, kind: input, shape index: {}]
  %s11 = inlined_call_operand.hbm [shape: f32[32,32], index: 11, kind: input, shape index: {}]
  %s12 = inlined_call_operand.hbm [shape: f32[1,32], index: 12, kind: input, shape index: {}]
  %s13 = inlined_call_operand.hbm [shape: f32[3,32,32], index: 13, kind: input, shape index: {}]
  %s14 = inlined_call_operand.hbm [shape: f32[3,32,32], index: 14, kind: input, shape index: {}]
  %s15 = inlined_call_operand.hbm [shape: f32[3,1,32], index: 15, kind: input, shape index: {}]
  %s16 = inlined_call_operand.hbm [shape: f32[3,32,32], index: 16, kind: input, shape index: {}]
  %s17 = inlined_call_operand.hbm [shape: f32[3,1,32], index: 17, kind: input, shape index: {}]
  %s18 = inlined_call_operand.hbm [shape: f32[3,32,32], index: 18, kind: input, shape index: {}]
  %s19 = inlined_call_operand.vmem [shape: f32[3,1,32], index: 19, kind: input, shape index: {}]
  %s20 = inlined_call_operand.hbm [shape: f32[3,32,32], index: 20, kind: input, shape index: {}]
  %s21 = inlined_call_operand.vmem [shape: f32[3,1,32], index: 21, kind: input, shape index: {}]
  %s22 = inlined_call_operand.vmem [shape: f32[32,64], index: 22, kind: input, shape index: {}]
  %s23 = inlined_call_operand.vmem [shape: f32[1,64], index: 23, kind: input, shape index: {}]
  %s24 = inlined_call_operand.hbm [shape: f32[4,64], index: 24, kind: output, shape index: {0}]
  %s25 = inlined_call_operand.hbm [shape: f32[4,32], index: 25, kind: output, shape index: {1}]
  %s26 = inlined_call_operand.hbm [shape: f32[4,32], index: 26, kind: output, shape index: {2}]
  %27 = xla_tuple %s24, %s25, %s26
  %s28 = sld [smem:[#allocation0]]
  $region198: #{tpu_custom_call.1} parent=0
    _
  %s30 = ssub.s32 1, %s28
  %s31 = scalar_select 0, %s30, %s28
  $region1: #{tpu_custom_call.1} parent=0
    #allocation2 [shape = 'u8[2048]{0}', space=vmem, size = 0x800, scoped, tag = 'input window, operand 0, single buffered']
    #allocation3 [shape = 's32[1]{0}', space=sflag, size = 0x4, scoped, tag = 'scoped memory for tpu_custom_call.1']
    #allocation4 [shape = 's32[1]{0}', space=sflag, size = 0x4, scoped, tag = 'scoped memory for tpu_custom_call.1']
    #allocation5 [shape = 'u8[2048]{0}', space=vmem, size = 0x800, scoped, tag = 'input window, operand 1, single buffered']
    #allocation6 [shape = 's32[1]{0}', space=sflag, size = 0x4, scoped, tag = 'scoped memory for tpu_custom_call.1']
    #allocation7 [shape = 'u8[16384]{0}', space=vmem, size = 0x4000, scoped, tag = 'input window, operand 2, single buffered']
    #allocation8 [shape = 'u8[2048]{0}', space=vmem, size = 0x800, scoped, tag = 'input window, operand 3, single buffered']
    #allocation9 [shape = 's32[1]{0}', space=sflag, size = 0x4, scoped, tag = 'scoped memory for tpu_custom_call.1']
    #allocation10 [shape = 'u8[2048]{0}', space=vmem, size = 0x800, scoped, tag = 'input window, operand 4, single buffered']
    #allocation11 [shape = 'u8[16384]{0}', space=vmem, size = 0x4000, scoped, tag = 'input window, operand 5, single buffered']
    #allocation12 [shape = 's32[1]{0}', space=sflag, size = 0x4, scoped, tag = 'scoped memory for tpu_custom_call.1']
    #allocation13 [shape = 'u8[512]{0}', space=vmem, size = 0x400, scoped, tag = 'input window, operand 6, single buffered']
    #allocation14 [shape = 'u8[16384]{0}', space=vmem, size = 0x4000, scoped, tag = 'input window, operand 7, single buffered']
    #allocation15 [shape = 's32[1]{0}', space=sflag, size = 0x4, scoped, tag = 'scoped memory for tpu_custom_call.1']
    #allocation16 [shape = 'u8[512]{0}', space=vmem, size = 0x400, scoped, tag = 'input window, operand 8, single buffered']
    #allocation17 [shape = 'u8[512]{0}', space=vmem, size = 0x400, scoped, tag = 'input window, operand 10, single buffered']
    #allocation18 [shape = 's32[1]{0}', space=sflag, size = 0x4, scoped, tag = 'scoped memory for tpu_custom_call.1']
    #allocation19 [shape = 'u8[16384]{0}', space=vmem, size = 0x4000, scoped, tag = 'input window, operand 11, single buffered']
    #allocation20 [shape = 'u8[512]{0}', space=vmem, size = 0x400, scoped, tag = 'input window, operand 12, single buffered']
    #allocation21 [shape = 's32[1]{0}', space=sflag, size = 0x4, scoped, tag = 'scoped memory for tpu_custom_call.1']
    #allocation22 [shape = 'u8[49152]{0}', space=vmem, size = 0xc000, scoped, tag = 'input window, operand 13, single buffered']
    #allocation23 [shape = 'u8[49152]{0}', space=vmem, size = 0xc000, scoped, tag = 'input window, operand 14, single buffered']
    #allocation24 [shape = 's32[1]{0}', space=sflag, size = 0x4, scoped, tag = 'scoped memory for tpu_custom_call.1']
    #allocation25 [shape = 'u8[1536]{0}', space=vmem, size = 0x800, scoped, tag = 'input window, operand 15, single buffered']
    #allocation26 [shape = 'u8[49152]{0}', space=vmem, size = 0xc000, scoped, tag = 'input window, operand 16, single buffered']
    #allocation27 [shape = 's32[1]{0}', space=sflag, size = 0x4, scoped, tag = 'scoped memory for tpu_custom_call.1']
    #allocation28 [shape = 'u8[1536]{0}', space=vmem, size = 0x800, scoped, tag = 'input window, operand 17, single buffered']
    #allocation29 [shape = 'u8[49152]{0}', space=vmem, size = 0xc000, scoped, tag = 'input window, operand 18, single buffered']
    #allocation30 [shape = 's32[1]{0}', space=sflag, size = 0x4, scoped, tag = 'scoped memory for tpu_custom_call.1']
    #allocation31 [shape = 'u8[49152]{0}', space=vmem, size = 0xc000, scoped, tag = 'input window, operand 20, single buffered']
    #allocation32 [shape = 'u8[2048]{0}', space=vmem, size = 0x800, scoped, tag = 'output window, operand 0, single buffered']
    #allocation33 [shape = 'u8[2048]{0}', space=vmem, size = 0x800, scoped, tag = 'output window, operand 1, single buffered']
    #allocation34 [shape = 's32[1]{0}', space=sflag, size = 0x4, scoped, tag = 'scoped memory for tpu_custom_call.1']
    #allocation35 [shape = 'u8[2048]{0}', space=vmem, size = 0x800, scoped, tag = 'output window, operand 2, single buffered']
    %32 = vsyncpa [#allocation3], 0
    %33 = vsyncpa [#allocation6], 0
    %34 = vsyncpa [#allocation9], 0
    %35 = vsyncpa [#allocation12], 0
    %36 = vsyncpa [#allocation15], 0
    %37 = vsyncpa [#allocation18], 0
    %38 = vsyncpa [#allocation21], 0
    %39 = vsyncpa [#allocation24], 0
    %40 = vsyncpa [#allocation27], 0
    %41 = vsyncpa [#allocation30], 0
    %42 = vsyncpa [#allocation4], 0
    %43 = vsyncpa [#allocation34], 0
    // Predicated region
    $region2: #{tpu_custom_call.1} parent=1 // pred_check
      _
    $region3: #{tpu_custom_call.1} parent=1 // pred_check_branch
      %45 = sbr.rel (0) target = $region5
    $region4: #{tpu_custom_call.1} parent=1 // pred_region
      %s47 = ssub.s32 64, 64
      %48 = vsyncadd [#allocation3], %s47
      %s50 = sshll.u32 [#allocation2], 4
      %s51 = int_to_ptr.vmem [resolvable:$true] %s50
      %53 = dma.hbm_to_vmem [thread:$0]  %s0, 64, %s51, [#allocation3]
    $region5: #{tpu_custom_call.1} parent=1 // pred_fallthru
      _
    // Predicated region
    $region6: #{tpu_custom_call.1} parent=1 // pred_check
      _
    $region7: #{tpu_custom_call.1} parent=1 // pred_check_branch
      %55 = sbr.rel (0) target = $region9
    $region8: #{tpu_custom_call.1} parent=1 // pred_region
      %s57 = ssub.s32 64, 64
      %58 = vsyncadd [#allocation6], %s57
      %s60 = sshll.u32 [#allocation5], 4
      %s61 = int_to_ptr.vmem [resolvable:$true] %s60
      %63 = dma.hbm_to_vmem [thread:$0]  %s1, 64, %s61, [#allocation6]
    $region9: #{tpu_custom_call.1} parent=1 // pred_fallthru
      _
    // Predicated region
    $region10: #{tpu_custom_call.1} parent=1 // pred_check
      _
    $region11: #{tpu_custom_call.1} parent=1 // pred_check_branch
      %65 = sbr.rel (0) target = $region13
    $region12: #{tpu_custom_call.1} parent=1 // pred_region
      %s67 = ssub.s32 512, 512
      %68 = vsyncadd [#allocation6], %s67
      %s69 = sshll.u32 [#allocation7], 4
      %s70 = int_to_ptr.vmem [resolvable:$true] %s69
      %75 = dma.hbm_to_vmem [thread:$0]  %s2, 512, %s70, [#allocation6], 64, 64, 4
    $region13: #{tpu_custom_call.1} parent=1 // pred_fallthru
      _
    // Predicated region
    $region14: #{tpu_custom_call.1} parent=1 // pred_check
      _
    $region15: #{tpu_custom_call.1} parent=1 // pred_check_branch
      %77 = sbr.rel (0) target = $region17
    $region16: #{tpu_custom_call.1} parent=1 // pred_region
      %s79 = ssub.s32 64, 64
      %80 = vsyncadd [#allocation9], %s79
      %s82 = sshll.u32 [#allocation8], 4
      %s83 = int_to_ptr.vmem [resolvable:$true] %s82
      %85 = dma.hbm_to_vmem [thread:$0]  %s3, 64, %s83, [#allocation9]
    $region17: #{tpu_custom_call.1} parent=1 // pred_fallthru
      _
    // Predicated region
    $region18: #{tpu_custom_call.1} parent=1 // pred_check
      _
    $region19: #{tpu_custom_call.1} parent=1 // pred_check_branch
      %87 = sbr.rel (0) target = $region21
    $region20: #{tpu_custom_call.1} parent=1 // pred_region
      %s89 = ssub.s32 64, 64
      %90 = vsyncadd [#allocation9], %s89
      %s92 = sshll.u32 [#allocation10], 4
      %s93 = int_to_ptr.vmem [resolvable:$true] %s92
      %95 = dma.hbm_to_vmem [thread:$0]  %s4, 64, %s93, [#allocation9]
    $region21: #{tpu_custom_call.1} parent=1 // pred_fallthru
      _
    // Predicated region
    $region22: #{tpu_custom_call.1} parent=1 // pred_check
      _
    $region23: #{tpu_custom_call.1} parent=1 // pred_check_branch
      %97 = sbr.rel (0) target = $region25
    $region24: #{tpu_custom_call.1} parent=1 // pred_region
      %s99 = ssub.s32 512, 512
      %100 = vsyncadd [#allocation12], %s99
      %s101 = sshll.u32 [#allocation11], 4
      %s102 = int_to_ptr.vmem [resolvable:$true] %s101
      %107 = dma.hbm_to_vmem [thread:$0]  %s5, 512, %s102, [#allocation12], 128, 128, 8
    $region25: #{tpu_custom_call.1} parent=1 // pred_fallthru
      _
    // Predicated region
    $region26: #{tpu_custom_call.1} parent=1 // pred_check
      _
    $region27: #{tpu_custom_call.1} parent=1 // pred_check_branch
      %109 = sbr.rel (0) target = $region29
    $region28: #{tpu_custom_call.1} parent=1 // pred_region
      %s111 = ssub.s32 16, 16
      %112 = vsyncadd [#allocation12], %s111
      %s114 = sshll.u32 [#allocation13], 4
      %s115 = int_to_ptr.vmem [resolvable:$true] %s114
      %117 = dma.hbm_to_vmem [thread:$0]  %s6, 16, %s115, [#allocation12]
    $region29: #{tpu_custom_call.1} parent=1 // pred_fallthru
      _
    // Predicated region
    $region30: #{tpu_custom_call.1} parent=1 // pred_check
      _
    $region31: #{tpu_custom_call.1} parent=1 // pred_check_branch
      %119 = sbr.rel (0) target = $region33
    $region32: #{tpu_custom_call.1} parent=1 // pred_region
      %s121 = ssub.s32 512, 512
      %122 = vsyncadd [#allocation15], %s121
      %s123 = sshll.u32 [#allocation14], 4
      %s124 = int_to_ptr.vmem [resolvable:$true] %s123
      %129 = dma.hbm_to_vmem [thread:$0]  %s7, 512, %s124, [#allocation15], 128, 128, 8
    $region33: #{tpu_custom_call.1} parent=1 // pred_fallthru
      _
    // Predicated region
    $region34: #{tpu_custom_call.1} parent=1 // pred_check
      _
    $region35: #{tpu_custom_call.1} parent=1 // pred_check_branch
      %131 = sbr.rel (0) target = $region37
    $region36: #{tpu_custom_call.1} parent=1 // pred_region
      %s133 = ssub.s32 16, 16
      %134 = vsyncadd [#allocation15], %s133
      %s136 = sshll.u32 [#allocation16], 4
      %s137 = int_to_ptr.vmem [resolvable:$true] %s136
      %139 = dma.hbm_to_vmem [thread:$0]  %s8, 16, %s137, [#allocation15]
    $region37: #{tpu_custom_call.1} parent=1 // pred_fallthru
      _
    // Predicated region
    $region38: #{tpu_custom_call.1} parent=1 // pred_check
      _
    $region39: #{tpu_custom_call.1} parent=1 // pred_check_branch
      %141 = sbr.rel (0) target = $region41
    $region40: #{tpu_custom_call.1} parent=1 // pred_region
      _
    $region41: #{tpu_custom_call.1} parent=1 // pred_fallthru
      _
    // Predicated region
    $region42: #{tpu_custom_call.1} parent=1 // pred_check
      _
    $region43: #{tpu_custom_call.1} parent=1 // pred_check_branch
      %143 = sbr.rel (0) target = $region45
    $region44: #{tpu_custom_call.1} parent=1 // pred_region
      %s145 = ssub.s32 16, 16
      %146 = vsyncadd [#allocation18], %s145
      %s148 = sshll.u32 [#allocation17], 4
      %s149 = int_to_ptr.vmem [resolvable:$true] %s148
      %151 = dma.hbm_to_vmem [thread:$0]  %s10, 16, %s149, [#allocation18]
    $region45: #{tpu_custom_call.1} parent=1 // pred_fallthru
      _
    // Predicated region
    $region46: #{tpu_custom_call.1} parent=1 // pred_check
      _
    $region47: #{tpu_custom_call.1} parent=1 // pred_check_branch
      %153 = sbr.rel (0) target = $region49
    $region48: #{tpu_custom_call.1} parent=1 // pred_region
      %s155 = ssub.s32 512, 512
      %156 = vsyncadd [#allocation18], %s155
      %s157 = sshll.u32 [#allocation19], 4
      %s158 = int_to_ptr.vmem [resolvable:$true] %s157
      %163 = dma.hbm_to_vmem [thread:$0]  %s11, 512, %s158, [#allocation18], 128, 128, 8
    $region49: #{tpu_custom_call.1} parent=1 // pred_fallthru
      _
    // Predicated region
    $region50: #{tpu_custom_call.1} parent=1 // pred_check
      _
    $region51: #{tpu_custom_call.1} parent=1 // pred_check_branch
      %165 = sbr.rel (0) target = $region53
    $region52: #{tpu_custom_call.1} parent=1 // pred_region
      %s167 = ssub.s32 16, 16
      %168 = vsyncadd [#allocation21], %s167
      %s170 = sshll.u32 [#allocation20], 4
      %s171 = int_to_ptr.vmem [resolvable:$true] %s170
      %173 = dma.hbm_to_vmem [thread:$0]  %s12, 16, %s171, [#allocation21]
    $region53: #{tpu_custom_call.1} parent=1 // pred_fallthru
      _
    // Predicated region
    $region54: #{tpu_custom_call.1} parent=1 // pred_check
      _
    $region55: #{tpu_custom_call.1} parent=1 // pred_check_branch
      %175 = sbr.rel (0) target = $region57
    $region56: #{tpu_custom_call.1} parent=1 // pred_region
      %s177 = ssub.s32 1536, 1536
      %178 = vsyncadd [#allocation21], %s177
      %s179 = sshll.u32 [#allocation22], 4
      %s180 = int_to_ptr.vmem [resolvable:$true] %s179
      %185 = dma.hbm_to_vmem [thread:$0]  %s13, 1536, %s180, [#allocation21], 128, 128, 8
    $region57: #{tpu_custom_call.1} parent=1 // pred_fallthru
      _
    // Predicated region
    $region58: #{tpu_custom_call.1} parent=1 // pred_check
      _
    $region59: #{tpu_custom_call.1} parent=1 // pred_check_branch
      %187 = sbr.rel (0) target = $region61
    $region60: #{tpu_custom_call.1} parent=1 // pred_region
      %s189 = ssub.s32 1536, 1536
      %190 = vsyncadd [#allocation24], %s189
      %s191 = sshll.u32 [#allocation23], 4
      %s192 = int_to_ptr.vmem [resolvable:$true] %s191
      %197 = dma.hbm_to_vmem [thread:$0]  %s14, 1536, %s192, [#allocation24], 128, 128, 8
    $region61: #{tpu_custom_call.1} parent=1 // pred_fallthru
      _
    // Predicated region
    $region62: #{tpu_custom_call.1} parent=1 // pred_check
      _
    $region63: #{tpu_custom_call.1} parent=1 // pred_check_branch
      %199 = sbr.rel (0) target = $region65
    $region64: #{tpu_custom_call.1} parent=1 // pred_region
      %s201 = ssub.s32 48, 48
      %202 = vsyncadd [#allocation24], %s201
      %s203 = sshll.u32 [#allocation25], 4
      %s204 = int_to_ptr.vmem [resolvable:$true] %s203
      %209 = dma.hbm_to_vmem [thread:$0]  %s15, 48, %s204, [#allocation24], 16, 16, 1
    $region65: #{tpu_custom_call.1} parent=1 // pred_fallthru
      _
    // Predicated region
    $region66: #{tpu_custom_call.1} parent=1 // pred_check
      _
    $region67: #{tpu_custom_call.1} parent=1 // pred_check_branch
      %211 = sbr.rel (0) target = $region69
    $region68: #{tpu_custom_call.1} parent=1 // pred_region
      %s213 = ssub.s32 1536, 1536
      %214 = vsyncadd [#allocation27], %s213
      %s215 = sshll.u32 [#allocation26], 4
      %s216 = int_to_ptr.vmem [resolvable:$true] %s215
      %221 = dma.hbm_to_vmem [thread:$0]  %s16, 1536, %s216, [#allocation27], 128, 128, 8
    $region69: #{tpu_custom_call.1} parent=1 // pred_fallthru
      _
    // Predicated region
    $region70: #{tpu_custom_call.1} parent=1 // pred_check
      _
    $region71: #{tpu_custom_call.1} parent=1 // pred_check_branch
      %223 = sbr.rel (0) target = $region73
    $region72: #{tpu_custom_call.1} parent=1 // pred_region
      %s225 = ssub.s32 48, 48
      %226 = vsyncadd [#allocation27], %s225
      %s227 = sshll.u32 [#allocation28], 4
      %s228 = int_to_ptr.vmem [resolvable:$true] %s227
      %233 = dma.hbm_to_vmem [thread:$0]  %s17, 48, %s228, [#allocation27], 16, 16, 1
    $region73: #{tpu_custom_call.1} parent=1 // pred_fallthru
      _
    // Predicated region
    $region74: #{tpu_custom_call.1} parent=1 // pred_check
      _
    $region75: #{tpu_custom_call.1} parent=1 // pred_check_branch
      %235 = sbr.rel (0) target = $region77
    $region76: #{tpu_custom_call.1} parent=1 // pred_region
      %s237 = ssub.s32 1536, 1536
      %238 = vsyncadd [#allocation30], %s237
      %s239 = sshll.u32 [#allocation29], 4
      %s240 = int_to_ptr.vmem [resolvable:$true] %s239
      %245 = dma.hbm_to_vmem [thread:$0]  %s18, 1536, %s240, [#allocation30], 128, 128, 8
    $region77: #{tpu_custom_call.1} parent=1 // pred_fallthru
      _
    // Predicated region
    $region78: #{tpu_custom_call.1} parent=1 // pred_check
      _
    $region79: #{tpu_custom_call.1} parent=1 // pred_check_branch
      %247 = sbr.rel (0) target = $region81
    $region80: #{tpu_custom_call.1} parent=1 // pred_region
      _
    $region81: #{tpu_custom_call.1} parent=1 // pred_fallthru
      _
    // Predicated region
    $region82: #{tpu_custom_call.1} parent=1 // pred_check
      _
    $region83: #{tpu_custom_call.1} parent=1 // pred_check_branch
      %249 = sbr.rel (0) target = $region85
    $region84: #{tpu_custom_call.1} parent=1 // pred_region
      %s251 = ssub.s32 1536, 1536
      %252 = vsyncadd [#allocation30], %s251
      %s253 = sshll.u32 [#allocation31], 4
      %s254 = int_to_ptr.vmem [resolvable:$true] %s253
      %259 = dma.hbm_to_vmem [thread:$0]  %s20, 1536, %s254, [#allocation30], 128, 128, 8
    $region85: #{tpu_custom_call.1} parent=1 // pred_fallthru
      _
    // Predicated region
    $region86: #{tpu_custom_call.1} parent=1 // pred_check
      _
    $region87: #{tpu_custom_call.1} parent=1 // pred_check_branch
      %261 = sbr.rel (0) target = $region89
    $region88: #{tpu_custom_call.1} parent=1 // pred_region
      _
    $region89: #{tpu_custom_call.1} parent=1 // pred_fallthru
      _
    // Predicated region
    $region90: #{tpu_custom_call.1} parent=1 // pred_check
      _
    $region91: #{tpu_custom_call.1} parent=1 // pred_check_branch
      %263 = sbr.rel (0) target = $region93
    $region92: #{tpu_custom_call.1} parent=1 // pred_region
      _
    $region93: #{tpu_custom_call.1} parent=1 // pred_fallthru
      _
    // Predicated region
    $region94: #{tpu_custom_call.1} parent=1 // pred_check
      _
    $region95: #{tpu_custom_call.1} parent=1 // pred_check_branch
      %265 = sbr.rel (0) target = $region97
    $region96: #{tpu_custom_call.1} parent=1 // pred_region
      _
    $region97: #{tpu_custom_call.1} parent=1 // pred_fallthru
      _
    // Predicated region
    $region98: #{tpu_custom_call.1} parent=1 // pred_check
      _
    $region99: #{tpu_custom_call.1} parent=1 // pred_check_branch
      %267 = sbr.rel (0) target = $region101
    $region100: #{tpu_custom_call.1} parent=1 // pred_region
      %268 = dma.done [#allocation3], 64
    $region101: #{tpu_custom_call.1} parent=1 // pred_fallthru
      _
    // Predicated region
    $region102: #{tpu_custom_call.1} parent=1 // pred_check
      _
    $region103: #{tpu_custom_call.1} parent=1 // pred_check_branch
      %270 = sbr.rel (0) target = $region105
    $region104: #{tpu_custom_call.1} parent=1 // pred_region
      %271 = dma.done [#allocation6], 64
    $region105: #{tpu_custom_call.1} parent=1 // pred_fallthru
      _
    // Predicated region
    $region106: #{tpu_custom_call.1} parent=1 // pred_check
      _
    $region107: #{tpu_custom_call.1} parent=1 // pred_check_branch
      %273 = sbr.rel (0) target = $region109
    $region108: #{tpu_custom_call.1} parent=1 // pred_region
      %274 = dma.done [#allocation6], 512
    $region109: #{tpu_custom_call.1} parent=1 // pred_fallthru
      _
    // Predicated region
    $region110: #{tpu_custom_call.1} parent=1 // pred_check
      _
    $region111: #{tpu_custom_call.1} parent=1 // pred_check_branch
      %276 = sbr.rel (0) target = $region113
    $region112: #{tpu_custom_call.1} parent=1 // pred_region
      %277 = dma.done [#allocation9], 64
    $region113: #{tpu_custom_call.1} parent=1 // pred_fallthru
      _
    // Predicated region
    $region114: #{tpu_custom_call.1} parent=1 // pred_check
      _
    $region115: #{tpu_custom_call.1} parent=1 // pred_check_branch
      %279 = sbr.rel (0) target = $region117
    $region116: #{tpu_custom_call.1} parent=1 // pred_region
      %280 = dma.done [#allocation9], 64
    $region117: #{tpu_custom_call.1} parent=1 // pred_fallthru
      _
    // Predicated region
    $region118: #{tpu_custom_call.1} parent=1 // pred_check
      _
    $region119: #{tpu_custom_call.1} parent=1 // pred_check_branch
      %282 = sbr.rel (0) target = $region121
    $region120: #{tpu_custom_call.1} parent=1 // pred_region
      %283 = dma.done [#allocation12], 512
    $region121: #{tpu_custom_call.1} parent=1 // pred_fallthru
      _
    // Predicated region
    $region122: #{tpu_custom_call.1} parent=1 // pred_check
      _
    $region123: #{tpu_custom_call.1} parent=1 // pred_check_branch
      %285 = sbr.rel (0) target = $region125
    $region124: #{tpu_custom_call.1} parent=1 // pred_region
      %286 = dma.done [#allocation12], 16
    $region125: #{tpu_custom_call.1} parent=1 // pred_fallthru
      _
    // Predicated region
    $region126: #{tpu_custom_call.1} parent=1 // pred_check
      _
    $region127: #{tpu_custom_call.1} parent=1 // pred_check_branch
      %288 = sbr.rel (0) target = $region129
    $region128: #{tpu_custom_call.1} parent=1 // pred_region
      %289 = dma.done [#allocation15], 512
    $region129: #{tpu_custom_call.1} parent=1 // pred_fallthru
      _
    // Predicated region
    $region130: #{tpu_custom_call.1} parent=1 // pred_check
      _
    $region131: #{tpu_custom_call.1} parent=1 // pred_check_branch
      %291 = sbr.rel (0) target = $region133
    $region132: #{tpu_custom_call.1} parent=1 // pred_region
      %292 = dma.done [#allocation15], 16
    $region133: #{tpu_custom_call.1} parent=1 // pred_fallthru
      _
    // Predicated region
    $region134: #{tpu_custom_call.1} parent=1 // pred_check
      _
    $region135: #{tpu_custom_call.1} parent=1 // pred_check_branch
      %294 = sbr.rel (0) target = $region137
    $region136: #{tpu_custom_call.1} parent=1 // pred_region
      %295 = dma.done [#allocation18], 16
    $region137: #{tpu_custom_call.1} parent=1 // pred_fallthru
      _
    // Predicated region
    $region138: #{tpu_custom_call.1} parent=1 // pred_check
      _
    $region139: #{tpu_custom_call.1} parent=1 // pred_check_branch
      %297 = sbr.rel (0) target = $region141
    $region140: #{tpu_custom_call.1} parent=1 // pred_region
      %298 = dma.done [#allocation18], 512
    $region141: #{tpu_custom_call.1} parent=1 // pred_fallthru
      _
    // Predicated region
    $region142: #{tpu_custom_call.1} parent=1 // pred_check
      _
    $region143: #{tpu_custom_call.1} parent=1 // pred_check_branch
      %300 = sbr.rel (0) target = $region145
    $region144: #{tpu_custom_call.1} parent=1 // pred_region
      %301 = dma.done [#allocation21], 16
    $region145: #{tpu_custom_call.1} parent=1 // pred_fallthru
      _
    // Predicated region
    $region146: #{tpu_custom_call.1} parent=1 // pred_check
      _
    $region147: #{tpu_custom_call.1} parent=1 // pred_check_branch
      %303 = sbr.rel (0) target = $region149
    $region148: #{tpu_custom_call.1} parent=1 // pred_region
      %304 = dma.done [#allocation21], 1536
    $region149: #{tpu_custom_call.1} parent=1 // pred_fallthru
      _
    // Predicated region
    $region150: #{tpu_custom_call.1} parent=1 // pred_check
      _
    $region151: #{tpu_custom_call.1} parent=1 // pred_check_branch
      %306 = sbr.rel (0) target = $region153
    $region152: #{tpu_custom_call.1} parent=1 // pred_region
      %307 = dma.done [#allocation24], 1536
    $region153: #{tpu_custom_call.1} parent=1 // pred_fallthru
      _
    // Predicated region
    $region154: #{tpu_custom_call.1} parent=1 // pred_check
      _
    $region155: #{tpu_custom_call.1} parent=1 // pred_check_branch
      %309 = sbr.rel (0) target = $region157
    $region156: #{tpu_custom_call.1} parent=1 // pred_region
      %310 = dma.done [#allocation24], 48
    $region157: #{tpu_custom_call.1} parent=1 // pred_fallthru
      _
    // Predicated region
    $region158: #{tpu_custom_call.1} parent=1 // pred_check
      _
    $region159: #{tpu_custom_call.1} parent=1 // pred_check_branch
      %312 = sbr.rel (0) target = $region161
    $region160: #{tpu_custom_call.1} parent=1 // pred_region
      %313 = dma.done [#allocation27], 1536
    $region161: #{tpu_custom_call.1} parent=1 // pred_fallthru
      _
    // Predicated region
    $region162: #{tpu_custom_call.1} parent=1 // pred_check
      _
    $region163: #{tpu_custom_call.1} parent=1 // pred_check_branch
      %315 = sbr.rel (0) target = $region165
    $region164: #{tpu_custom_call.1} parent=1 // pred_region
      %316 = dma.done [#allocation27], 48
    $region165: #{tpu_custom_call.1} parent=1 // pred_fallthru
      _
    // Predicated region
    $region166: #{tpu_custom_call.1} parent=1 // pred_check
      _
    $region167: #{tpu_custom_call.1} parent=1 // pred_check_branch
      %318 = sbr.rel (0) target = $region169
    $region168: #{tpu_custom_call.1} parent=1 // pred_region
      %319 = dma.done [#allocation30], 1536
    $region169: #{tpu_custom_call.1} parent=1 // pred_fallthru
      _
    // Predicated region
    $region170: #{tpu_custom_call.1} parent=1 // pred_check
      _
    $region171: #{tpu_custom_call.1} parent=1 // pred_check_branch
      %321 = sbr.rel (0) target = $region173
    $region172: #{tpu_custom_call.1} parent=1 // pred_region
      %322 = dma.done [#allocation30], 1536
    $region173: #{tpu_custom_call.1} parent=1 // pred_fallthru
      _
    %v323 = vld [vmem:[#allocation7] sm:$0xf]
    %v324 = vld [vmem:[#allocation7 + $0x4] sm:$0xf]
    %v325 = vld [vmem:[#allocation7 + $0x8] sm:$0xf]
    %v326 = vld [vmem:[#allocation7 + $0xc] sm:$0xf]
    %v327 = vld [vmem:[#allocation7 + $0x10] sm:$0xf]
    %v328 = vld [vmem:[#allocation7 + $0x14] sm:$0xf]
    %v329 = vld [vmem:[#allocation7 + $0x18] sm:$0xf]
    %v330 = vld [vmem:[#allocation7 + $0x1c] sm:$0xf]
    %v331 = vld [vmem:[#allocation5] sm:$0xf]
    %v332 = vld [vmem:[#allocation11] sm:$0xff]
    %v333 = vld [vmem:[#allocation11 + $0x8] sm:$0xff]
    %v334 = vld [vmem:[#allocation11 + $0x10] sm:$0xff]
    %v335 = vld [vmem:[#allocation11 + $0x18] sm:$0xff]
    %v336 = vld [vmem:[#allocation13] sm:$0x1]
    %v338 = vlaneseq
    %v339 = vshrl.u32 %v338, 7
    %v340 = vsub.s32 0, %v339
    %v341 = vrot.slane %v336, %v340
    %vm343 = vcmask 261120
    %v345 = vsel %vm343, %v331, 0
    %347 = vmatprep.subr.mxu0 0.0
    %348 = vmatpush1.msra.mxu0 %v332
    %349 = vmatprep.subr.mxu0 0.0
    %350 = vmatpush1.msra.mxu0 %v333
    %351 = vmatprep.subr.mxu0 0.0
    %352 = vmatpush1.msra.mxu0 %v334
    %353 = vmatprep.subr.mxu0 0.0
    %354 = vmatpush1.msra.mxu0 %v335
    %355 = vmatprep.subr.mxu0 0.0
    %356 = vmatpush1.msra.mxu0 0.0
    %357 = vmatprep.subr.mxu0 0.0
    %358 = vmatpush1.msra.mxu0 0.0
    %359 = vmatprep.subr.mxu0 0.0
    %360 = vmatpush1.msra.mxu0 0.0
    %361 = vmatprep.subr.mxu0 0.0
    %362 = vmatpush1.msra.mxu0 0.0
    %363 = vmatprep.subr.mxu0 0.0
    %364 = vmatpush1.msra.mxu0 0.0
    %365 = vmatprep.subr.mxu0 0.0
    %366 = vmatpush1.msra.mxu0 0.0
    %367 = vmatprep.subr.mxu0 0.0
    %368 = vmatpush1.msra.mxu0 0.0
    %369 = vmatprep.subr.mxu0 0.0
    %370 = vmatpush1.msra.mxu0 0.0
    %371 = vmatprep.subr.mxu0 0.0
    %372 = vmatpush1.msra.mxu0 0.0
    %373 = vmatprep.subr.mxu0 0.0
    %374 = vmatpush1.msra.mxu0 0.0
    %375 = vmatprep.subr.mxu0 0.0
    %376 = vmatpush1.msra.mxu0 0.0
    %377 = vmatprep.subr.mxu0 0.0
    %378 = vmatpush1.msra.mxu0 0.0
    %379 = vmatprep.subr.mxu0 0.0
    %380 = vmatpush1.msra.mxu0 0.0
    %381 = vmatprep.subr.mxu0 0.0
    %382 = vmatpush1.msra.mxu0 0.0
    %383 = vmatprep.subr.mxu0 0.0
    %384 = vmatpush1.msra.mxu0 0.0
    %385 = vmatprep.subr.mxu0 0.0
    %386 = vmatpush1.msra.mxu0 0.0
    %387 = vmatprep.subr.mxu0 0.0
    %388 = vmatpush1.msra.mxu0 0.0
    %389 = vmatprep.subr.mxu0 0.0
    %390 = vmatpush1.msra.mxu0 0.0
    %391 = vmatprep.subr.mxu0 0.0
    %392 = vmatpush1.msra.mxu0 0.0
    %393 = vmatprep.subr.mxu0 0.0
    %394 = vmatpush1.msra.mxu0 0.0
    %395 = vmatprep.subr.mxu0 0.0
    %396 = vmatpush1.msra.mxu0 0.0
    %397 = vmatprep.subr.mxu0 0.0
    %398 = vmatpush1.msra.mxu0 0.0
    %399 = vmatprep.subr.mxu0 0.0
    %400 = vmatpush1.msra.mxu0 0.0
    %401 = vmatprep.subr.mxu0 0.0
    %402 = vmatpush1.msra.mxu0 0.0
    %403 = vmatprep.subr.mxu0 0.0
    %404 = vmatpush1.msra.mxu0 0.0
    %405 = vmatprep.subr.mxu0 0.0
    %406 = vmatpush1.msra.mxu0 0.0
    %407 = vmatprep.subr.mxu0 0.0
    %408 = vmatpush1.msra.mxu0 0.0
    %409 = vmatprep.subr.mxu0 0.0
    %410 = vmatpush1.msra.mxu0 0.0
    %411 = vmatprep.mubr.f32.mxu0 0.0
    %412 = vmatmul.mubr.f32.gmra.mrb[0].mxu0 %v345
    %v413 = vpop.f32.mrb[0].mxu0
    %v414 = vadd.f32 %v341, %v413
    %v415 = vpop.f32.mrb[0].mxu0
    %416 = vdwg.mxu0
    %v417 = vmul.f32 %v414, 0.5
    %v418 = vld [vmem:[#allocation14] sm:$0xff]
    %v419 = vld [vmem:[#allocation14 + $0x8] sm:$0xff]
    %v420 = vld [vmem:[#allocation14 + $0x10] sm:$0xff]
    %v421 = vld [vmem:[#allocation14 + $0x18] sm:$0xff]
    %v422 = vld [vmem:[%s9] sm:$0xff]
    %v423 = vld [vmem:[%s9 + $0x8] sm:$0xff]
    %v424 = vld [vmem:[%s9 + $0x10] sm:$0xff]
    %v425 = vld [vmem:[%s9 + $0x18] sm:$0xff]
    %v426 = vld [vmem:[#allocation16] sm:$0x1]
    %v428 = vlaneseq
    %v429 = vshrl.u32 %v428, 7
    %v430 = vsub.s32 0, %v429
    %v431 = vrot.slane %v426, %v430
    %v434 = vsel %vm343, %v323, 0
    %436 = vmatprep.subr.mxu0 0.0
    %437 = vmatpush1.msra.mxu0 %v418
    %438 = vmatprep.subr.mxu0 0.0
    %439 = vmatpush1.msra.mxu0 %v419
    %440 = vmatprep.subr.mxu0 0.0
    %441 = vmatpush1.msra.mxu0 %v420
    %442 = vmatprep.subr.mxu0 0.0
    %443 = vmatpush1.msra.mxu0 %v421
    %444 = vmatprep.subr.mxu0 0.0
    %445 = vmatpush1.msra.mxu0 0.0
    %446 = vmatprep.subr.mxu0 0.0
    %447 = vmatpush1.msra.mxu0 0.0
    %448 = vmatprep.subr.mxu0 0.0
    %449 = vmatpush1.msra.mxu0 0.0
    %450 = vmatprep.subr.mxu0 0.0
    %451 = vmatpush1.msra.mxu0 0.0
    %452 = vmatprep.subr.mxu0 0.0
    %453 = vmatpush1.msra.mxu0 0.0
    %454 = vmatprep.subr.mxu0 0.0
    %455 = vmatpush1.msra.mxu0 0.0
    %456 = vmatprep.subr.mxu0 0.0
    %457 = vmatpush1.msra.mxu0 0.0
    %458 = vmatprep.subr.mxu0 0.0
    %459 = vmatpush1.msra.mxu0 0.0
    %460 = vmatprep.subr.mxu0 0.0
    %461 = vmatpush1.msra.mxu0 0.0
    %462 = vmatprep.subr.mxu0 0.0
    %463 = vmatpush1.msra.mxu0 0.0
    %464 = vmatprep.subr.mxu0 0.0
    %465 = vmatpush1.msra.mxu0 0.0
    %466 = vmatprep.subr.mxu0 0.0
    %467 = vmatpush1.msra.mxu0 0.0
    %468 = vmatprep.subr.mxu0 0.0
    %469 = vmatpush1.msra.mxu0 0.0
    %470 = vmatprep.subr.mxu0 0.0
    %471 = vmatpush1.msra.mxu0 0.0
    %472 = vmatprep.subr.mxu0 0.0
    %473 = vmatpush1.msra.mxu0 0.0
    %474 = vmatprep.subr.mxu0 0.0
    %475 = vmatpush1.msra.mxu0 0.0
    %476 = vmatprep.subr.mxu0 0.0
    %477 = vmatpush1.msra.mxu0 0.0
    %478 = vmatprep.subr.mxu0 0.0
    %479 = vmatpush1.msra.mxu0 0.0
    %480 = vmatprep.subr.mxu0 0.0
    %481 = vmatpush1.msra.mxu0 0.0
    %482 = vmatprep.subr.mxu0 0.0
    %483 = vmatpush1.msra.mxu0 0.0
    %484 = vmatprep.subr.mxu0 0.0
    %485 = vmatpush1.msra.mxu0 0.0
    %486 = vmatprep.subr.mxu0 0.0
    %487 = vmatpush1.msra.mxu0 0.0
    %488 = vmatprep.subr.mxu0 0.0
    %489 = vmatpush1.msra.mxu0 0.0
    %490 = vmatprep.subr.mxu0 0.0
    %491 = vmatpush1.msra.mxu0 0.0
    %492 = vmatprep.subr.mxu0 0.0
    %493 = vmatpush1.msra.mxu0 0.0
    %494 = vmatprep.subr.mxu0 0.0
    %495 = vmatpush1.msra.mxu0 0.0
    %496 = vmatprep.subr.mxu0 0.0
    %497 = vmatpush1.msra.mxu0 0.0
    %498 = vmatprep.subr.mxu0 0.0
    %499 = vmatpush1.msra.mxu0 0.0
    %500 = vmatprep.mubr.f32.mxu0 0.0
    %501 = vmatmul.mubr.f32.gmra.mrb[0].mxu0 %v434
    %v502 = vpop.f32.mrb[0].mxu0
    %v503 = vadd.f32 %v431, %v502
    %v504 = vpop.f32.mrb[0].mxu0
    %505 = vdwg.mxu0
    %v507 = vsel %vm343, %v324, 0
    %509 = vmatprep.subr.mxu0 0.0
    %510 = vmatpush1.msra.mxu0 %v418
    %511 = vmatprep.subr.mxu0 0.0
    %512 = vmatpush1.msra.mxu0 %v419
    %513 = vmatprep.subr.mxu0 0.0
    %514 = vmatpush1.msra.mxu0 %v420
    %515 = vmatprep.subr.mxu0 0.0
    %516 = vmatpush1.msra.mxu0 %v421
    %517 = vmatprep.subr.mxu0 0.0
    %518 = vmatpush1.msra.mxu0 0.0
    %519 = vmatprep.subr.mxu0 0.0
    %520 = vmatpush1.msra.mxu0 0.0
    %521 = vmatprep.subr.mxu0 0.0
    %522 = vmatpush1.msra.mxu0 0.0
    %523 = vmatprep.subr.mxu0 0.0
    %524 = vmatpush1.msra.mxu0 0.0
    %525 = vmatprep.subr.mxu0 0.0
    %526 = vmatpush1.msra.mxu0 0.0
    %527 = vmatprep.subr.mxu0 0.0
    %528 = vmatpush1.msra.mxu0 0.0
    %529 = vmatprep.subr.mxu0 0.0
    %530 = vmatpush1.msra.mxu0 0.0
    %531 = vmatprep.subr.mxu0 0.0
    %532 = vmatpush1.msra.mxu0 0.0
    %533 = vmatprep.subr.mxu0 0.0
    %534 = vmatpush1.msra.mxu0 0.0
    %535 = vmatprep.subr.mxu0 0.0
    %536 = vmatpush1.msra.mxu0 0.0
    %537 = vmatprep.subr.mxu0 0.0
    %538 = vmatpush1.msra.mxu0 0.0
    %539 = vmatprep.subr.mxu0 0.0
    %540 = vmatpush1.msra.mxu0 0.0
    %541 = vmatprep.subr.mxu0 0.0
    %542 = vmatpush1.msra.mxu0 0.0
    %543 = vmatprep.subr.mxu0 0.0
    %544 = vmatpush1.msra.mxu0 0.0
    %545 = vmatprep.subr.mxu0 0.0
    %546 = vmatpush1.msra.mxu0 0.0
    %547 = vmatprep.subr.mxu0 0.0
    %548 = vmatpush1.msra.mxu0 0.0
    %549 = vmatprep.subr.mxu0 0.0
    %550 = vmatpush1.msra.mxu0 0.0
    %551 = vmatprep.subr.mxu0 0.0
    %552 = vmatpush1.msra.mxu0 0.0
    %553 = vmatprep.subr.mxu0 0.0
    %554 = vmatpush1.msra.mxu0 0.0
    %555 = vmatprep.subr.mxu0 0.0
    %556 = vmatpush1.msra.mxu0 0.0
    %557 = vmatprep.subr.mxu0 0.0
    %558 = vmatpush1.msra.mxu0 0.0
    %559 = vmatprep.subr.mxu0 0.0
    %560 = vmatpush1.msra.mxu0 0.0
    %561 = vmatprep.subr.mxu0 0.0
    %562 = vmatpush1.msra.mxu0 0.0
    %563 = vmatprep.subr.mxu0 0.0
    %564 = vmatpush1.msra.mxu0 0.0
    %565 = vmatprep.subr.mxu0 0.0
    %566 = vmatpush1.msra.mxu0 0.0
    %567 = vmatprep.subr.mxu0 0.0
    %568 = vmatpush1.msra.mxu0 0.0
    %569 = vmatprep.subr.mxu0 0.0
    %570 = vmatpush1.msra.mxu0 0.0
    %571 = vmatprep.subr.mxu0 0.0
    %572 = vmatpush1.msra.mxu0 0.0
    %573 = vmatprep.mubr.f32.mxu0 0.0
    %574 = vmatmul.mubr.f32.gmra.mrb[0].mxu0 %v507
    %v575 = vpop.f32.mrb[0].mxu0
    %v576 = vadd.f32 %v431, %v575
    %v577 = vpop.f32.mrb[0].mxu0
    %578 = vdwg.mxu0
    %v580 = vsel %vm343, %v325, 0
    %582 = vmatprep.subr.mxu0 0.0
    %583 = vmatpush1.msra.mxu0 %v418
    %584 = vmatprep.subr.mxu0 0.0
    %585 = vmatpush1.msra.mxu0 %v419
    %586 = vmatprep.subr.mxu0 0.0
    %587 = vmatpush1.msra.mxu0 %v420
    %588 = vmatprep.subr.mxu0 0.0
    %589 = vmatpush1.msra.mxu0 %v421
    %590 = vmatprep.subr.mxu0 0.0
    %591 = vmatpush1.msra.mxu0 0.0
    %592 = vmatprep.subr.mxu0 0.0
    %593 = vmatpush1.msra.mxu0 0.0
    %594 = vmatprep.subr.mxu0 0.0
    %595 = vmatpush1.msra.mxu0 0.0
    %596 = vmatprep.subr.mxu0 0.0
    %597 = vmatpush1.msra.mxu0 0.0
    %598 = vmatprep.subr.mxu0 0.0
    %599 = vmatpush1.msra.mxu0 0.0
    %600 = vmatprep.subr.mxu0 0.0
    %601 = vmatpush1.msra.mxu0 0.0
    %602 = vmatprep.subr.mxu0 0.0
    %603 = vmatpush1.msra.mxu0 0.0
    %604 = vmatprep.subr.mxu0 0.0
    %605 = vmatpush1.msra.mxu0 0.0
    %606 = vmatprep.subr.mxu0 0.0
    %607 = vmatpush1.msra.mxu0 0.0
    %608 = vmatprep.subr.mxu0 0.0
    %609 = vmatpush1.msra.mxu0 0.0
    %610 = vmatprep.subr.mxu0 0.0
    %611 = vmatpush1.msra.mxu0 0.0
    %612 = vmatprep.subr.mxu0 0.0
    %613 = vmatpush1.msra.mxu0 0.0
    %614 = vmatprep.subr.mxu0 0.0
    %615 = vmatpush1.msra.mxu0 0.0
    %616 = vmatprep.subr.mxu0 0.0
    %617 = vmatpush1.msra.mxu0 0.0
    %618 = vmatprep.subr.mxu0 0.0
    %619 = vmatpush1.msra.mxu0 0.0
    %620 = vmatprep.subr.mxu0 0.0
    %621 = vmatpush1.msra.mxu0 0.0
    %622 = vmatprep.subr.mxu0 0.0
    %623 = vmatpush1.msra.mxu0 0.0
    %624 = vmatprep.subr.mxu0 0.0
    %625 = vmatpush1.msra.mxu0 0.0
    %626 = vmatprep.subr.mxu0 0.0
    %627 = vmatpush1.msra.mxu0 0.0
    %628 = vmatprep.subr.mxu0 0.0
    %629 = vmatpush1.msra.mxu0 0.0
    %630 = vmatprep.subr.mxu0 0.0
    %631 = vmatpush1.msra.mxu0 0.0
    %632 = vmatprep.subr.mxu0 0.0
    %633 = vmatpush1.msra.mxu0 0.0
    %634 = vmatprep.subr.mxu0 0.0
    %635 = vmatpush1.msra.mxu0 0.0
    %636 = vmatprep.subr.mxu0 0.0
    %637 = vmatpush1.msra.mxu0 0.0
    %638 = vmatprep.subr.mxu0 0.0
    %639 = vmatpush1.msra.mxu0 0.0
    %640 = vmatprep.subr.mxu0 0.0
    %641 = vmatpush1.msra.mxu0 0.0
    %642 = vmatprep.subr.mxu0 0.0
    %643 = vmatpush1.msra.mxu0 0.0
    %644 = vmatprep.subr.mxu0 0.0
    %645 = vmatpush1.msra.mxu0 0.0
    %646 = vmatprep.mubr.f32.mxu0 0.0
    %647 = vmatmul.mubr.f32.gmra.mrb[0].mxu0 %v580
    %v648 = vpop.f32.mrb[0].mxu0
    %v649 = vadd.f32 %v431, %v648
    %v650 = vpop.f32.mrb[0].mxu0
    %651 = vdwg.mxu0
    %v653 = vsel %vm343, %v326, 0
    %655 = vmatprep.subr.mxu0 0.0
    %656 = vmatpush1.msra.mxu0 %v418
    %657 = vmatprep.subr.mxu0 0.0
    %658 = vmatpush1.msra.mxu0 %v419
    %659 = vmatprep.subr.mxu0 0.0
    %660 = vmatpush1.msra.mxu0 %v420
    %661 = vmatprep.subr.mxu0 0.0
    %662 = vmatpush1.msra.mxu0 %v421
    %663 = vmatprep.subr.mxu0 0.0
    %664 = vmatpush1.msra.mxu0 0.0
    %665 = vmatprep.subr.mxu0 0.0
    %666 = vmatpush1.msra.mxu0 0.0
    %667 = vmatprep.subr.mxu0 0.0
    %668 = vmatpush1.msra.mxu0 0.0
    %669 = vmatprep.subr.mxu0 0.0
    %670 = vmatpush1.msra.mxu0 0.0
    %671 = vmatprep.subr.mxu0 0.0
    %672 = vmatpush1.msra.mxu0 0.0
    %673 = vmatprep.subr.mxu0 0.0
    %674 = vmatpush1.msra.mxu0 0.0
    %675 = vmatprep.subr.mxu0 0.0
    %676 = vmatpush1.msra.mxu0 0.0
    %677 = vmatprep.subr.mxu0 0.0
    %678 = vmatpush1.msra.mxu0 0.0
    %679 = vmatprep.subr.mxu0 0.0
    %680 = vmatpush1.msra.mxu0 0.0
    %681 = vmatprep.subr.mxu0 0.0
    %682 = vmatpush1.msra.mxu0 0.0
    %683 = vmatprep.subr.mxu0 0.0
    %684 = vmatpush1.msra.mxu0 0.0
    %685 = vmatprep.subr.mxu0 0.0
    %686 = vmatpush1.msra.mxu0 0.0
    %687 = vmatprep.subr.mxu0 0.0
    %688 = vmatpush1.msra.mxu0 0.0
    %689 = vmatprep.subr.mxu0 0.0
    %690 = vmatpush1.msra.mxu0 0.0
    %691 = vmatprep.subr.mxu0 0.0
    %692 = vmatpush1.msra.mxu0 0.0
    %693 = vmatprep.subr.mxu0 0.0
    %694 = vmatpush1.msra.mxu0 0.0
    %695 = vmatprep.subr.mxu0 0.0
    %696 = vmatpush1.msra.mxu0 0.0
    %697 = vmatprep.subr.mxu0 0.0
    %698 = vmatpush1.msra.mxu0 0.0
    %699 = vmatprep.subr.mxu0 0.0
    %700 = vmatpush1.msra.mxu0 0.0
    %701 = vmatprep.subr.mxu0 0.0
    %702 = vmatpush1.msra.mxu0 0.0
    %703 = vmatprep.subr.mxu0 0.0
    %704 = vmatpush1.msra.mxu0 0.0
    %705 = vmatprep.subr.mxu0 0.0
    %706 = vmatpush1.msra.mxu0 0.0
    %707 = vmatprep.subr.mxu0 0.0
    %708 = vmatpush1.msra.mxu0 0.0
    %709 = vmatprep.subr.mxu0 0.0
    %710 = vmatpush1.msra.mxu0 0.0
    %711 = vmatprep.subr.mxu0 0.0
    %712 = vmatpush1.msra.mxu0 0.0
    %713 = vmatprep.subr.mxu0 0.0
    %714 = vmatpush1.msra.mxu0 0.0
    %715 = vmatprep.subr.mxu0 0.0
    %716 = vmatpush1.msra.mxu0 0.0
    %717 = vmatprep.subr.mxu0 0.0
    %718 = vmatpush1.msra.mxu0 0.0
    %719 = vmatprep.mubr.f32.mxu0 0.0
    %720 = vmatmul.mubr.f32.gmra.mrb[0].mxu0 %v653
    %v721 = vpop.f32.mrb[0].mxu0
    %v722 = vadd.f32 %v431, %v721
    %v723 = vpop.f32.mrb[0].mxu0
    %724 = vdwg.mxu0
    %v726 = vsel %vm343, %v327, 0
    %728 = vmatprep.subr.mxu0 0.0
    %729 = vmatpush1.msra.mxu0 %v418
    %730 = vmatprep.subr.mxu0 0.0
    %731 = vmatpush1.msra.mxu0 %v419
    %732 = vmatprep.subr.mxu0 0.0
    %733 = vmatpush1.msra.mxu0 %v420
    %734 = vmatprep.subr.mxu0 0.0
    %735 = vmatpush1.msra.mxu0 %v421
    %736 = vmatprep.subr.mxu0 0.0
    %737 = vmatpush1.msra.mxu0 0.0
    %738 = vmatprep.subr.mxu0 0.0
    %739 = vmatpush1.msra.mxu0 0.0
    %740 = vmatprep.subr.mxu0 0.0
    %741 = vmatpush1.msra.mxu0 0.0
    %742 = vmatprep.subr.mxu0 0.0
    %743 = vmatpush1.msra.mxu0 0.0
    %744 = vmatprep.subr.mxu0 0.0
    %745 = vmatpush1.msra.mxu0 0.0
    %746 = vmatprep.subr.mxu0 0.0
    %747 = vmatpush1.msra.mxu0 0.0
    %748 = vmatprep.subr.mxu0 0.0
    %749 = vmatpush1.msra.mxu0 0.0
    %750 = vmatprep.subr.mxu0 0.0
    %751 = vmatpush1.msra.mxu0 0.0
    %752 = vmatprep.subr.mxu0 0.0
    %753 = vmatpush1.msra.mxu0 0.0
    %754 = vmatprep.subr.mxu0 0.0
    %755 = vmatpush1.msra.mxu0 0.0
    %756 = vmatprep.subr.mxu0 0.0
    %757 = vmatpush1.msra.mxu0 0.0
    %758 = vmatprep.subr.mxu0 0.0
    %759 = vmatpush1.msra.mxu0 0.0
    %760 = vmatprep.subr.mxu0 0.0
    %761 = vmatpush1.msra.mxu0 0.0
    %762 = vmatprep.subr.mxu0 0.0
    %763 = vmatpush1.msra.mxu0 0.0
    %764 = vmatprep.subr.mxu0 0.0
    %765 = vmatpush1.msra.mxu0 0.0
    %766 = vmatprep.subr.mxu0 0.0
    %767 = vmatpush1.msra.mxu0 0.0
    %768 = vmatprep.subr.mxu0 0.0
    %769 = vmatpush1.msra.mxu0 0.0
    %770 = vmatprep.subr.mxu0 0.0
    %771 = vmatpush1.msra.mxu0 0.0
    %772 = vmatprep.subr.mxu0 0.0
    %773 = vmatpush1.msra.mxu0 0.0
    %774 = vmatprep.subr.mxu0 0.0
    %775 = vmatpush1.msra.mxu0 0.0
    %776 = vmatprep.subr.mxu0 0.0
    %777 = vmatpush1.msra.mxu0 0.0
    %778 = vmatprep.subr.mxu0 0.0
    %779 = vmatpush1.msra.mxu0 0.0
    %780 = vmatprep.subr.mxu0 0.0
    %781 = vmatpush1.msra.mxu0 0.0
    %782 = vmatprep.subr.mxu0 0.0
    %783 = vmatpush1.msra.mxu0 0.0
    %784 = vmatprep.subr.mxu0 0.0
    %785 = vmatpush1.msra.mxu0 0.0
    %786 = vmatprep.subr.mxu0 0.0
    %787 = vmatpush1.msra.mxu0 0.0
    %788 = vmatprep.subr.mxu0 0.0
    %789 = vmatpush1.msra.mxu0 0.0
    %790 = vmatprep.subr.mxu0 0.0
    %791 = vmatpush1.msra.mxu0 0.0
    %792 = vmatprep.mubr.f32.mxu0 0.0
    %793 = vmatmul.mubr.f32.gmra.mrb[0].mxu0 %v726
    %v794 = vpop.f32.mrb[0].mxu0
    %v795 = vadd.f32 %v431, %v794
    %v796 = vpop.f32.mrb[0].mxu0
    %797 = vdwg.mxu0
    %v799 = vsel %vm343, %v328, 0
    %801 = vmatprep.subr.mxu0 0.0
    %802 = vmatpush1.msra.mxu0 %v418
    %803 = vmatprep.subr.mxu0 0.0
    %804 = vmatpush1.msra.mxu0 %v419
    %805 = vmatprep.subr.mxu0 0.0
    %806 = vmatpush1.msra.mxu0 %v420
    %807 = vmatprep.subr.mxu0 0.0
    %808 = vmatpush1.msra.mxu0 %v421
    %809 = vmatprep.subr.mxu0 0.0
    %810 = vmatpush1.msra.mxu0 0.0
    %811 = vmatprep.subr.mxu0 0.0
    %812 = vmatpush1.msra.mxu0 0.0
    %813 = vmatprep.subr.mxu0 0.0
    %814 = vmatpush1.msra.mxu0 0.0
    %815 = vmatprep.subr.mxu0 0.0
    %816 = vmatpush1.msra.mxu0 0.0
    %817 = vmatprep.subr.mxu0 0.0
    %818 = vmatpush1.msra.mxu0 0.0
    %819 = vmatprep.subr.mxu0 0.0
    %820 = vmatpush1.msra.mxu0 0.0
    %821 = vmatprep.subr.mxu0 0.0
    %822 = vmatpush1.msra.mxu0 0.0
    %823 = vmatprep.subr.mxu0 0.0
    %824 = vmatpush1.msra.mxu0 0.0
    %825 = vmatprep.subr.mxu0 0.0
    %826 = vmatpush1.msra.mxu0 0.0
    %827 = vmatprep.subr.mxu0 0.0
    %828 = vmatpush1.msra.mxu0 0.0
    %829 = vmatprep.subr.mxu0 0.0
    %830 = vmatpush1.msra.mxu0 0.0
    %831 = vmatprep.subr.mxu0 0.0
    %832 = vmatpush1.msra.mxu0 0.0
    %833 = vmatprep.subr.mxu0 0.0
    %834 = vmatpush1.msra.mxu0 0.0
    %835 = vmatprep.subr.mxu0 0.0
    %836 = vmatpush1.msra.mxu0 0.0
    %837 = vmatprep.subr.mxu0 0.0
    %838 = vmatpush1.msra.mxu0 0.0
    %839 = vmatprep.subr.mxu0 0.0
    %840 = vmatpush1.msra.mxu0 0.0
    %841 = vmatprep.subr.mxu0 0.0
    %842 = vmatpush1.msra.mxu0 0.0
    %843 = vmatprep.subr.mxu0 0.0
    %844 = vmatpush1.msra.mxu0 0.0
    %845 = vmatprep.subr.mxu0 0.0
    %846 = vmatpush1.msra.mxu0 0.0
    %847 = vmatprep.subr.mxu0 0.0
    %848 = vmatpush1.msra.mxu0 0.0
    %849 = vmatprep.subr.mxu0 0.0
    %850 = vmatpush1.msra.mxu0 0.0
    %851 = vmatprep.subr.mxu0 0.0
    %852 = vmatpush1.msra.mxu0 0.0
    %853 = vmatprep.subr.mxu0 0.0
    %854 = vmatpush1.msra.mxu0 0.0
    %855 = vmatprep.subr.mxu0 0.0
    %856 = vmatpush1.msra.mxu0 0.0
    %857 = vmatprep.subr.mxu0 0.0
    %858 = vmatpush1.msra.mxu0 0.0
    %859 = vmatprep.subr.mxu0 0.0
    %860 = vmatpush1.msra.mxu0 0.0
    %861 = vmatprep.subr.mxu0 0.0
    %862 = vmatpush1.msra.mxu0 0.0
    %863 = vmatprep.subr.mxu0 0.0
    %864 = vmatpush1.msra.mxu0 0.0
    %865 = vmatprep.mubr.f32.mxu0 0.0
    %866 = vmatmul.mubr.f32.gmra.mrb[0].mxu0 %v799
    %v867 = vpop.f32.mrb[0].mxu0
    %v868 = vadd.f32 %v431, %v867
    %v869 = vpop.f32.mrb[0].mxu0
    %870 = vdwg.mxu0
    %v872 = vsel %vm343, %v329, 0
    %874 = vmatprep.subr.mxu0 0.0
    %875 = vmatpush1.msra.mxu0 %v418
    %876 = vmatprep.subr.mxu0 0.0
    %877 = vmatpush1.msra.mxu0 %v419
    %878 = vmatprep.subr.mxu0 0.0
    %879 = vmatpush1.msra.mxu0 %v420
    %880 = vmatprep.subr.mxu0 0.0
    %881 = vmatpush1.msra.mxu0 %v421
    %882 = vmatprep.subr.mxu0 0.0
    %883 = vmatpush1.msra.mxu0 0.0
    %884 = vmatprep.subr.mxu0 0.0
    %885 = vmatpush1.msra.mxu0 0.0
    %886 = vmatprep.subr.mxu0 0.0
    %887 = vmatpush1.msra.mxu0 0.0
    %888 = vmatprep.subr.mxu0 0.0
    %889 = vmatpush1.msra.mxu0 0.0
    %890 = vmatprep.subr.mxu0 0.0
    %891 = vmatpush1.msra.mxu0 0.0
    %892 = vmatprep.subr.mxu0 0.0
    %893 = vmatpush1.msra.mxu0 0.0
    %894 = vmatprep.subr.mxu0 0.0
    %895 = vmatpush1.msra.mxu0 0.0
    %896 = vmatprep.subr.mxu0 0.0
    %897 = vmatpush1.msra.mxu0 0.0
    %898 = vmatprep.subr.mxu0 0.0
    %899 = vmatpush1.msra.mxu0 0.0
    %900 = vmatprep.subr.mxu0 0.0
    %901 = vmatpush1.msra.mxu0 0.0
    %902 = vmatprep.subr.mxu0 0.0
    %903 = vmatpush1.msra.mxu0 0.0
    %904 = vmatprep.subr.mxu0 0.0
    %905 = vmatpush1.msra.mxu0 0.0
    %906 = vmatprep.subr.mxu0 0.0
    %907 = vmatpush1.msra.mxu0 0.0
    %908 = vmatprep.subr.mxu0 0.0
    %909 = vmatpush1.msra.mxu0 0.0
    %910 = vmatprep.subr.mxu0 0.0
    %911 = vmatpush1.msra.mxu0 0.0
    %912 = vmatprep.subr.mxu0 0.0
    %913 = vmatpush1.msra.mxu0 0.0
    %914 = vmatprep.subr.mxu0 0.0
    %915 = vmatpush1.msra.mxu0 0.0
    %916 = vmatprep.subr.mxu0 0.0
    %917 = vmatpush1.msra.mxu0 0.0
    %918 = vmatprep.subr.mxu0 0.0
    %919 = vmatpush1.msra.mxu0 0.0
    %920 = vmatprep.subr.mxu0 0.0
    %921 = vmatpush1.msra.mxu0 0.0
    %922 = vmatprep.subr.mxu0 0.0
    %923 = vmatpush1.msra.mxu0 0.0
    %924 = vmatprep.subr.mxu0 0.0
    %925 = vmatpush1.msra.mxu0 0.0
    %926 = vmatprep.subr.mxu0 0.0
    %927 = vmatpush1.msra.mxu0 0.0
    %928 = vmatprep.subr.mxu0 0.0
    %929 = vmatpush1.msra.mxu0 0.0
    %930 = vmatprep.subr.mxu0 0.0
    %931 = vmatpush1.msra.mxu0 0.0
    %932 = vmatprep.subr.mxu0 0.0
    %933 = vmatpush1.msra.mxu0 0.0
    %934 = vmatprep.subr.mxu0 0.0
    %935 = vmatpush1.msra.mxu0 0.0
    %936 = vmatprep.subr.mxu0 0.0
    %937 = vmatpush1.msra.mxu0 0.0
    %938 = vmatprep.mubr.f32.mxu0 0.0
    %939 = vmatmul.mubr.f32.gmra.mrb[0].mxu0 %v872
    %v940 = vpop.f32.mrb[0].mxu0
    %v941 = vadd.f32 %v431, %v940
    %v942 = vpop.f32.mrb[0].mxu0
    %943 = vdwg.mxu0
    %v945 = vsel %vm343, %v330, 0
    %947 = vmatprep.subr.mxu0 0.0
    %948 = vmatpush1.msra.mxu0 %v418
    %949 = vmatprep.subr.mxu0 0.0
    %950 = vmatpush1.msra.mxu0 %v419
    %951 = vmatprep.subr.mxu0 0.0
    %952 = vmatpush1.msra.mxu0 %v420
    %953 = vmatprep.subr.mxu0 0.0
    %954 = vmatpush1.msra.mxu0 %v421
    %955 = vmatprep.subr.mxu0 0.0
    %956 = vmatpush1.msra.mxu0 0.0
    %957 = vmatprep.subr.mxu0 0.0
    %958 = vmatpush1.msra.mxu0 0.0
    %959 = vmatprep.subr.mxu0 0.0
    %960 = vmatpush1.msra.mxu0 0.0
    %961 = vmatprep.subr.mxu0 0.0
    %962 = vmatpush1.msra.mxu0 0.0
    %963 = vmatprep.subr.mxu0 0.0
    %964 = vmatpush1.msra.mxu0 0.0
    %965 = vmatprep.subr.mxu0 0.0
    %966 = vmatpush1.msra.mxu0 0.0
    %967 = vmatprep.subr.mxu0 0.0
    %968 = vmatpush1.msra.mxu0 0.0
    %969 = vmatprep.subr.mxu0 0.0
    %970 = vmatpush1.msra.mxu0 0.0
    %971 = vmatprep.subr.mxu0 0.0
    %972 = vmatpush1.msra.mxu0 0.0
    %973 = vmatprep.subr.mxu0 0.0
    %974 = vmatpush1.msra.mxu0 0.0
    %975 = vmatprep.subr.mxu0 0.0
    %976 = vmatpush1.msra.mxu0 0.0
    %977 = vmatprep.subr.mxu0 0.0
    %978 = vmatpush1.msra.mxu0 0.0
    %979 = vmatprep.subr.mxu0 0.0
    %980 = vmatpush1.msra.mxu0 0.0
    %981 = vmatprep.subr.mxu0 0.0
    %982 = vmatpush1.msra.mxu0 0.0
    %983 = vmatprep.subr.mxu0 0.0
    %984 = vmatpush1.msra.mxu0 0.0
    %985 = vmatprep.subr.mxu0 0.0
    %986 = vmatpush1.msra.mxu0 0.0
    %987 = vmatprep.subr.mxu0 0.0
    %988 = vmatpush1.msra.mxu0 0.0
    %989 = vmatprep.subr.mxu0 0.0
    %990 = vmatpush1.msra.mxu0 0.0
    %991 = vmatprep.subr.mxu0 0.0
    %992 = vmatpush1.msra.mxu0 0.0
    %993 = vmatprep.subr.mxu0 0.0
    %994 = vmatpush1.msra.mxu0 0.0
    %995 = vmatprep.subr.mxu0 0.0
    %996 = vmatpush1.msra.mxu0 0.0
    %997 = vmatprep.subr.mxu0 0.0
    %998 = vmatpush1.msra.mxu0 0.0
    %999 = vmatprep.subr.mxu0 0.0
    %1000 = vmatpush1.msra.mxu0 0.0
    %1001 = vmatprep.subr.mxu0 0.0
    %1002 = vmatpush1.msra.mxu0 0.0
    %1003 = vmatprep.subr.mxu0 0.0
    %1004 = vmatpush1.msra.mxu0 0.0
    %1005 = vmatprep.subr.mxu0 0.0
    %1006 = vmatpush1.msra.mxu0 0.0
    %1007 = vmatprep.subr.mxu0 0.0
    %1008 = vmatpush1.msra.mxu0 0.0
    %1009 = vmatprep.subr.mxu0 0.0
    %1010 = vmatpush1.msra.mxu0 0.0
    %1011 = vmatprep.mubr.f32.mxu0 0.0
    %1012 = vmatmul.mubr.f32.gmra.mrb[0].mxu0 %v945
    %v1013 = vpop.f32.mrb[0].mxu0
    %v1014 = vadd.f32 %v431, %v1013
    %v1015 = vpop.f32.mrb[0].mxu0
    %1016 = vdwg.mxu0
    %v1017 = vld [vmem:[#allocation17] sm:$0x1]
    %v1019 = vlaneseq
    %v1020 = vshrl.u32 %v1019, 7
    %v1021 = vsub.s32 0, %v1020
    %v1022 = vrot.slane %v1017, %v1021
    %1024 = vmatprep.subr.mxu0 0.0
    %1025 = vmatpush1.msra.mxu0 %v422
    %1026 = vmatprep.subr.mxu0 0.0
    %1027 = vmatpush1.msra.mxu0 %v423
    %1028 = vmatprep.subr.mxu0 0.0
    %1029 = vmatpush1.msra.mxu0 %v424
    %1030 = vmatprep.subr.mxu0 0.0
    %1031 = vmatpush1.msra.mxu0 %v425
    %1032 = vmatprep.subr.mxu0 0.0
    %1033 = vmatpush1.msra.mxu0 0.0
    %1034 = vmatprep.subr.mxu0 0.0
    %1035 = vmatpush1.msra.mxu0 0.0
    %1036 = vmatprep.subr.mxu0 0.0
    %1037 = vmatpush1.msra.mxu0 0.0
    %1038 = vmatprep.subr.mxu0 0.0
    %1039 = vmatpush1.msra.mxu0 0.0
    %1040 = vmatprep.subr.mxu0 0.0
    %1041 = vmatpush1.msra.mxu0 0.0
    %1042 = vmatprep.subr.mxu0 0.0
    %1043 = vmatpush1.msra.mxu0 0.0
    %1044 = vmatprep.subr.mxu0 0.0
    %1045 = vmatpush1.msra.mxu0 0.0
    %1046 = vmatprep.subr.mxu0 0.0
    %1047 = vmatpush1.msra.mxu0 0.0
    %1048 = vmatprep.subr.mxu0 0.0
    %1049 = vmatpush1.msra.mxu0 0.0
    %1050 = vmatprep.subr.mxu0 0.0
    %1051 = vmatpush1.msra.mxu0 0.0
    %1052 = vmatprep.subr.mxu0 0.0
    %1053 = vmatpush1.msra.mxu0 0.0
    %1054 = vmatprep.subr.mxu0 0.0
    %1055 = vmatpush1.msra.mxu0 0.0
    %1056 = vmatprep.subr.mxu0 0.0
    %1057 = vmatpush1.msra.mxu0 0.0
    %1058 = vmatprep.subr.mxu0 0.0
    %1059 = vmatpush1.msra.mxu0 0.0
    %1060 = vmatprep.subr.mxu0 0.0
    %1061 = vmatpush1.msra.mxu0 0.0
    %1062 = vmatprep.subr.mxu0 0.0
    %1063 = vmatpush1.msra.mxu0 0.0
    %1064 = vmatprep.subr.mxu0 0.0
    %1065 = vmatpush1.msra.mxu0 0.0
    %1066 = vmatprep.subr.mxu0 0.0
    %1067 = vmatpush1.msra.mxu0 0.0
    %1068 = vmatprep.subr.mxu0 0.0
    %1069 = vmatpush1.msra.mxu0 0.0
    %1070 = vmatprep.subr.mxu0 0.0
    %1071 = vmatpush1.msra.mxu0 0.0
    %1072 = vmatprep.subr.mxu0 0.0
    %1073 = vmatpush1.msra.mxu0 0.0
    %1074 = vmatprep.subr.mxu0 0.0
    %1075 = vmatpush1.msra.mxu0 0.0
    %1076 = vmatprep.subr.mxu0 0.0
    %1077 = vmatpush1.msra.mxu0 0.0
    %1078 = vmatprep.subr.mxu0 0.0
    %1079 = vmatpush1.msra.mxu0 0.0
    %1080 = vmatprep.subr.mxu0 0.0
    %1081 = vmatpush1.msra.mxu0 0.0
    %1082 = vmatprep.subr.mxu0 0.0
    %1083 = vmatpush1.msra.mxu0 0.0
    %1084 = vmatprep.subr.mxu0 0.0
    %1085 = vmatpush1.msra.mxu0 0.0
    %1086 = vmatprep.subr.mxu0 0.0
    %1087 = vmatpush1.msra.mxu0 0.0
    %1088 = vmatprep.mubr.f32.mxu0 0.0
    %1089 = vmatmul.mubr.f32.gmra.mrb[0].mxu0 %v434
    %v1090 = vpop.f32.mrb[0].mxu0
    %v1091 = vadd.f32 %v1022, %v1090
    %v1092 = vpop.f32.mrb[0].mxu0
    %1093 = vdwg.mxu0
    %1094 = vmatprep.subr.mxu0 0.0
    %1095 = vmatpush1.msra.mxu0 %v422
    %1096 = vmatprep.subr.mxu0 0.0
    %1097 = vmatpush1.msra.mxu0 %v423
    %1098 = vmatprep.subr.mxu0 0.0
    %1099 = vmatpush1.msra.mxu0 %v424
    %1100 = vmatprep.subr.mxu0 0.0
    %1101 = vmatpush1.msra.mxu0 %v425
    %1102 = vmatprep.subr.mxu0 0.0
    %1103 = vmatpush1.msra.mxu0 0.0
    %1104 = vmatprep.subr.mxu0 0.0
    %1105 = vmatpush1.msra.mxu0 0.0
    %1106 = vmatprep.subr.mxu0 0.0
    %1107 = vmatpush1.msra.mxu0 0.0
    %1108 = vmatprep.subr.mxu0 0.0
    %1109 = vmatpush1.msra.mxu0 0.0
    %1110 = vmatprep.subr.mxu0 0.0
    %1111 = vmatpush1.msra.mxu0 0.0
    %1112 = vmatprep.subr.mxu0 0.0
    %1113 = vmatpush1.msra.mxu0 0.0
    %1114 = vmatprep.subr.mxu0 0.0
    %1115 = vmatpush1.msra.mxu0 0.0
    %1116 = vmatprep.subr.mxu0 0.0
    %1117 = vmatpush1.msra.mxu0 0.0
    %1118 = vmatprep.subr.mxu0 0.0
    %1119 = vmatpush1.msra.mxu0 0.0
    %1120 = vmatprep.subr.mxu0 0.0
    %1121 = vmatpush1.msra.mxu0 0.0
    %1122 = vmatprep.subr.mxu0 0.0
    %1123 = vmatpush1.msra.mxu0 0.0
    %1124 = vmatprep.subr.mxu0 0.0
    %1125 = vmatpush1.msra.mxu0 0.0
    %1126 = vmatprep.subr.mxu0 0.0
    %1127 = vmatpush1.msra.mxu0 0.0
    %1128 = vmatprep.subr.mxu0 0.0
    %1129 = vmatpush1.msra.mxu0 0.0
    %1130 = vmatprep.subr.mxu0 0.0
    %1131 = vmatpush1.msra.mxu0 0.0
    %1132 = vmatprep.subr.mxu0 0.0
    %1133 = vmatpush1.msra.mxu0 0.0
    %1134 = vmatprep.subr.mxu0 0.0
    %1135 = vmatpush1.msra.mxu0 0.0
    %1136 = vmatprep.subr.mxu0 0.0
    %1137 = vmatpush1.msra.mxu0 0.0
    %1138 = vmatprep.subr.mxu0 0.0
    %1139 = vmatpush1.msra.mxu0 0.0
    %1140 = vmatprep.subr.mxu0 0.0
    %1141 = vmatpush1.msra.mxu0 0.0
    %1142 = vmatprep.subr.mxu0 0.0
    %1143 = vmatpush1.msra.mxu0 0.0
    %1144 = vmatprep.subr.mxu0 0.0
    %1145 = vmatpush1.msra.mxu0 0.0
    %1146 = vmatprep.subr.mxu0 0.0
    %1147 = vmatpush1.msra.mxu0 0.0
    %1148 = vmatprep.subr.mxu0 0.0
    %1149 = vmatpush1.msra.mxu0 0.0
    %1150 = vmatprep.subr.mxu0 0.0
    %1151 = vmatpush1.msra.mxu0 0.0
    %1152 = vmatprep.subr.mxu0 0.0
    %1153 = vmatpush1.msra.mxu0 0.0
    %1154 = vmatprep.subr.mxu0 0.0
    %1155 = vmatpush1.msra.mxu0 0.0
    %1156 = vmatprep.subr.mxu0 0.0
    %1157 = vmatpush1.msra.mxu0 0.0
    %1158 = vmatprep.mubr.f32.mxu0 0.0
    %1159 = vmatmul.mubr.f32.gmra.mrb[0].mxu0 %v507
    %v1160 = vpop.f32.mrb[0].mxu0
    %v1161 = vadd.f32 %v1022, %v1160
    %v1162 = vpop.f32.mrb[0].mxu0
    %1163 = vdwg.mxu0
    %1164 = vmatprep.subr.mxu0 0.0
    %1165 = vmatpush1.msra.mxu0 %v422
    %1166 = vmatprep.subr.mxu0 0.0
    %1167 = vmatpush1.msra.mxu0 %v423
    %1168 = vmatprep.subr.mxu0 0.0
    %1169 = vmatpush1.msra.mxu0 %v424
    %1170 = vmatprep.subr.mxu0 0.0
    %1171 = vmatpush1.msra.mxu0 %v425
    %1172 = vmatprep.subr.mxu0 0.0
    %1173 = vmatpush1.msra.mxu0 0.0
    %1174 = vmatprep.subr.mxu0 0.0
    %1175 = vmatpush1.msra.mxu0 0.0
    %1176 = vmatprep.subr.mxu0 0.0
    %1177 = vmatpush1.msra.mxu0 0.0
    %1178 = vmatprep.subr.mxu0 0.0
    %1179 = vmatpush1.msra.mxu0 0.0
    %1180 = vmatprep.subr.mxu0 0.0
    %1181 = vmatpush1.msra.mxu0 0.0
    %1182 = vmatprep.subr.mxu0 0.0
    %1183 = vmatpush1.msra.mxu0 0.0
    %1184 = vmatprep.subr.mxu0 0.0
    %1185 = vmatpush1.msra.mxu0 0.0
    %1186 = vmatprep.subr.mxu0 0.0
    %1187 = vmatpush1.msra.mxu0 0.0
    %1188 = vmatprep.subr.mxu0 0.0
    %1189 = vmatpush1.msra.mxu0 0.0
    %1190 = vmatprep.subr.mxu0 0.0
    %1191 = vmatpush1.msra.mxu0 0.0
    %1192 = vmatprep.subr.mxu0 0.0
    %1193 = vmatpush1.msra.mxu0 0.0
    %1194 = vmatprep.subr.mxu0 0.0
    %1195 = vmatpush1.msra.mxu0 0.0
    %1196 = vmatprep.subr.mxu0 0.0
    %1197 = vmatpush1.msra.mxu0 0.0
    %1198 = vmatprep.subr.mxu0 0.0
    %1199 = vmatpush1.msra.mxu0 0.0
    %1200 = vmatprep.subr.mxu0 0.0
    %1201 = vmatpush1.msra.mxu0 0.0
    %1202 = vmatprep.subr.mxu0 0.0
    %1203 = vmatpush1.msra.mxu0 0.0
    %1204 = vmatprep.subr.mxu0 0.0
    %1205 = vmatpush1.msra.mxu0 0.0
    %1206 = vmatprep.subr.mxu0 0.0
    %1207 = vmatpush1.msra.mxu0 0.0
    %1208 = vmatprep.subr.mxu0 0.0
    %1209 = vmatpush1.msra.mxu0 0.0
    %1210 = vmatprep.subr.mxu0 0.0
    %1211 = vmatpush1.msra.mxu0 0.0
    %1212 = vmatprep.subr.mxu0 0.0
    %1213 = vmatpush1.msra.mxu0 0.0
    %1214 = vmatprep.subr.mxu0 0.0
    %1215 = vmatpush1.msra.mxu0 0.0
    %1216 = vmatprep.subr.mxu0 0.0
    %1217 = vmatpush1.msra.mxu0 0.0
    %1218 = vmatprep.subr.mxu0 0.0
    %1219 = vmatpush1.msra.mxu0 0.0
    %1220 = vmatprep.subr.mxu0 0.0
    %1221 = vmatpush1.msra.mxu0 0.0
    %1222 = vmatprep.subr.mxu0 0.0
    %1223 = vmatpush1.msra.mxu0 0.0
    %1224 = vmatprep.subr.mxu0 0.0
    %1225 = vmatpush1.msra.mxu0 0.0
    %1226 = vmatprep.subr.mxu0 0.0
    %1227 = vmatpush1.msra.mxu0 0.0
    %1228 = vmatprep.mubr.f32.mxu0 0.0
    %1229 = vmatmul.mubr.f32.gmra.mrb[0].mxu0 %v580
    %v1230 = vpop.f32.mrb[0].mxu0
    %v1231 = vadd.f32 %v1022, %v1230
    %v1232 = vpop.f32.mrb[0].mxu0
    %1233 = vdwg.mxu0
    %1234 = vmatprep.subr.mxu0 0.0
    %1235 = vmatpush1.msra.mxu0 %v422
    %1236 = vmatprep.subr.mxu0 0.0
    %1237 = vmatpush1.msra.mxu0 %v423
    %1238 = vmatprep.subr.mxu0 0.0
    %1239 = vmatpush1.msra.mxu0 %v424
    %1240 = vmatprep.subr.mxu0 0.0
    %1241 = vmatpush1.msra.mxu0 %v425
    %1242 = vmatprep.subr.mxu0 0.0
    %1243 = vmatpush1.msra.mxu0 0.0
    %1244 = vmatprep.subr.mxu0 0.0
    %1245 = vmatpush1.msra.mxu0 0.0
    %1246 = vmatprep.subr.mxu0 0.0
    %1247 = vmatpush1.msra.mxu0 0.0
    %1248 = vmatprep.subr.mxu0 0.0
    %1249 = vmatpush1.msra.mxu0 0.0
    %1250 = vmatprep.subr.mxu0 0.0
    %1251 = vmatpush1.msra.mxu0 0.0
    %1252 = vmatprep.subr.mxu0 0.0
    %1253 = vmatpush1.msra.mxu0 0.0
    %1254 = vmatprep.subr.mxu0 0.0
    %1255 = vmatpush1.msra.mxu0 0.0
    %1256 = vmatprep.subr.mxu0 0.0
    %1257 = vmatpush1.msra.mxu0 0.0
    %1258 = vmatprep.subr.mxu0 0.0
    %1259 = vmatpush1.msra.mxu0 0.0
    %1260 = vmatprep.subr.mxu0 0.0
    %1261 = vmatpush1.msra.mxu0 0.0
    %1262 = vmatprep.subr.mxu0 0.0
    %1263 = vmatpush1.msra.mxu0 0.0
    %1264 = vmatprep.subr.mxu0 0.0
    %1265 = vmatpush1.msra.mxu0 0.0
    %1266 = vmatprep.subr.mxu0 0.0
    %1267 = vmatpush1.msra.mxu0 0.0
    %1268 = vmatprep.subr.mxu0 0.0
    %1269 = vmatpush1.msra.mxu0 0.0
    %1270 = vmatprep.subr.mxu0 0.0
    %1271 = vmatpush1.msra.mxu0 0.0
    %1272 = vmatprep.subr.mxu0 0.0
    %1273 = vmatpush1.msra.mxu0 0.0
    %1274 = vmatprep.subr.mxu0 0.0
    %1275 = vmatpush1.msra.mxu0 0.0
    %1276 = vmatprep.subr.mxu0 0.0
    %1277 = vmatpush1.msra.mxu0 0.0
    %1278 = vmatprep.subr.mxu0 0.0
    %1279 = vmatpush1.msra.mxu0 0.0
    %1280 = vmatprep.subr.mxu0 0.0
    %1281 = vmatpush1.msra.mxu0 0.0
    %1282 = vmatprep.subr.mxu0 0.0
    %1283 = vmatpush1.msra.mxu0 0.0
    %1284 = vmatprep.subr.mxu0 0.0
    %1285 = vmatpush1.msra.mxu0 0.0
    %1286 = vmatprep.subr.mxu0 0.0
    %1287 = vmatpush1.msra.mxu0 0.0
    %1288 = vmatprep.subr.mxu0 0.0
    %1289 = vmatpush1.msra.mxu0 0.0
    %1290 = vmatprep.subr.mxu0 0.0
    %1291 = vmatpush1.msra.mxu0 0.0
    %1292 = vmatprep.subr.mxu0 0.0
    %1293 = vmatpush1.msra.mxu0 0.0
    %1294 = vmatprep.subr.mxu0 0.0
    %1295 = vmatpush1.msra.mxu0 0.0
    %1296 = vmatprep.subr.mxu0 0.0
    %1297 = vmatpush1.msra.mxu0 0.0
    %1298 = vmatprep.mubr.f32.mxu0 0.0
    %1299 = vmatmul.mubr.f32.gmra.mrb[0].mxu0 %v653
    %v1300 = vpop.f32.mrb[0].mxu0
    %v1301 = vadd.f32 %v1022, %v1300
    %v1302 = vpop.f32.mrb[0].mxu0
    %1303 = vdwg.mxu0
    %1304 = vmatprep.subr.mxu0 0.0
    %1305 = vmatpush1.msra.mxu0 %v422
    %1306 = vmatprep.subr.mxu0 0.0
    %1307 = vmatpush1.msra.mxu0 %v423
    %1308 = vmatprep.subr.mxu0 0.0
    %1309 = vmatpush1.msra.mxu0 %v424
    %1310 = vmatprep.subr.mxu0 0.0
    %1311 = vmatpush1.msra.mxu0 %v425
    %1312 = vmatprep.subr.mxu0 0.0
    %1313 = vmatpush1.msra.mxu0 0.0
    %1314 = vmatprep.subr.mxu0 0.0
    %1315 = vmatpush1.msra.mxu0 0.0
    %1316 = vmatprep.subr.mxu0 0.0
    %1317 = vmatpush1.msra.mxu0 0.0
    %1318 = vmatprep.subr.mxu0 0.0
    %1319 = vmatpush1.msra.mxu0 0.0
    %1320 = vmatprep.subr.mxu0 0.0
    %1321 = vmatpush1.msra.mxu0 0.0
    %1322 = vmatprep.subr.mxu0 0.0
    %1323 = vmatpush1.msra.mxu0 0.0
    %1324 = vmatprep.subr.mxu0 0.0
    %1325 = vmatpush1.msra.mxu0 0.0
    %1326 = vmatprep.subr.mxu0 0.0
    %1327 = vmatpush1.msra.mxu0 0.0
    %1328 = vmatprep.subr.mxu0 0.0
    %1329 = vmatpush1.msra.mxu0 0.0
    %1330 = vmatprep.subr.mxu0 0.0
    %1331 = vmatpush1.msra.mxu0 0.0
    %1332 = vmatprep.subr.mxu0 0.0
    %1333 = vmatpush1.msra.mxu0 0.0
    %1334 = vmatprep.subr.mxu0 0.0
    %1335 = vmatpush1.msra.mxu0 0.0
    %1336 = vmatprep.subr.mxu0 0.0
    %1337 = vmatpush1.msra.mxu0 0.0
    %1338 = vmatprep.subr.mxu0 0.0
    %1339 = vmatpush1.msra.mxu0 0.0
    %1340 = vmatprep.subr.mxu0 0.0
    %1341 = vmatpush1.msra.mxu0 0.0
    %1342 = vmatprep.subr.mxu0 0.0
    %1343 = vmatpush1.msra.mxu0 0.0
    %1344 = vmatprep.subr.mxu0 0.0
    %1345 = vmatpush1.msra.mxu0 0.0
    %1346 = vmatprep.subr.mxu0 0.0
    %1347 = vmatpush1.msra.mxu0 0.0
    %1348 = vmatprep.subr.mxu0 0.0
    %1349 = vmatpush1.msra.mxu0 0.0
    %1350 = vmatprep.subr.mxu0 0.0
    %1351 = vmatpush1.msra.mxu0 0.0
    %1352 = vmatprep.subr.mxu0 0.0
    %1353 = vmatpush1.msra.mxu0 0.0
    %1354 = vmatprep.subr.mxu0 0.0
    %1355 = vmatpush1.msra.mxu0 0.0
    %1356 = vmatprep.subr.mxu0 0.0
    %1357 = vmatpush1.msra.mxu0 0.0
    %1358 = vmatprep.subr.mxu0 0.0
    %1359 = vmatpush1.msra.mxu0 0.0
    %1360 = vmatprep.subr.mxu0 0.0
    %1361 = vmatpush1.msra.mxu0 0.0
    %1362 = vmatprep.subr.mxu0 0.0
    %1363 = vmatpush1.msra.mxu0 0.0
    %1364 = vmatprep.subr.mxu0 0.0
    %1365 = vmatpush1.msra.mxu0 0.0
    %1366 = vmatprep.subr.mxu0 0.0
    %1367 = vmatpush1.msra.mxu0 0.0
    %1368 = vmatprep.mubr.f32.mxu0 0.0
    %1369 = vmatmul.mubr.f32.gmra.mrb[0].mxu0 %v726
    %v1370 = vpop.f32.mrb[0].mxu0
    %v1371 = vadd.f32 %v1022, %v1370
    %v1372 = vpop.f32.mrb[0].mxu0
    %1373 = vdwg.mxu0
    %1374 = vmatprep.subr.mxu0 0.0
    %1375 = vmatpush1.msra.mxu0 %v422
    %1376 = vmatprep.subr.mxu0 0.0
    %1377 = vmatpush1.msra.mxu0 %v423
    %1378 = vmatprep.subr.mxu0 0.0
    %1379 = vmatpush1.msra.mxu0 %v424
    %1380 = vmatprep.subr.mxu0 0.0
    %1381 = vmatpush1.msra.mxu0 %v425
    %1382 = vmatprep.subr.mxu0 0.0
    %1383 = vmatpush1.msra.mxu0 0.0
    %1384 = vmatprep.subr.mxu0 0.0
    %1385 = vmatpush1.msra.mxu0 0.0
    %1386 = vmatprep.subr.mxu0 0.0
    %1387 = vmatpush1.msra.mxu0 0.0
    %1388 = vmatprep.subr.mxu0 0.0
    %1389 = vmatpush1.msra.mxu0 0.0
    %1390 = vmatprep.subr.mxu0 0.0
    %1391 = vmatpush1.msra.mxu0 0.0
    %1392 = vmatprep.subr.mxu0 0.0
    %1393 = vmatpush1.msra.mxu0 0.0
    %1394 = vmatprep.subr.mxu0 0.0
    %1395 = vmatpush1.msra.mxu0 0.0
    %1396 = vmatprep.subr.mxu0 0.0
    %1397 = vmatpush1.msra.mxu0 0.0
    %1398 = vmatprep.subr.mxu0 0.0
    %1399 = vmatpush1.msra.mxu0 0.0
    %1400 = vmatprep.subr.mxu0 0.0
    %1401 = vmatpush1.msra.mxu0 0.0
    %1402 = vmatprep.subr.mxu0 0.0
    %1403 = vmatpush1.msra.mxu0 0.0
    %1404 = vmatprep.subr.mxu0 0.0
    %1405 = vmatpush1.msra.mxu0 0.0
    %1406 = vmatprep.subr.mxu0 0.0
    %1407 = vmatpush1.msra.mxu0 0.0
    %1408 = vmatprep.subr.mxu0 0.0
    %1409 = vmatpush1.msra.mxu0 0.0
    %1410 = vmatprep.subr.mxu0 0.0
    %1411 = vmatpush1.msra.mxu0 0.0
    %1412 = vmatprep.subr.mxu0 0.0
    %1413 = vmatpush1.msra.mxu0 0.0
    %1414 = vmatprep.subr.mxu0 0.0
    %1415 = vmatpush1.msra.mxu0 0.0
    %1416 = vmatprep.subr.mxu0 0.0
    %1417 = vmatpush1.msra.mxu0 0.0
    %1418 = vmatprep.subr.mxu0 0.0
    %1419 = vmatpush1.msra.mxu0 0.0
    %1420 = vmatprep.subr.mxu0 0.0
    %1421 = vmatpush1.msra.mxu0 0.0
    %1422 = vmatprep.subr.mxu0 0.0
    %1423 = vmatpush1.msra.mxu0 0.0
    %1424 = vmatprep.subr.mxu0 0.0
    %1425 = vmatpush1.msra.mxu0 0.0
    %1426 = vmatprep.subr.mxu0 0.0
    %1427 = vmatpush1.msra.mxu0 0.0
    %1428 = vmatprep.subr.mxu0 0.0
    %1429 = vmatpush1.msra.mxu0 0.0
    %1430 = vmatprep.subr.mxu0 0.0
    %1431 = vmatpush1.msra.mxu0 0.0
    %1432 = vmatprep.subr.mxu0 0.0
    %1433 = vmatpush1.msra.mxu0 0.0
    %1434 = vmatprep.subr.mxu0 0.0
    %1435 = vmatpush1.msra.mxu0 0.0
    %1436 = vmatprep.subr.mxu0 0.0
    %1437 = vmatpush1.msra.mxu0 0.0
    %1438 = vmatprep.mubr.f32.mxu0 0.0
    %1439 = vmatmul.mubr.f32.gmra.mrb[0].mxu0 %v799
    %v1440 = vpop.f32.mrb[0].mxu0
    %v1441 = vadd.f32 %v1022, %v1440
    %v1442 = vpop.f32.mrb[0].mxu0
    %1443 = vdwg.mxu0
    %1444 = vmatprep.subr.mxu0 0.0
    %1445 = vmatpush1.msra.mxu0 %v422
    %1446 = vmatprep.subr.mxu0 0.0
    %1447 = vmatpush1.msra.mxu0 %v423
    %1448 = vmatprep.subr.mxu0 0.0
    %1449 = vmatpush1.msra.mxu0 %v424
    %1450 = vmatprep.subr.mxu0 0.0
    %1451 = vmatpush1.msra.mxu0 %v425
    %1452 = vmatprep.subr.mxu0 0.0
    %1453 = vmatpush1.msra.mxu0 0.0
    %1454 = vmatprep.subr.mxu0 0.0
    %1455 = vmatpush1.msra.mxu0 0.0
    %1456 = vmatprep.subr.mxu0 0.0
    %1457 = vmatpush1.msra.mxu0 0.0
    %1458 = vmatprep.subr.mxu0 0.0
    %1459 = vmatpush1.msra.mxu0 0.0
    %1460 = vmatprep.subr.mxu0 0.0
    %1461 = vmatpush1.msra.mxu0 0.0
    %1462 = vmatprep.subr.mxu0 0.0
    %1463 = vmatpush1.msra.mxu0 0.0
    %1464 = vmatprep.subr.mxu0 0.0
    %1465 = vmatpush1.msra.mxu0 0.0
    %1466 = vmatprep.subr.mxu0 0.0
    %1467 = vmatpush1.msra.mxu0 0.0
    %1468 = vmatprep.subr.mxu0 0.0
    %1469 = vmatpush1.msra.mxu0 0.0
    %1470 = vmatprep.subr.mxu0 0.0
    %1471 = vmatpush1.msra.mxu0 0.0
    %1472 = vmatprep.subr.mxu0 0.0
    %1473 = vmatpush1.msra.mxu0 0.0
    %1474 = vmatprep.subr.mxu0 0.0
    %1475 = vmatpush1.msra.mxu0 0.0
    %1476 = vmatprep.subr.mxu0 0.0
    %1477 = vmatpush1.msra.mxu0 0.0
    %1478 = vmatprep.subr.mxu0 0.0
    %1479 = vmatpush1.msra.mxu0 0.0
    %1480 = vmatprep.subr.mxu0 0.0
    %1481 = vmatpush1.msra.mxu0 0.0
    %1482 = vmatprep.subr.mxu0 0.0
    %1483 = vmatpush1.msra.mxu0 0.0
    %1484 = vmatprep.subr.mxu0 0.0
    %1485 = vmatpush1.msra.mxu0 0.0
    %1486 = vmatprep.subr.mxu0 0.0
    %1487 = vmatpush1.msra.mxu0 0.0
    %1488 = vmatprep.subr.mxu0 0.0
    %1489 = vmatpush1.msra.mxu0 0.0
    %1490 = vmatprep.subr.mxu0 0.0
    %1491 = vmatpush1.msra.mxu0 0.0
    %1492 = vmatprep.subr.mxu0 0.0
    %1493 = vmatpush1.msra.mxu0 0.0
    %1494 = vmatprep.subr.mxu0 0.0
    %1495 = vmatpush1.msra.mxu0 0.0
    %1496 = vmatprep.subr.mxu0 0.0
    %1497 = vmatpush1.msra.mxu0 0.0
    %1498 = vmatprep.subr.mxu0 0.0
    %1499 = vmatpush1.msra.mxu0 0.0
    %1500 = vmatprep.subr.mxu0 0.0
    %1501 = vmatpush1.msra.mxu0 0.0
    %1502 = vmatprep.subr.mxu0 0.0
    %1503 = vmatpush1.msra.mxu0 0.0
    %1504 = vmatprep.subr.mxu0 0.0
    %1505 = vmatpush1.msra.mxu0 0.0
    %1506 = vmatprep.subr.mxu0 0.0
    %1507 = vmatpush1.msra.mxu0 0.0
    %1508 = vmatprep.mubr.f32.mxu0 0.0
    %1509 = vmatmul.mubr.f32.gmra.mrb[0].mxu0 %v872
    %v1510 = vpop.f32.mrb[0].mxu0
    %v1511 = vadd.f32 %v1022, %v1510
    %v1512 = vpop.f32.mrb[0].mxu0
    %1513 = vdwg.mxu0
    %1514 = vmatprep.subr.mxu0 0.0
    %1515 = vmatpush1.msra.mxu0 %v422
    %1516 = vmatprep.subr.mxu0 0.0
    %1517 = vmatpush1.msra.mxu0 %v423
    %1518 = vmatprep.subr.mxu0 0.0
    %1519 = vmatpush1.msra.mxu0 %v424
    %1520 = vmatprep.subr.mxu0 0.0
    %1521 = vmatpush1.msra.mxu0 %v425
    %1522 = vmatprep.subr.mxu0 0.0
    %1523 = vmatpush1.msra.mxu0 0.0
    %1524 = vmatprep.subr.mxu0 0.0
    %1525 = vmatpush1.msra.mxu0 0.0
    %1526 = vmatprep.subr.mxu0 0.0
    %1527 = vmatpush1.msra.mxu0 0.0
    %1528 = vmatprep.subr.mxu0 0.0
    %1529 = vmatpush1.msra.mxu0 0.0
    %1530 = vmatprep.subr.mxu0 0.0
    %1531 = vmatpush1.msra.mxu0 0.0
    %1532 = vmatprep.subr.mxu0 0.0
    %1533 = vmatpush1.msra.mxu0 0.0
    %1534 = vmatprep.subr.mxu0 0.0
    %1535 = vmatpush1.msra.mxu0 0.0
    %1536 = vmatprep.subr.mxu0 0.0
    %1537 = vmatpush1.msra.mxu0 0.0
    %1538 = vmatprep.subr.mxu0 0.0
    %1539 = vmatpush1.msra.mxu0 0.0
    %1540 = vmatprep.subr.mxu0 0.0
    %1541 = vmatpush1.msra.mxu0 0.0
    %1542 = vmatprep.subr.mxu0 0.0
    %1543 = vmatpush1.msra.mxu0 0.0
    %1544 = vmatprep.subr.mxu0 0.0
    %1545 = vmatpush1.msra.mxu0 0.0
    %1546 = vmatprep.subr.mxu0 0.0
    %1547 = vmatpush1.msra.mxu0 0.0
    %1548 = vmatprep.subr.mxu0 0.0
    %1549 = vmatpush1.msra.mxu0 0.0
    %1550 = vmatprep.subr.mxu0 0.0
    %1551 = vmatpush1.msra.mxu0 0.0
    %1552 = vmatprep.subr.mxu0 0.0
    %1553 = vmatpush1.msra.mxu0 0.0
    %1554 = vmatprep.subr.mxu0 0.0
    %1555 = vmatpush1.msra.mxu0 0.0
    %1556 = vmatprep.subr.mxu0 0.0
    %1557 = vmatpush1.msra.mxu0 0.0
    %1558 = vmatprep.subr.mxu0 0.0
    %1559 = vmatpush1.msra.mxu0 0.0
    %1560 = vmatprep.subr.mxu0 0.0
    %1561 = vmatpush1.msra.mxu0 0.0
    %1562 = vmatprep.subr.mxu0 0.0
    %1563 = vmatpush1.msra.mxu0 0.0
    %1564 = vmatprep.subr.mxu0 0.0
    %1565 = vmatpush1.msra.mxu0 0.0
    %1566 = vmatprep.subr.mxu0 0.0
    %1567 = vmatpush1.msra.mxu0 0.0
    %1568 = vmatprep.subr.mxu0 0.0
    %1569 = vmatpush1.msra.mxu0 0.0
    %1570 = vmatprep.subr.mxu0 0.0
    %1571 = vmatpush1.msra.mxu0 0.0
    %1572 = vmatprep.subr.mxu0 0.0
    %1573 = vmatpush1.msra.mxu0 0.0
    %1574 = vmatprep.subr.mxu0 0.0
    %1575 = vmatpush1.msra.mxu0 0.0
    %1576 = vmatprep.subr.mxu0 0.0
    %1577 = vmatpush1.msra.mxu0 0.0
    %1578 = vmatprep.mubr.f32.mxu0 0.0
    %1579 = vmatmul.mubr.f32.gmra.mrb[0].mxu0 %v945
    %v1580 = vpop.f32.mrb[0].mxu0
    %v1581 = vadd.f32 %v1022, %v1580
    %v1582 = vpop.f32.mrb[0].mxu0
    %1583 = vdwg.mxu0
    %v1584 = vlaneseq
    %v1585 = vshrl.u32 %v1584, 7
    %v1586 = vadd.s32 %v1585, 8
    %v1587 = vadd.s32 %v1585, 16
    %v1588 = vadd.s32 %v1585, 24
    %v1589 = vlaneseq
    %v1590 = vand.u32 %v1589, 127
    %v1591 = vmul.u32 %v1590, 4
    %vm1592 = vcmp.ge.s32.totalorder %v1585, %v1591
    %vm1593 = vcmp.ge.s32.totalorder %v1586, %v1591
    %vm1594 = vcmp.ge.s32.totalorder %v1587, %v1591
    %vm1595 = vcmp.ge.s32.totalorder %v1588, %v1591
    %v1596 = vadd.s32 %v1590, 1
    %v1597 = vmul.u32 %v1596, 4
    %vm1598 = vcmp.lt.s32.totalorder %v1585, %v1597
    %vm1599 = vcmp.lt.s32.totalorder %v1586, %v1597
    %vm1600 = vcmp.lt.s32.totalorder %v1587, %v1597
    %vm1601 = vcmp.lt.s32.totalorder %v1588, %v1597
    %vm1602 = vmand %vm1592, %vm1598
    %vm1603 = vmand %vm1593, %vm1599
    %vm1604 = vmand %vm1594, %vm1600
    %vm1605 = vmand %vm1595, %vm1601
    %v1606 = vsel %vm1602, 1, 0
    %v1607 = vsel %vm1603, 1, 0
    %v1608 = vsel %vm1604, 1, 0
    %v1609 = vsel %vm1605, 1, 0
    %v1610 = vcvt.s32.f32 %v1606
    %v1611 = vcvt.s32.f32 %v1607
    %v1612 = vcvt.s32.f32 %v1608
    %v1613 = vcvt.s32.f32 %v1609
    %v1614 = vmul.u32 %v1585, 4
    %vm1615 = vcmp.ge.s32.totalorder %v1590, %v1614
    %v1616 = vadd.s32 %v1585, 1
    %v1617 = vmul.u32 %v1616, 4
    %vm1618 = vcmp.lt.s32.totalorder %v1590, %v1617
    %vm1619 = vmand %vm1615, %vm1618
    %v1620 = vsel %vm1619, 1, 0
    %v1621 = vcvt.s32.f32 %v1620
    %v1622 = vmul.f32 %v503, %v417
    %v1623 = vmul.f32 %v576, %v417
    %v1624 = vmul.f32 %v649, %v417
    %v1625 = vmul.f32 %v722, %v417
    %v1626 = vmul.f32 %v795, %v417
    %v1627 = vmul.f32 %v868, %v417
    %v1628 = vmul.f32 %v941, %v417
    %v1629 = vmul.f32 %v1014, %v417
    %v1631 = vsel %vm343, %v1622, 0
    %1633 = vmatprep.subr.mxu0 0.0
    %1634 = vmatpush1.msra.mxu0 %v1610
    %1635 = vmatprep.subr.mxu0 0.0
    %1636 = vmatpush1.msra.mxu0 %v1611
    %1637 = vmatprep.subr.mxu0 0.0
    %1638 = vmatpush1.msra.mxu0 %v1612
    %1639 = vmatprep.subr.mxu0 0.0
    %1640 = vmatpush1.msra.mxu0 %v1613
    %1641 = vmatprep.subr.mxu0 0.0
    %1642 = vmatpush1.msra.mxu0 0.0
    %1643 = vmatprep.subr.mxu0 0.0
    %1644 = vmatpush1.msra.mxu0 0.0
    %1645 = vmatprep.subr.mxu0 0.0
    %1646 = vmatpush1.msra.mxu0 0.0
    %1647 = vmatprep.subr.mxu0 0.0
    %1648 = vmatpush1.msra.mxu0 0.0
    %1649 = vmatprep.subr.mxu0 0.0
    %1650 = vmatpush1.msra.mxu0 0.0
    %1651 = vmatprep.subr.mxu0 0.0
    %1652 = vmatpush1.msra.mxu0 0.0
    %1653 = vmatprep.subr.mxu0 0.0
    %1654 = vmatpush1.msra.mxu0 0.0
    %1655 = vmatprep.subr.mxu0 0.0
    %1656 = vmatpush1.msra.mxu0 0.0
    %1657 = vmatprep.subr.mxu0 0.0
    %1658 = vmatpush1.msra.mxu0 0.0
    %1659 = vmatprep.subr.mxu0 0.0
    %1660 = vmatpush1.msra.mxu0 0.0
    %1661 = vmatprep.subr.mxu0 0.0
    %1662 = vmatpush1.msra.mxu0 0.0
    %1663 = vmatprep.subr.mxu0 0.0
    %1664 = vmatpush1.msra.mxu0 0.0
    %1665 = vmatprep.subr.mxu0 0.0
    %1666 = vmatpush1.msra.mxu0 0.0
    %1667 = vmatprep.subr.mxu0 0.0
    %1668 = vmatpush1.msra.mxu0 0.0
    %1669 = vmatprep.subr.mxu0 0.0
    %1670 = vmatpush1.msra.mxu0 0.0
    %1671 = vmatprep.subr.mxu0 0.0
    %1672 = vmatpush1.msra.mxu0 0.0
    %1673 = vmatprep.subr.mxu0 0.0
    %1674 = vmatpush1.msra.mxu0 0.0
    %1675 = vmatprep.subr.mxu0 0.0
    %1676 = vmatpush1.msra.mxu0 0.0
    %1677 = vmatprep.subr.mxu0 0.0
    %1678 = vmatpush1.msra.mxu0 0.0
    %1679 = vmatprep.subr.mxu0 0.0
    %1680 = vmatpush1.msra.mxu0 0.0
    %1681 = vmatprep.subr.mxu0 0.0
    %1682 = vmatpush1.msra.mxu0 0.0
    %1683 = vmatprep.subr.mxu0 0.0
    %1684 = vmatpush1.msra.mxu0 0.0
    %1685 = vmatprep.subr.mxu0 0.0
    %1686 = vmatpush1.msra.mxu0 0.0
    %1687 = vmatprep.subr.mxu0 0.0
    %1688 = vmatpush1.msra.mxu0 0.0
    %1689 = vmatprep.subr.mxu0 0.0
    %1690 = vmatpush1.msra.mxu0 0.0
    %1691 = vmatprep.subr.mxu0 0.0
    %1692 = vmatpush1.msra.mxu0 0.0
    %1693 = vmatprep.subr.mxu0 0.0
    %1694 = vmatpush1.msra.mxu0 0.0
    %1695 = vmatprep.subr.mxu0 0.0
    %1696 = vmatpush1.msra.mxu0 0.0
    %1697 = vmatprep.mubr.f32.mxu0 0.0
    %1698 = vmatmul.mubr.f32.gmra.mrb[0].mxu0 %v1631
    %v1699 = vpop.f32.mrb[0].mxu0
    %v1700 = vadd.f32 0.0, %v1699
    %v1701 = vpop.f32.mrb[0].mxu0
    %1702 = vdwg.mxu0
    %v1704 = vsel %vm343, %v1623, 0
    %1706 = vmatprep.subr.mxu0 0.0
    %1707 = vmatpush1.msra.mxu0 %v1610
    %1708 = vmatprep.subr.mxu0 0.0
    %1709 = vmatpush1.msra.mxu0 %v1611
    %1710 = vmatprep.subr.mxu0 0.0
    %1711 = vmatpush1.msra.mxu0 %v1612
    %1712 = vmatprep.subr.mxu0 0.0
    %1713 = vmatpush1.msra.mxu0 %v1613
    %1714 = vmatprep.subr.mxu0 0.0
    %1715 = vmatpush1.msra.mxu0 0.0
    %1716 = vmatprep.subr.mxu0 0.0
    %1717 = vmatpush1.msra.mxu0 0.0
    %1718 = vmatprep.subr.mxu0 0.0
    %1719 = vmatpush1.msra.mxu0 0.0
    %1720 = vmatprep.subr.mxu0 0.0
    %1721 = vmatpush1.msra.mxu0 0.0
    %1722 = vmatprep.subr.mxu0 0.0
    %1723 = vmatpush1.msra.mxu0 0.0
    %1724 = vmatprep.subr.mxu0 0.0
    %1725 = vmatpush1.msra.mxu0 0.0
    %1726 = vmatprep.subr.mxu0 0.0
    %1727 = vmatpush1.msra.mxu0 0.0
    %1728 = vmatprep.subr.mxu0 0.0
    %1729 = vmatpush1.msra.mxu0 0.0
    %1730 = vmatprep.subr.mxu0 0.0
    %1731 = vmatpush1.msra.mxu0 0.0
    %1732 = vmatprep.subr.mxu0 0.0
    %1733 = vmatpush1.msra.mxu0 0.0
    %1734 = vmatprep.subr.mxu0 0.0
    %1735 = vmatpush1.msra.mxu0 0.0
    %1736 = vmatprep.subr.mxu0 0.0
    %1737 = vmatpush1.msra.mxu0 0.0
    %1738 = vmatprep.subr.mxu0 0.0
    %1739 = vmatpush1.msra.mxu0 0.0
    %1740 = vmatprep.subr.mxu0 0.0
    %1741 = vmatpush1.msra.mxu0 0.0
    %1742 = vmatprep.subr.mxu0 0.0
    %1743 = vmatpush1.msra.mxu0 0.0
    %1744 = vmatprep.subr.mxu0 0.0
    %1745 = vmatpush1.msra.mxu0 0.0
    %1746 = vmatprep.subr.mxu0 0.0
    %1747 = vmatpush1.msra.mxu0 0.0
    %1748 = vmatprep.subr.mxu0 0.0
    %1749 = vmatpush1.msra.mxu0 0.0
    %1750 = vmatprep.subr.mxu0 0.0
    %1751 = vmatpush1.msra.mxu0 0.0
    %1752 = vmatprep.subr.mxu0 0.0
    %1753 = vmatpush1.msra.mxu0 0.0
    %1754 = vmatprep.subr.mxu0 0.0
    %1755 = vmatpush1.msra.mxu0 0.0
    %1756 = vmatprep.subr.mxu0 0.0
    %1757 = vmatpush1.msra.mxu0 0.0
    %1758 = vmatprep.subr.mxu0 0.0
    %1759 = vmatpush1.msra.mxu0 0.0
    %1760 = vmatprep.subr.mxu0 0.0
    %1761 = vmatpush1.msra.mxu0 0.0
    %1762 = vmatprep.subr.mxu0 0.0
    %1763 = vmatpush1.msra.mxu0 0.0
    %1764 = vmatprep.subr.mxu0 0.0
    %1765 = vmatpush1.msra.mxu0 0.0
    %1766 = vmatprep.subr.mxu0 0.0
    %1767 = vmatpush1.msra.mxu0 0.0
    %1768 = vmatprep.subr.mxu0 0.0
    %1769 = vmatpush1.msra.mxu0 0.0
    %1770 = vmatprep.mubr.f32.mxu0 0.0
    %1771 = vmatmul.mubr.f32.gmra.mrb[0].mxu0 %v1704
    %v1772 = vpop.f32.mrb[0].mxu0
    %v1773 = vadd.f32 0.0, %v1772
    %v1774 = vpop.f32.mrb[0].mxu0
    %1775 = vdwg.mxu0
    %v1777 = vsel %vm343, %v1624, 0
    %1779 = vmatprep.subr.mxu0 0.0
    %1780 = vmatpush1.msra.mxu0 %v1610
    %1781 = vmatprep.subr.mxu0 0.0
    %1782 = vmatpush1.msra.mxu0 %v1611
    %1783 = vmatprep.subr.mxu0 0.0
    %1784 = vmatpush1.msra.mxu0 %v1612
    %1785 = vmatprep.subr.mxu0 0.0
    %1786 = vmatpush1.msra.mxu0 %v1613
    %1787 = vmatprep.subr.mxu0 0.0
    %1788 = vmatpush1.msra.mxu0 0.0
    %1789 = vmatprep.subr.mxu0 0.0
    %1790 = vmatpush1.msra.mxu0 0.0
    %1791 = vmatprep.subr.mxu0 0.0
    %1792 = vmatpush1.msra.mxu0 0.0
    %1793 = vmatprep.subr.mxu0 0.0
    %1794 = vmatpush1.msra.mxu0 0.0
    %1795 = vmatprep.subr.mxu0 0.0
    %1796 = vmatpush1.msra.mxu0 0.0
    %1797 = vmatprep.subr.mxu0 0.0
    %1798 = vmatpush1.msra.mxu0 0.0
    %1799 = vmatprep.subr.mxu0 0.0
    %1800 = vmatpush1.msra.mxu0 0.0
    %1801 = vmatprep.subr.mxu0 0.0
    %1802 = vmatpush1.msra.mxu0 0.0
    %1803 = vmatprep.subr.mxu0 0.0
    %1804 = vmatpush1.msra.mxu0 0.0
    %1805 = vmatprep.subr.mxu0 0.0
    %1806 = vmatpush1.msra.mxu0 0.0
    %1807 = vmatprep.subr.mxu0 0.0
    %1808 = vmatpush1.msra.mxu0 0.0
    %1809 = vmatprep.subr.mxu0 0.0
    %1810 = vmatpush1.msra.mxu0 0.0
    %1811 = vmatprep.subr.mxu0 0.0
    %1812 = vmatpush1.msra.mxu0 0.0
    %1813 = vmatprep.subr.mxu0 0.0
    %1814 = vmatpush1.msra.mxu0 0.0
    %1815 = vmatprep.subr.mxu0 0.0
    %1816 = vmatpush1.msra.mxu0 0.0
    %1817 = vmatprep.subr.mxu0 0.0
    %1818 = vmatpush1.msra.mxu0 0.0
    %1819 = vmatprep.subr.mxu0 0.0
    %1820 = vmatpush1.msra.mxu0 0.0
    %1821 = vmatprep.subr.mxu0 0.0
    %1822 = vmatpush1.msra.mxu0 0.0
    %1823 = vmatprep.subr.mxu0 0.0
    %1824 = vmatpush1.msra.mxu0 0.0
    %1825 = vmatprep.subr.mxu0 0.0
    %1826 = vmatpush1.msra.mxu0 0.0
    %1827 = vmatprep.subr.mxu0 0.0
    %1828 = vmatpush1.msra.mxu0 0.0
    %1829 = vmatprep.subr.mxu0 0.0
    %1830 = vmatpush1.msra.mxu0 0.0
    %1831 = vmatprep.subr.mxu0 0.0
    %1832 = vmatpush1.msra.mxu0 0.0
    %1833 = vmatprep.subr.mxu0 0.0
    %1834 = vmatpush1.msra.mxu0 0.0
    %1835 = vmatprep.subr.mxu0 0.0
    %1836 = vmatpush1.msra.mxu0 0.0
    %1837 = vmatprep.subr.mxu0 0.0
    %1838 = vmatpush1.msra.mxu0 0.0
    %1839 = vmatprep.subr.mxu0 0.0
    %1840 = vmatpush1.msra.mxu0 0.0
    %1841 = vmatprep.subr.mxu0 0.0
    %1842 = vmatpush1.msra.mxu0 0.0
    %1843 = vmatprep.mubr.f32.mxu0 0.0
    %1844 = vmatmul.mubr.f32.gmra.mrb[0].mxu0 %v1777
    %v1845 = vpop.f32.mrb[0].mxu0
    %v1846 = vadd.f32 0.0, %v1845
    %v1847 = vpop.f32.mrb[0].mxu0
    %1848 = vdwg.mxu0
    %v1850 = vsel %vm343, %v1625, 0
    %1852 = vmatprep.subr.mxu0 0.0
    %1853 = vmatpush1.msra.mxu0 %v1610
    %1854 = vmatprep.subr.mxu0 0.0
    %1855 = vmatpush1.msra.mxu0 %v1611
    %1856 = vmatprep.subr.mxu0 0.0
    %1857 = vmatpush1.msra.mxu0 %v1612
    %1858 = vmatprep.subr.mxu0 0.0
    %1859 = vmatpush1.msra.mxu0 %v1613
    %1860 = vmatprep.subr.mxu0 0.0
    %1861 = vmatpush1.msra.mxu0 0.0
    %1862 = vmatprep.subr.mxu0 0.0
    %1863 = vmatpush1.msra.mxu0 0.0
    %1864 = vmatprep.subr.mxu0 0.0
    %1865 = vmatpush1.msra.mxu0 0.0
    %1866 = vmatprep.subr.mxu0 0.0
    %1867 = vmatpush1.msra.mxu0 0.0
    %1868 = vmatprep.subr.mxu0 0.0
    %1869 = vmatpush1.msra.mxu0 0.0
    %1870 = vmatprep.subr.mxu0 0.0
    %1871 = vmatpush1.msra.mxu0 0.0
    %1872 = vmatprep.subr.mxu0 0.0
    %1873 = vmatpush1.msra.mxu0 0.0
    %1874 = vmatprep.subr.mxu0 0.0
    %1875 = vmatpush1.msra.mxu0 0.0
    %1876 = vmatprep.subr.mxu0 0.0
    %1877 = vmatpush1.msra.mxu0 0.0
    %1878 = vmatprep.subr.mxu0 0.0
    %1879 = vmatpush1.msra.mxu0 0.0
    %1880 = vmatprep.subr.mxu0 0.0
    %1881 = vmatpush1.msra.mxu0 0.0
    %1882 = vmatprep.subr.mxu0 0.0
    %1883 = vmatpush1.msra.mxu0 0.0
    %1884 = vmatprep.subr.mxu0 0.0
    %1885 = vmatpush1.msra.mxu0 0.0
    %1886 = vmatprep.subr.mxu0 0.0
    %1887 = vmatpush1.msra.mxu0 0.0
    %1888 = vmatprep.subr.mxu0 0.0
    %1889 = vmatpush1.msra.mxu0 0.0
    %1890 = vmatprep.subr.mxu0 0.0
    %1891 = vmatpush1.msra.mxu0 0.0
    %1892 = vmatprep.subr.mxu0 0.0
    %1893 = vmatpush1.msra.mxu0 0.0
    %1894 = vmatprep.subr.mxu0 0.0
    %1895 = vmatpush1.msra.mxu0 0.0
    %1896 = vmatprep.subr.mxu0 0.0
    %1897 = vmatpush1.msra.mxu0 0.0
    %1898 = vmatprep.subr.mxu0 0.0
    %1899 = vmatpush1.msra.mxu0 0.0
    %1900 = vmatprep.subr.mxu0 0.0
    %1901 = vmatpush1.msra.mxu0 0.0
    %1902 = vmatprep.subr.mxu0 0.0
    %1903 = vmatpush1.msra.mxu0 0.0
    %1904 = vmatprep.subr.mxu0 0.0
    %1905 = vmatpush1.msra.mxu0 0.0
    %1906 = vmatprep.subr.mxu0 0.0
    %1907 = vmatpush1.msra.mxu0 0.0
    %1908 = vmatprep.subr.mxu0 0.0
    %1909 = vmatpush1.msra.mxu0 0.0
    %1910 = vmatprep.subr.mxu0 0.0
    %1911 = vmatpush1.msra.mxu0 0.0
    %1912 = vmatprep.subr.mxu0 0.0
    %1913 = vmatpush1.msra.mxu0 0.0
    %1914 = vmatprep.subr.mxu0 0.0
    %1915 = vmatpush1.msra.mxu0 0.0
    %1916 = vmatprep.mubr.f32.mxu0 0.0
    %1917 = vmatmul.mubr.f32.gmra.mrb[0].mxu0 %v1850
    %v1918 = vpop.f32.mrb[0].mxu0
    %v1919 = vadd.f32 0.0, %v1918
    %v1920 = vpop.f32.mrb[0].mxu0
    %1921 = vdwg.mxu0
    %v1923 = vsel %vm343, %v1626, 0
    %1925 = vmatprep.subr.mxu0 0.0
    %1926 = vmatpush1.msra.mxu0 %v1610
    %1927 = vmatprep.subr.mxu0 0.0
    %1928 = vmatpush1.msra.mxu0 %v1611
    %1929 = vmatprep.subr.mxu0 0.0
    %1930 = vmatpush1.msra.mxu0 %v1612
    %1931 = vmatprep.subr.mxu0 0.0
    %1932 = vmatpush1.msra.mxu0 %v1613
    %1933 = vmatprep.subr.mxu0 0.0
    %1934 = vmatpush1.msra.mxu0 0.0
    %1935 = vmatprep.subr.mxu0 0.0
    %1936 = vmatpush1.msra.mxu0 0.0
    %1937 = vmatprep.subr.mxu0 0.0
    %1938 = vmatpush1.msra.mxu0 0.0
    %1939 = vmatprep.subr.mxu0 0.0
    %1940 = vmatpush1.msra.mxu0 0.0
    %1941 = vmatprep.subr.mxu0 0.0
    %1942 = vmatpush1.msra.mxu0 0.0
    %1943 = vmatprep.subr.mxu0 0.0
    %1944 = vmatpush1.msra.mxu0 0.0
    %1945 = vmatprep.subr.mxu0 0.0
    %1946 = vmatpush1.msra.mxu0 0.0
    %1947 = vmatprep.subr.mxu0 0.0
    %1948 = vmatpush1.msra.mxu0 0.0
    %1949 = vmatprep.subr.mxu0 0.0
    %1950 = vmatpush1.msra.mxu0 0.0
    %1951 = vmatprep.subr.mxu0 0.0
    %1952 = vmatpush1.msra.mxu0 0.0
    %1953 = vmatprep.subr.mxu0 0.0
    %1954 = vmatpush1.msra.mxu0 0.0
    %1955 = vmatprep.subr.mxu0 0.0
    %1956 = vmatpush1.msra.mxu0 0.0
    %1957 = vmatprep.subr.mxu0 0.0
    %1958 = vmatpush1.msra.mxu0 0.0
    %1959 = vmatprep.subr.mxu0 0.0
    %1960 = vmatpush1.msra.mxu0 0.0
    %1961 = vmatprep.subr.mxu0 0.0
    %1962 = vmatpush1.msra.mxu0 0.0
    %1963 = vmatprep.subr.mxu0 0.0
    %1964 = vmatpush1.msra.mxu0 0.0
    %1965 = vmatprep.subr.mxu0 0.0
    %1966 = vmatpush1.msra.mxu0 0.0
    %1967 = vmatprep.subr.mxu0 0.0
    %1968 = vmatpush1.msra.mxu0 0.0
    %1969 = vmatprep.subr.mxu0 0.0
    %1970 = vmatpush1.msra.mxu0 0.0
    %1971 = vmatprep.subr.mxu0 0.0
    %1972 = vmatpush1.msra.mxu0 0.0
    %1973 = vmatprep.subr.mxu0 0.0
    %1974 = vmatpush1.msra.mxu0 0.0
    %1975 = vmatprep.subr.mxu0 0.0
    %1976 = vmatpush1.msra.mxu0 0.0
    %1977 = vmatprep.subr.mxu0 0.0
    %1978 = vmatpush1.msra.mxu0 0.0
    %1979 = vmatprep.subr.mxu0 0.0
    %1980 = vmatpush1.msra.mxu0 0.0
    %1981 = vmatprep.subr.mxu0 0.0
    %1982 = vmatpush1.msra.mxu0 0.0
    %1983 = vmatprep.subr.mxu0 0.0
    %1984 = vmatpush1.msra.mxu0 0.0
    %1985 = vmatprep.subr.mxu0 0.0
    %1986 = vmatpush1.msra.mxu0 0.0
    %1987 = vmatprep.subr.mxu0 0.0
    %1988 = vmatpush1.msra.mxu0 0.0
    %1989 = vmatprep.mubr.f32.mxu0 0.0
    %1990 = vmatmul.mubr.f32.gmra.mrb[0].mxu0 %v1923
    %v1991 = vpop.f32.mrb[0].mxu0
    %v1992 = vadd.f32 0.0, %v1991
    %v1993 = vpop.f32.mrb[0].mxu0
    %1994 = vdwg.mxu0
    %v1996 = vsel %vm343, %v1627, 0
    %1998 = vmatprep.subr.mxu0 0.0
    %1999 = vmatpush1.msra.mxu0 %v1610
    %2000 = vmatprep.subr.mxu0 0.0
    %2001 = vmatpush1.msra.mxu0 %v1611
    %2002 = vmatprep.subr.mxu0 0.0
    %2003 = vmatpush1.msra.mxu0 %v1612
    %2004 = vmatprep.subr.mxu0 0.0
    %2005 = vmatpush1.msra.mxu0 %v1613
    %2006 = vmatprep.subr.mxu0 0.0
    %2007 = vmatpush1.msra.mxu0 0.0
    %2008 = vmatprep.subr.mxu0 0.0
    %2009 = vmatpush1.msra.mxu0 0.0
    %2010 = vmatprep.subr.mxu0 0.0
    %2011 = vmatpush1.msra.mxu0 0.0
    %2012 = vmatprep.subr.mxu0 0.0
    %2013 = vmatpush1.msra.mxu0 0.0
    %2014 = vmatprep.subr.mxu0 0.0
    %2015 = vmatpush1.msra.mxu0 0.0
    %2016 = vmatprep.subr.mxu0 0.0
    %2017 = vmatpush1.msra.mxu0 0.0
    %2018 = vmatprep.subr.mxu0 0.0
    %2019 = vmatpush1.msra.mxu0 0.0
    %2020 = vmatprep.subr.mxu0 0.0
    %2021 = vmatpush1.msra.mxu0 0.0
    %2022 = vmatprep.subr.mxu0 0.0
    %2023 = vmatpush1.msra.mxu0 0.0
    %2024 = vmatprep.subr.mxu0 0.0
    %2025 = vmatpush1.msra.mxu0 0.0
    %2026 = vmatprep.subr.mxu0 0.0
    %2027 = vmatpush1.msra.mxu0 0.0
    %2028 = vmatprep.subr.mxu0 0.0
    %2029 = vmatpush1.msra.mxu0 0.0
    %2030 = vmatprep.subr.mxu0 0.0
    %2031 = vmatpush1.msra.mxu0 0.0
    %2032 = vmatprep.subr.mxu0 0.0
    %2033 = vmatpush1.msra.mxu0 0.0
    %2034 = vmatprep.subr.mxu0 0.0
    %2035 = vmatpush1.msra.mxu0 0.0
    %2036 = vmatprep.subr.mxu0 0.0
    %2037 = vmatpush1.msra.mxu0 0.0
    %2038 = vmatprep.subr.mxu0 0.0
    %2039 = vmatpush1.msra.mxu0 0.0
    %2040 = vmatprep.subr.mxu0 0.0
    %2041 = vmatpush1.msra.mxu0 0.0
    %2042 = vmatprep.subr.mxu0 0.0
    %2043 = vmatpush1.msra.mxu0 0.0
    %2044 = vmatprep.subr.mxu0 0.0
    %2045 = vmatpush1.msra.mxu0 0.0
    %2046 = vmatprep.subr.mxu0 0.0
    %2047 = vmatpush1.msra.mxu0 0.0
    %2048 = vmatprep.subr.mxu0 0.0
    %2049 = vmatpush1.msra.mxu0 0.0
    %2050 = vmatprep.subr.mxu0 0.0
    %2051 = vmatpush1.msra.mxu0 0.0
    %2052 = vmatprep.subr.mxu0 0.0
    %2053 = vmatpush1.msra.mxu0 0.0
    %2054 = vmatprep.subr.mxu0 0.0
    %2055 = vmatpush1.msra.mxu0 0.0
    %2056 = vmatprep.subr.mxu0 0.0
    %2057 = vmatpush1.msra.mxu0 0.0
    %2058 = vmatprep.subr.mxu0 0.0
    %2059 = vmatpush1.msra.mxu0 0.0
    %2060 = vmatprep.subr.mxu0 0.0
    %2061 = vmatpush1.msra.mxu0 0.0
    %2062 = vmatprep.mubr.f32.mxu0 0.0
    %2063 = vmatmul.mubr.f32.gmra.mrb[0].mxu0 %v1996
    %v2064 = vpop.f32.mrb[0].mxu0
    %v2065 = vadd.f32 0.0, %v2064
    %v2066 = vpop.f32.mrb[0].mxu0
    %2067 = vdwg.mxu0
    %v2069 = vsel %vm343, %v1628, 0
    %2071 = vmatprep.subr.mxu0 0.0
    %2072 = vmatpush1.msra.mxu0 %v1610
    %2073 = vmatprep.subr.mxu0 0.0
    %2074 = vmatpush1.msra.mxu0 %v1611
    %2075 = vmatprep.subr.mxu0 0.0
    %2076 = vmatpush1.msra.mxu0 %v1612
    %2077 = vmatprep.subr.mxu0 0.0
    %2078 = vmatpush1.msra.mxu0 %v1613
    %2079 = vmatprep.subr.mxu0 0.0
    %2080 = vmatpush1.msra.mxu0 0.0
    %2081 = vmatprep.subr.mxu0 0.0
    %2082 = vmatpush1.msra.mxu0 0.0
    %2083 = vmatprep.subr.mxu0 0.0
    %2084 = vmatpush1.msra.mxu0 0.0
    %2085 = vmatprep.subr.mxu0 0.0
    %2086 = vmatpush1.msra.mxu0 0.0
    %2087 = vmatprep.subr.mxu0 0.0
    %2088 = vmatpush1.msra.mxu0 0.0
    %2089 = vmatprep.subr.mxu0 0.0
    %2090 = vmatpush1.msra.mxu0 0.0
    %2091 = vmatprep.subr.mxu0 0.0
    %2092 = vmatpush1.msra.mxu0 0.0
    %2093 = vmatprep.subr.mxu0 0.0
    %2094 = vmatpush1.msra.mxu0 0.0
    %2095 = vmatprep.subr.mxu0 0.0
    %2096 = vmatpush1.msra.mxu0 0.0
    %2097 = vmatprep.subr.mxu0 0.0
    %2098 = vmatpush1.msra.mxu0 0.0
    %2099 = vmatprep.subr.mxu0 0.0
    %2100 = vmatpush1.msra.mxu0 0.0
    %2101 = vmatprep.subr.mxu0 0.0
    %2102 = vmatpush1.msra.mxu0 0.0
    %2103 = vmatprep.subr.mxu0 0.0
    %2104 = vmatpush1.msra.mxu0 0.0
    %2105 = vmatprep.subr.mxu0 0.0
    %2106 = vmatpush1.msra.mxu0 0.0
    %2107 = vmatprep.subr.mxu0 0.0
    %2108 = vmatpush1.msra.mxu0 0.0
    %2109 = vmatprep.subr.mxu0 0.0
    %2110 = vmatpush1.msra.mxu0 0.0
    %2111 = vmatprep.subr.mxu0 0.0
    %2112 = vmatpush1.msra.mxu0 0.0
    %2113 = vmatprep.subr.mxu0 0.0
    %2114 = vmatpush1.msra.mxu0 0.0
    %2115 = vmatprep.subr.mxu0 0.0
    %2116 = vmatpush1.msra.mxu0 0.0
    %2117 = vmatprep.subr.mxu0 0.0
    %2118 = vmatpush1.msra.mxu0 0.0
    %2119 = vmatprep.subr.mxu0 0.0
    %2120 = vmatpush1.msra.mxu0 0.0
    %2121 = vmatprep.subr.mxu0 0.0
    %2122 = vmatpush1.msra.mxu0 0.0
    %2123 = vmatprep.subr.mxu0 0.0
    %2124 = vmatpush1.msra.mxu0 0.0
    %2125 = vmatprep.subr.mxu0 0.0
    %2126 = vmatpush1.msra.mxu0 0.0
    %2127 = vmatprep.subr.mxu0 0.0
    %2128 = vmatpush1.msra.mxu0 0.0
    %2129 = vmatprep.subr.mxu0 0.0
    %2130 = vmatpush1.msra.mxu0 0.0
    %2131 = vmatprep.subr.mxu0 0.0
    %2132 = vmatpush1.msra.mxu0 0.0
    %2133 = vmatprep.subr.mxu0 0.0
    %2134 = vmatpush1.msra.mxu0 0.0
    %2135 = vmatprep.mubr.f32.mxu0 0.0
    %2136 = vmatmul.mubr.f32.gmra.mrb[0].mxu0 %v2069
    %v2137 = vpop.f32.mrb[0].mxu0
    %v2138 = vadd.f32 0.0, %v2137
    %v2139 = vpop.f32.mrb[0].mxu0
    %2140 = vdwg.mxu0
    %v2142 = vsel %vm343, %v1629, 0
    %2144 = vmatprep.subr.mxu0 0.0
    %2145 = vmatpush1.msra.mxu0 %v1610
    %2146 = vmatprep.subr.mxu0 0.0
    %2147 = vmatpush1.msra.mxu0 %v1611
    %2148 = vmatprep.subr.mxu0 0.0
    %2149 = vmatpush1.msra.mxu0 %v1612
    %2150 = vmatprep.subr.mxu0 0.0
    %2151 = vmatpush1.msra.mxu0 %v1613
    %2152 = vmatprep.subr.mxu0 0.0
    %2153 = vmatpush1.msra.mxu0 0.0
    %2154 = vmatprep.subr.mxu0 0.0
    %2155 = vmatpush1.msra.mxu0 0.0
    %2156 = vmatprep.subr.mxu0 0.0
    %2157 = vmatpush1.msra.mxu0 0.0
    %2158 = vmatprep.subr.mxu0 0.0
    %2159 = vmatpush1.msra.mxu0 0.0
    %2160 = vmatprep.subr.mxu0 0.0
    %2161 = vmatpush1.msra.mxu0 0.0
    %2162 = vmatprep.subr.mxu0 0.0
    %2163 = vmatpush1.msra.mxu0 0.0
    %2164 = vmatprep.subr.mxu0 0.0
    %2165 = vmatpush1.msra.mxu0 0.0
    %2166 = vmatprep.subr.mxu0 0.0
    %2167 = vmatpush1.msra.mxu0 0.0
    %2168 = vmatprep.subr.mxu0 0.0
    %2169 = vmatpush1.msra.mxu0 0.0
    %2170 = vmatprep.subr.mxu0 0.0
    %2171 = vmatpush1.msra.mxu0 0.0
    %2172 = vmatprep.subr.mxu0 0.0
    %2173 = vmatpush1.msra.mxu0 0.0
    %2174 = vmatprep.subr.mxu0 0.0
    %2175 = vmatpush1.msra.mxu0 0.0
    %2176 = vmatprep.subr.mxu0 0.0
    %2177 = vmatpush1.msra.mxu0 0.0
    %2178 = vmatprep.subr.mxu0 0.0
    %2179 = vmatpush1.msra.mxu0 0.0
    %2180 = vmatprep.subr.mxu0 0.0
    %2181 = vmatpush1.msra.mxu0 0.0
    %2182 = vmatprep.subr.mxu0 0.0
    %2183 = vmatpush1.msra.mxu0 0.0
    %2184 = vmatprep.subr.mxu0 0.0
    %2185 = vmatpush1.msra.mxu0 0.0
    %2186 = vmatprep.subr.mxu0 0.0
    %2187 = vmatpush1.msra.mxu0 0.0
    %2188 = vmatprep.subr.mxu0 0.0
    %2189 = vmatpush1.msra.mxu0 0.0
    %2190 = vmatprep.subr.mxu0 0.0
    %2191 = vmatpush1.msra.mxu0 0.0
    %2192 = vmatprep.subr.mxu0 0.0
    %2193 = vmatpush1.msra.mxu0 0.0
    %2194 = vmatprep.subr.mxu0 0.0
    %2195 = vmatpush1.msra.mxu0 0.0
    %2196 = vmatprep.subr.mxu0 0.0
    %2197 = vmatpush1.msra.mxu0 0.0
    %2198 = vmatprep.subr.mxu0 0.0
    %2199 = vmatpush1.msra.mxu0 0.0
    %2200 = vmatprep.subr.mxu0 0.0
    %2201 = vmatpush1.msra.mxu0 0.0
    %2202 = vmatprep.subr.mxu0 0.0
    %2203 = vmatpush1.msra.mxu0 0.0
    %2204 = vmatprep.subr.mxu0 0.0
    %2205 = vmatpush1.msra.mxu0 0.0
    %2206 = vmatprep.subr.mxu0 0.0
    %2207 = vmatpush1.msra.mxu0 0.0
    %2208 = vmatprep.mubr.f32.mxu0 0.0
    %2209 = vmatmul.mubr.f32.gmra.mrb[0].mxu0 %v2142
    %v2210 = vpop.f32.mrb[0].mxu0
    %v2211 = vadd.f32 0.0, %v2210
    %v2212 = vpop.f32.mrb[0].mxu0
    %2213 = vdwg.mxu0
    %vm2214 = vcmask 60416
    %v2215 = vsel %vm2214, %v1700, -inf
    %v2216 = vsel %vm2214, %v1773, -inf
    %v2217 = vsel %vm2214, %v1846, -inf
    %v2218 = vsel %vm2214, %v1919, -inf
    %v2219 = vsel %vm2214, %v1992, -inf
    %v2220 = vmax.f32 %v2215, %v2219
    %v2221 = vsel %vm2214, %v2065, -inf
    %v2222 = vmax.f32 %v2216, %v2221
    %v2223 = vsel %vm2214, %v2138, -inf
    %v2224 = vmax.f32 %v2217, %v2223
    %v2225 = vsel %vm2214, %v2211, -inf
    %v2226 = vmax.f32 %v2218, %v2225
    %v2227 = vmax.f32 %v2220, %v2222
    %v2228 = vmax.f32 %v2224, %v2226
    %v2229 = vmax.f32 %v2227, %v2228
    %v2230 = vsub.f32 %v1700, %v2229
    %v2231 = vsub.f32 %v1773, %v2229
    %v2232 = vsub.f32 %v1846, %v2229
    %v2233 = vsub.f32 %v1919, %v2229
    %v2234 = vsub.f32 %v1992, %v2229
    %v2235 = vsub.f32 %v2065, %v2229
    %v2236 = vsub.f32 %v2138, %v2229
    %v2237 = vsub.f32 %v2211, %v2229
    %v2238 = vmul.f32 %v2230, 1.442695
    %v2239 = vpow.pop %v2238
    %v2240 = vmul.f32 %v2231, 1.442695
    %v2241 = vpow.pop %v2240
    %v2242 = vmul.f32 %v2232, 1.442695
    %v2243 = vpow.pop %v2242
    %v2244 = vmul.f32 %v2233, 1.442695
    %v2245 = vpow.pop %v2244
    %v2246 = vmul.f32 %v2234, 1.442695
    %v2247 = vpow.pop %v2246
    %v2248 = vmul.f32 %v2235, 1.442695
    %v2249 = vpow.pop %v2248
    %v2250 = vmul.f32 %v2236, 1.442695
    %v2251 = vpow.pop %v2250
    %v2252 = vmul.f32 %v2237, 1.442695
    %v2253 = vpow.pop %v2252
    %v2254 = vsel %vm2214, %v2239, 0.0
    %v2255 = vsel %vm2214, %v2241, 0.0
    %v2256 = vadd.f32 %v2254, %v2255
    %v2257 = vsel %vm2214, %v2243, 0.0
    %v2258 = vadd.f32 %v2256, %v2257
    %v2259 = vsel %vm2214, %v2245, 0.0
    %v2260 = vadd.f32 %v2258, %v2259
    %v2261 = vsel %vm2214, %v2247, 0.0
    %v2262 = vadd.f32 %v2260, %v2261
    %v2263 = vsel %vm2214, %v2249, 0.0
    %v2264 = vadd.f32 %v2262, %v2263
    %v2265 = vsel %vm2214, %v2251, 0.0
    %v2266 = vadd.f32 %v2264, %v2265
    %v2267 = vsel %vm2214, %v2253, 0.0
    %v2268 = vadd.f32 %v2266, %v2267
    %v2269 = vrcp.pop %v2268
    %v2270 = vmul.f32 %v2239, %v2269
    %v2271 = vmul.f32 %v2241, %v2269
    %v2272 = vmul.f32 %v2243, %v2269
    %v2273 = vmul.f32 %v2245, %v2269
    %v2274 = vmul.f32 %v2247, %v2269
    %v2275 = vmul.f32 %v2249, %v2269
    %v2276 = vmul.f32 %v2251, %v2269
    %v2277 = vmul.f32 %v2253, %v2269
    %vm2278 = vcmask 64512
    %v2280 = vsel %vm2278, %v2270, 0
    %2282 = vmatprep.subr.mxu0 0.0
    %2283 = vmatpush1.msra.mxu0 %v1621
    %2284 = vmatprep.subr.mxu0 0.0
    %2285 = vmatpush1.msra.mxu0 0.0
    %2286 = vmatprep.subr.mxu0 0.0
    %2287 = vmatpush1.msra.mxu0 0.0
    %2288 = vmatprep.subr.mxu0 0.0
    %2289 = vmatpush1.msra.mxu0 0.0
    %2290 = vmatprep.subr.mxu0 0.0
    %2291 = vmatpush1.msra.mxu0 0.0
    %2292 = vmatprep.subr.mxu0 0.0
    %2293 = vmatpush1.msra.mxu0 0.0
    %2294 = vmatprep.subr.mxu0 0.0
    %2295 = vmatpush1.msra.mxu0 0.0
    %2296 = vmatprep.subr.mxu0 0.0
    %2297 = vmatpush1.msra.mxu0 0.0
    %2298 = vmatprep.subr.mxu0 0.0
    %2299 = vmatpush1.msra.mxu0 0.0
    %2300 = vmatprep.subr.mxu0 0.0
    %2301 = vmatpush1.msra.mxu0 0.0
    %2302 = vmatprep.subr.mxu0 0.0
    %2303 = vmatpush1.msra.mxu0 0.0
    %2304 = vmatprep.subr.mxu0 0.0
    %2305 = vmatpush1.msra.mxu0 0.0
    %2306 = vmatprep.subr.mxu0 0.0
    %2307 = vmatpush1.msra.mxu0 0.0
    %2308 = vmatprep.subr.mxu0 0.0
    %2309 = vmatpush1.msra.mxu0 0.0
    %2310 = vmatprep.subr.mxu0 0.0
    %2311 = vmatpush1.msra.mxu0 0.0
    %2312 = vmatprep.subr.mxu0 0.0
    %2313 = vmatpush1.msra.mxu0 0.0
    %2314 = vmatprep.subr.mxu0 0.0
    %2315 = vmatpush1.msra.mxu0 0.0
    %2316 = vmatprep.subr.mxu0 0.0
    %2317 = vmatpush1.msra.mxu0 0.0
    %2318 = vmatprep.subr.mxu0 0.0
    %2319 = vmatpush1.msra.mxu0 0.0
    %2320 = vmatprep.subr.mxu0 0.0
    %2321 = vmatpush1.msra.mxu0 0.0
    %2322 = vmatprep.subr.mxu0 0.0
    %2323 = vmatpush1.msra.mxu0 0.0
    %2324 = vmatprep.subr.mxu0 0.0
    %2325 = vmatpush1.msra.mxu0 0.0
    %2326 = vmatprep.subr.mxu0 0.0
    %2327 = vmatpush1.msra.mxu0 0.0
    %2328 = vmatprep.subr.mxu0 0.0
    %2329 = vmatpush1.msra.mxu0 0.0
    %2330 = vmatprep.subr.mxu0 0.0
    %2331 = vmatpush1.msra.mxu0 0.0
    %2332 = vmatprep.subr.mxu0 0.0
    %2333 = vmatpush1.msra.mxu0 0.0
    %2334 = vmatprep.subr.mxu0 0.0
    %2335 = vmatpush1.msra.mxu0 0.0
    %2336 = vmatprep.subr.mxu0 0.0
    %2337 = vmatpush1.msra.mxu0 0.0
    %2338 = vmatprep.subr.mxu0 0.0
    %2339 = vmatpush1.msra.mxu0 0.0
    %2340 = vmatprep.subr.mxu0 0.0
    %2341 = vmatpush1.msra.mxu0 0.0
    %2342 = vmatprep.subr.mxu0 0.0
    %2343 = vmatpush1.msra.mxu0 0.0
    %2344 = vmatprep.subr.mxu0 0.0
    %2345 = vmatpush1.msra.mxu0 0.0
    %2346 = vmatprep.mubr.f32.mxu0 0.0
    %2347 = vmatmul.mubr.f32.gmra.mrb[0].mxu0 %v2280
    %v2348 = vpop.f32.mrb[0].mxu0
    %v2349 = vadd.f32 0.0, %v2348
    %v2350 = vpop.f32.mrb[0].mxu0
    %2351 = vdwg.mxu0
    %v2353 = vsel %vm2278, %v2271, 0
    %2355 = vmatprep.subr.mxu0 0.0
    %2356 = vmatpush1.msra.mxu0 %v1621
    %2357 = vmatprep.subr.mxu0 0.0
    %2358 = vmatpush1.msra.mxu0 0.0
    %2359 = vmatprep.subr.mxu0 0.0
    %2360 = vmatpush1.msra.mxu0 0.0
    %2361 = vmatprep.subr.mxu0 0.0
    %2362 = vmatpush1.msra.mxu0 0.0
    %2363 = vmatprep.subr.mxu0 0.0
    %2364 = vmatpush1.msra.mxu0 0.0
    %2365 = vmatprep.subr.mxu0 0.0
    %2366 = vmatpush1.msra.mxu0 0.0
    %2367 = vmatprep.subr.mxu0 0.0
    %2368 = vmatpush1.msra.mxu0 0.0
    %2369 = vmatprep.subr.mxu0 0.0
    %2370 = vmatpush1.msra.mxu0 0.0
    %2371 = vmatprep.subr.mxu0 0.0
    %2372 = vmatpush1.msra.mxu0 0.0
    %2373 = vmatprep.subr.mxu0 0.0
    %2374 = vmatpush1.msra.mxu0 0.0
    %2375 = vmatprep.subr.mxu0 0.0
    %2376 = vmatpush1.msra.mxu0 0.0
    %2377 = vmatprep.subr.mxu0 0.0
    %2378 = vmatpush1.msra.mxu0 0.0
    %2379 = vmatprep.subr.mxu0 0.0
    %2380 = vmatpush1.msra.mxu0 0.0
    %2381 = vmatprep.subr.mxu0 0.0
    %2382 = vmatpush1.msra.mxu0 0.0
    %2383 = vmatprep.subr.mxu0 0.0
    %2384 = vmatpush1.msra.mxu0 0.0
    %2385 = vmatprep.subr.mxu0 0.0
    %2386 = vmatpush1.msra.mxu0 0.0
    %2387 = vmatprep.subr.mxu0 0.0
    %2388 = vmatpush1.msra.mxu0 0.0
    %2389 = vmatprep.subr.mxu0 0.0
    %2390 = vmatpush1.msra.mxu0 0.0
    %2391 = vmatprep.subr.mxu0 0.0
    %2392 = vmatpush1.msra.mxu0 0.0
    %2393 = vmatprep.subr.mxu0 0.0
    %2394 = vmatpush1.msra.mxu0 0.0
    %2395 = vmatprep.subr.mxu0 0.0
    %2396 = vmatpush1.msra.mxu0 0.0
    %2397 = vmatprep.subr.mxu0 0.0
    %2398 = vmatpush1.msra.mxu0 0.0
    %2399 = vmatprep.subr.mxu0 0.0
    %2400 = vmatpush1.msra.mxu0 0.0
    %2401 = vmatprep.subr.mxu0 0.0
    %2402 = vmatpush1.msra.mxu0 0.0
    %2403 = vmatprep.subr.mxu0 0.0
    %2404 = vmatpush1.msra.mxu0 0.0
    %2405 = vmatprep.subr.mxu0 0.0
    %2406 = vmatpush1.msra.mxu0 0.0
    %2407 = vmatprep.subr.mxu0 0.0
    %2408 = vmatpush1.msra.mxu0 0.0
    %2409 = vmatprep.subr.mxu0 0.0
    %2410 = vmatpush1.msra.mxu0 0.0
    %2411 = vmatprep.subr.mxu0 0.0
    %2412 = vmatpush1.msra.mxu0 0.0
    %2413 = vmatprep.subr.mxu0 0.0
    %2414 = vmatpush1.msra.mxu0 0.0
    %2415 = vmatprep.subr.mxu0 0.0
    %2416 = vmatpush1.msra.mxu0 0.0
    %2417 = vmatprep.subr.mxu0 0.0
    %2418 = vmatpush1.msra.mxu0 0.0
    %2419 = vmatprep.mubr.f32.mxu0 0.0
    %2420 = vmatmul.mubr.f32.gmra.mrb[0].mxu0 %v2353
    %v2421 = vpop.f32.mrb[0].mxu0
    %v2422 = vadd.f32 0.0, %v2421
    %v2423 = vpop.f32.mrb[0].mxu0
    %2424 = vdwg.mxu0
    %v2426 = vsel %vm2278, %v2272, 0
    %2428 = vmatprep.subr.mxu0 0.0
    %2429 = vmatpush1.msra.mxu0 %v1621
    %2430 = vmatprep.subr.mxu0 0.0
    %2431 = vmatpush1.msra.mxu0 0.0
    %2432 = vmatprep.subr.mxu0 0.0
    %2433 = vmatpush1.msra.mxu0 0.0
    %2434 = vmatprep.subr.mxu0 0.0
    %2435 = vmatpush1.msra.mxu0 0.0
    %2436 = vmatprep.subr.mxu0 0.0
    %2437 = vmatpush1.msra.mxu0 0.0
    %2438 = vmatprep.subr.mxu0 0.0
    %2439 = vmatpush1.msra.mxu0 0.0
    %2440 = vmatprep.subr.mxu0 0.0
    %2441 = vmatpush1.msra.mxu0 0.0
    %2442 = vmatprep.subr.mxu0 0.0
    %2443 = vmatpush1.msra.mxu0 0.0
    %2444 = vmatprep.subr.mxu0 0.0
    %2445 = vmatpush1.msra.mxu0 0.0
    %2446 = vmatprep.subr.mxu0 0.0
    %2447 = vmatpush1.msra.mxu0 0.0
    %2448 = vmatprep.subr.mxu0 0.0
    %2449 = vmatpush1.msra.mxu0 0.0
    %2450 = vmatprep.subr.mxu0 0.0
    %2451 = vmatpush1.msra.mxu0 0.0
    %2452 = vmatprep.subr.mxu0 0.0
    %2453 = vmatpush1.msra.mxu0 0.0
    %2454 = vmatprep.subr.mxu0 0.0
    %2455 = vmatpush1.msra.mxu0 0.0
    %2456 = vmatprep.subr.mxu0 0.0
    %2457 = vmatpush1.msra.mxu0 0.0
    %2458 = vmatprep.subr.mxu0 0.0
    %2459 = vmatpush1.msra.mxu0 0.0
    %2460 = vmatprep.subr.mxu0 0.0
    %2461 = vmatpush1.msra.mxu0 0.0
    %2462 = vmatprep.subr.mxu0 0.0
    %2463 = vmatpush1.msra.mxu0 0.0
    %2464 = vmatprep.subr.mxu0 0.0
    %2465 = vmatpush1.msra.mxu0 0.0
    %2466 = vmatprep.subr.mxu0 0.0
    %2467 = vmatpush1.msra.mxu0 0.0
    %2468 = vmatprep.subr.mxu0 0.0
    %2469 = vmatpush1.msra.mxu0 0.0
    %2470 = vmatprep.subr.mxu0 0.0
    %2471 = vmatpush1.msra.mxu0 0.0
    %2472 = vmatprep.subr.mxu0 0.0
    %2473 = vmatpush1.msra.mxu0 0.0
    %2474 = vmatprep.subr.mxu0 0.0
    %2475 = vmatpush1.msra.mxu0 0.0
    %2476 = vmatprep.subr.mxu0 0.0
    %2477 = vmatpush1.msra.mxu0 0.0
    %2478 = vmatprep.subr.mxu0 0.0
    %2479 = vmatpush1.msra.mxu0 0.0
    %2480 = vmatprep.subr.mxu0 0.0
    %2481 = vmatpush1.msra.mxu0 0.0
    %2482 = vmatprep.subr.mxu0 0.0
    %2483 = vmatpush1.msra.mxu0 0.0
    %2484 = vmatprep.subr.mxu0 0.0
    %2485 = vmatpush1.msra.mxu0 0.0
    %2486 = vmatprep.subr.mxu0 0.0
    %2487 = vmatpush1.msra.mxu0 0.0
    %2488 = vmatprep.subr.mxu0 0.0
    %2489 = vmatpush1.msra.mxu0 0.0
    %2490 = vmatprep.subr.mxu0 0.0
    %2491 = vmatpush1.msra.mxu0 0.0
    %2492 = vmatprep.mubr.f32.mxu0 0.0
    %2493 = vmatmul.mubr.f32.gmra.mrb[0].mxu0 %v2426
    %v2494 = vpop.f32.mrb[0].mxu0
    %v2495 = vadd.f32 0.0, %v2494
    %v2496 = vpop.f32.mrb[0].mxu0
    %2497 = vdwg.mxu0
    %v2499 = vsel %vm2278, %v2273, 0
    %2501 = vmatprep.subr.mxu0 0.0
    %2502 = vmatpush1.msra.mxu0 %v1621
    %2503 = vmatprep.subr.mxu0 0.0
    %2504 = vmatpush1.msra.mxu0 0.0
    %2505 = vmatprep.subr.mxu0 0.0
    %2506 = vmatpush1.msra.mxu0 0.0
    %2507 = vmatprep.subr.mxu0 0.0
    %2508 = vmatpush1.msra.mxu0 0.0
    %2509 = vmatprep.subr.mxu0 0.0
    %2510 = vmatpush1.msra.mxu0 0.0
    %2511 = vmatprep.subr.mxu0 0.0
    %2512 = vmatpush1.msra.mxu0 0.0
    %2513 = vmatprep.subr.mxu0 0.0
    %2514 = vmatpush1.msra.mxu0 0.0
    %2515 = vmatprep.subr.mxu0 0.0
    %2516 = vmatpush1.msra.mxu0 0.0
    %2517 = vmatprep.subr.mxu0 0.0
    %2518 = vmatpush1.msra.mxu0 0.0
    %2519 = vmatprep.subr.mxu0 0.0
    %2520 = vmatpush1.msra.mxu0 0.0
    %2521 = vmatprep.subr.mxu0 0.0
    %2522 = vmatpush1.msra.mxu0 0.0
    %2523 = vmatprep.subr.mxu0 0.0
    %2524 = vmatpush1.msra.mxu0 0.0
    %2525 = vmatprep.subr.mxu0 0.0
    %2526 = vmatpush1.msra.mxu0 0.0
    %2527 = vmatprep.subr.mxu0 0.0
    %2528 = vmatpush1.msra.mxu0 0.0
    %2529 = vmatprep.subr.mxu0 0.0
    %2530 = vmatpush1.msra.mxu0 0.0
    %2531 = vmatprep.subr.mxu0 0.0
    %2532 = vmatpush1.msra.mxu0 0.0
    %2533 = vmatprep.subr.mxu0 0.0
    %2534 = vmatpush1.msra.mxu0 0.0
    %2535 = vmatprep.subr.mxu0 0.0
    %2536 = vmatpush1.msra.mxu0 0.0
    %2537 = vmatprep.subr.mxu0 0.0
    %2538 = vmatpush1.msra.mxu0 0.0
    %2539 = vmatprep.subr.mxu0 0.0
    %2540 = vmatpush1.msra.mxu0 0.0
    %2541 = vmatprep.subr.mxu0 0.0
    %2542 = vmatpush1.msra.mxu0 0.0
    %2543 = vmatprep.subr.mxu0 0.0
    %2544 = vmatpush1.msra.mxu0 0.0
    %2545 = vmatprep.subr.mxu0 0.0
    %2546 = vmatpush1.msra.mxu0 0.0
    %2547 = vmatprep.subr.mxu0 0.0
    %2548 = vmatpush1.msra.mxu0 0.0
    %2549 = vmatprep.subr.mxu0 0.0
    %2550 = vmatpush1.msra.mxu0 0.0
    %2551 = vmatprep.subr.mxu0 0.0
    %2552 = vmatpush1.msra.mxu0 0.0
    %2553 = vmatprep.subr.mxu0 0.0
    %2554 = vmatpush1.msra.mxu0 0.0
    %2555 = vmatprep.subr.mxu0 0.0
    %2556 = vmatpush1.msra.mxu0 0.0
    %2557 = vmatprep.subr.mxu0 0.0
    %2558 = vmatpush1.msra.mxu0 0.0
    %2559 = vmatprep.subr.mxu0 0.0
    %2560 = vmatpush1.msra.mxu0 0.0
    %2561 = vmatprep.subr.mxu0 0.0
    %2562 = vmatpush1.msra.mxu0 0.0
    %2563 = vmatprep.subr.mxu0 0.0
    %2564 = vmatpush1.msra.mxu0 0.0
    %2565 = vmatprep.mubr.f32.mxu0 0.0
    %2566 = vmatmul.mubr.f32.gmra.mrb[0].mxu0 %v2499
    %v2567 = vpop.f32.mrb[0].mxu0
    %v2568 = vadd.f32 0.0, %v2567
    %v2569 = vpop.f32.mrb[0].mxu0
    %2570 = vdwg.mxu0
    %v2572 = vsel %vm2278, %v2274, 0
    %2574 = vmatprep.subr.mxu0 0.0
    %2575 = vmatpush1.msra.mxu0 %v1621
    %2576 = vmatprep.subr.mxu0 0.0
    %2577 = vmatpush1.msra.mxu0 0.0
    %2578 = vmatprep.subr.mxu0 0.0
    %2579 = vmatpush1.msra.mxu0 0.0
    %2580 = vmatprep.subr.mxu0 0.0
    %2581 = vmatpush1.msra.mxu0 0.0
    %2582 = vmatprep.subr.mxu0 0.0
    %2583 = vmatpush1.msra.mxu0 0.0
    %2584 = vmatprep.subr.mxu0 0.0
    %2585 = vmatpush1.msra.mxu0 0.0
    %2586 = vmatprep.subr.mxu0 0.0
    %2587 = vmatpush1.msra.mxu0 0.0
    %2588 = vmatprep.subr.mxu0 0.0
    %2589 = vmatpush1.msra.mxu0 0.0
    %2590 = vmatprep.subr.mxu0 0.0
    %2591 = vmatpush1.msra.mxu0 0.0
    %2592 = vmatprep.subr.mxu0 0.0
    %2593 = vmatpush1.msra.mxu0 0.0
    %2594 = vmatprep.subr.mxu0 0.0
    %2595 = vmatpush1.msra.mxu0 0.0
    %2596 = vmatprep.subr.mxu0 0.0
    %2597 = vmatpush1.msra.mxu0 0.0
    %2598 = vmatprep.subr.mxu0 0.0
    %2599 = vmatpush1.msra.mxu0 0.0
    %2600 = vmatprep.subr.mxu0 0.0
    %2601 = vmatpush1.msra.mxu0 0.0
    %2602 = vmatprep.subr.mxu0 0.0
    %2603 = vmatpush1.msra.mxu0 0.0
    %2604 = vmatprep.subr.mxu0 0.0
    %2605 = vmatpush1.msra.mxu0 0.0
    %2606 = vmatprep.subr.mxu0 0.0
    %2607 = vmatpush1.msra.mxu0 0.0
    %2608 = vmatprep.subr.mxu0 0.0
    %2609 = vmatpush1.msra.mxu0 0.0
    %2610 = vmatprep.subr.mxu0 0.0
    %2611 = vmatpush1.msra.mxu0 0.0
    %2612 = vmatprep.subr.mxu0 0.0
    %2613 = vmatpush1.msra.mxu0 0.0
    %2614 = vmatprep.subr.mxu0 0.0
    %2615 = vmatpush1.msra.mxu0 0.0
    %2616 = vmatprep.subr.mxu0 0.0
    %2617 = vmatpush1.msra.mxu0 0.0
    %2618 = vmatprep.subr.mxu0 0.0
    %2619 = vmatpush1.msra.mxu0 0.0
    %2620 = vmatprep.subr.mxu0 0.0
    %2621 = vmatpush1.msra.mxu0 0.0
    %2622 = vmatprep.subr.mxu0 0.0
    %2623 = vmatpush1.msra.mxu0 0.0
    %2624 = vmatprep.subr.mxu0 0.0
    %2625 = vmatpush1.msra.mxu0 0.0
    %2626 = vmatprep.subr.mxu0 0.0
    %2627 = vmatpush1.msra.mxu0 0.0
    %2628 = vmatprep.subr.mxu0 0.0
    %2629 = vmatpush1.msra.mxu0 0.0
    %2630 = vmatprep.subr.mxu0 0.0
    %2631 = vmatpush1.msra.mxu0 0.0
    %2632 = vmatprep.subr.mxu0 0.0
    %2633 = vmatpush1.msra.mxu0 0.0
    %2634 = vmatprep.subr.mxu0 0.0
    %2635 = vmatpush1.msra.mxu0 0.0
    %2636 = vmatprep.subr.mxu0 0.0
    %2637 = vmatpush1.msra.mxu0 0.0
    %2638 = vmatprep.mubr.f32.mxu0 0.0
    %2639 = vmatmul.mubr.f32.gmra.mrb[0].mxu0 %v2572
    %v2640 = vpop.f32.mrb[0].mxu0
    %v2641 = vadd.f32 0.0, %v2640
    %v2642 = vpop.f32.mrb[0].mxu0
    %2643 = vdwg.mxu0
    %v2645 = vsel %vm2278, %v2275, 0
    %2647 = vmatprep.subr.mxu0 0.0
    %2648 = vmatpush1.msra.mxu0 %v1621
    %2649 = vmatprep.subr.mxu0 0.0
    %2650 = vmatpush1.msra.mxu0 0.0
    %2651 = vmatprep.subr.mxu0 0.0
    %2652 = vmatpush1.msra.mxu0 0.0
    %2653 = vmatprep.subr.mxu0 0.0
    %2654 = vmatpush1.msra.mxu0 0.0
    %2655 = vmatprep.subr.mxu0 0.0
    %2656 = vmatpush1.msra.mxu0 0.0
    %2657 = vmatprep.subr.mxu0 0.0
    %2658 = vmatpush1.msra.mxu0 0.0
    %2659 = vmatprep.subr.mxu0 0.0
    %2660 = vmatpush1.msra.mxu0 0.0
    %2661 = vmatprep.subr.mxu0 0.0
    %2662 = vmatpush1.msra.mxu0 0.0
    %2663 = vmatprep.subr.mxu0 0.0
    %2664 = vmatpush1.msra.mxu0 0.0
    %2665 = vmatprep.subr.mxu0 0.0
    %2666 = vmatpush1.msra.mxu0 0.0
    %2667 = vmatprep.subr.mxu0 0.0
    %2668 = vmatpush1.msra.mxu0 0.0
    %2669 = vmatprep.subr.mxu0 0.0
    %2670 = vmatpush1.msra.mxu0 0.0
    %2671 = vmatprep.subr.mxu0 0.0
    %2672 = vmatpush1.msra.mxu0 0.0
    %2673 = vmatprep.subr.mxu0 0.0
    %2674 = vmatpush1.msra.mxu0 0.0
    %2675 = vmatprep.subr.mxu0 0.0
    %2676 = vmatpush1.msra.mxu0 0.0
    %2677 = vmatprep.subr.mxu0 0.0
    %2678 = vmatpush1.msra.mxu0 0.0
    %2679 = vmatprep.subr.mxu0 0.0
    %2680 = vmatpush1.msra.mxu0 0.0
    %2681 = vmatprep.subr.mxu0 0.0
    %2682 = vmatpush1.msra.mxu0 0.0
    %2683 = vmatprep.subr.mxu0 0.0
    %2684 = vmatpush1.msra.mxu0 0.0
    %2685 = vmatprep.subr.mxu0 0.0
    %2686 = vmatpush1.msra.mxu0 0.0
    %2687 = vmatprep.subr.mxu0 0.0
    %2688 = vmatpush1.msra.mxu0 0.0
    %2689 = vmatprep.subr.mxu0 0.0
    %2690 = vmatpush1.msra.mxu0 0.0
    %2691 = vmatprep.subr.mxu0 0.0
    %2692 = vmatpush1.msra.mxu0 0.0
    %2693 = vmatprep.subr.mxu0 0.0
    %2694 = vmatpush1.msra.mxu0 0.0
    %2695 = vmatprep.subr.mxu0 0.0
    %2696 = vmatpush1.msra.mxu0 0.0
    %2697 = vmatprep.subr.mxu0 0.0
    %2698 = vmatpush1.msra.mxu0 0.0
    %2699 = vmatprep.subr.mxu0 0.0
    %2700 = vmatpush1.msra.mxu0 0.0
    %2701 = vmatprep.subr.mxu0 0.0
    %2702 = vmatpush1.msra.mxu0 0.0
    %2703 = vmatprep.subr.mxu0 0.0
    %2704 = vmatpush1.msra.mxu0 0.0
    %2705 = vmatprep.subr.mxu0 0.0
    %2706 = vmatpush1.msra.mxu0 0.0
    %2707 = vmatprep.subr.mxu0 0.0
    %2708 = vmatpush1.msra.mxu0 0.0
    %2709 = vmatprep.subr.mxu0 0.0
    %2710 = vmatpush1.msra.mxu0 0.0
    %2711 = vmatprep.mubr.f32.mxu0 0.0
    %2712 = vmatmul.mubr.f32.gmra.mrb[0].mxu0 %v2645
    %v2713 = vpop.f32.mrb[0].mxu0
    %v2714 = vadd.f32 0.0, %v2713
    %v2715 = vpop.f32.mrb[0].mxu0
    %2716 = vdwg.mxu0
    %v2718 = vsel %vm2278, %v2276, 0
    %2720 = vmatprep.subr.mxu0 0.0
    %2721 = vmatpush1.msra.mxu0 %v1621
    %2722 = vmatprep.subr.mxu0 0.0
    %2723 = vmatpush1.msra.mxu0 0.0
    %2724 = vmatprep.subr.mxu0 0.0
    %2725 = vmatpush1.msra.mxu0 0.0
    %2726 = vmatprep.subr.mxu0 0.0
    %2727 = vmatpush1.msra.mxu0 0.0
    %2728 = vmatprep.subr.mxu0 0.0
    %2729 = vmatpush1.msra.mxu0 0.0
    %2730 = vmatprep.subr.mxu0 0.0
    %2731 = vmatpush1.msra.mxu0 0.0
    %2732 = vmatprep.subr.mxu0 0.0
    %2733 = vmatpush1.msra.mxu0 0.0
    %2734 = vmatprep.subr.mxu0 0.0
    %2735 = vmatpush1.msra.mxu0 0.0
    %2736 = vmatprep.subr.mxu0 0.0
    %2737 = vmatpush1.msra.mxu0 0.0
    %2738 = vmatprep.subr.mxu0 0.0
    %2739 = vmatpush1.msra.mxu0 0.0
    %2740 = vmatprep.subr.mxu0 0.0
    %2741 = vmatpush1.msra.mxu0 0.0
    %2742 = vmatprep.subr.mxu0 0.0
    %2743 = vmatpush1.msra.mxu0 0.0
    %2744 = vmatprep.subr.mxu0 0.0
    %2745 = vmatpush1.msra.mxu0 0.0
    %2746 = vmatprep.subr.mxu0 0.0
    %2747 = vmatpush1.msra.mxu0 0.0
    %2748 = vmatprep.subr.mxu0 0.0
    %2749 = vmatpush1.msra.mxu0 0.0
    %2750 = vmatprep.subr.mxu0 0.0
    %2751 = vmatpush1.msra.mxu0 0.0
    %2752 = vmatprep.subr.mxu0 0.0
    %2753 = vmatpush1.msra.mxu0 0.0
    %2754 = vmatprep.subr.mxu0 0.0
    %2755 = vmatpush1.msra.mxu0 0.0
    %2756 = vmatprep.subr.mxu0 0.0
    %2757 = vmatpush1.msra.mxu0 0.0
    %2758 = vmatprep.subr.mxu0 0.0
    %2759 = vmatpush1.msra.mxu0 0.0
    %2760 = vmatprep.subr.mxu0 0.0
    %2761 = vmatpush1.msra.mxu0 0.0
    %2762 = vmatprep.subr.mxu0 0.0
    %2763 = vmatpush1.msra.mxu0 0.0
    %2764 = vmatprep.subr.mxu0 0.0
    %2765 = vmatpush1.msra.mxu0 0.0
    %2766 = vmatprep.subr.mxu0 0.0
    %2767 = vmatpush1.msra.mxu0 0.0
    %2768 = vmatprep.subr.mxu0 0.0
    %2769 = vmatpush1.msra.mxu0 0.0
    %2770 = vmatprep.subr.mxu0 0.0
    %2771 = vmatpush1.msra.mxu0 0.0
    %2772 = vmatprep.subr.mxu0 0.0
    %2773 = vmatpush1.msra.mxu0 0.0
    %2774 = vmatprep.subr.mxu0 0.0
    %2775 = vmatpush1.msra.mxu0 0.0
    %2776 = vmatprep.subr.mxu0 0.0
    %2777 = vmatpush1.msra.mxu0 0.0
    %2778 = vmatprep.subr.mxu0 0.0
    %2779 = vmatpush1.msra.mxu0 0.0
    %2780 = vmatprep.subr.mxu0 0.0
    %2781 = vmatpush1.msra.mxu0 0.0
    %2782 = vmatprep.subr.mxu0 0.0
    %2783 = vmatpush1.msra.mxu0 0.0
    %2784 = vmatprep.mubr.f32.mxu0 0.0
    %2785 = vmatmul.mubr.f32.gmra.mrb[0].mxu0 %v2718
    %v2786 = vpop.f32.mrb[0].mxu0
    %v2787 = vadd.f32 0.0, %v2786
    %v2788 = vpop.f32.mrb[0].mxu0
    %2789 = vdwg.mxu0
    %v2791 = vsel %vm2278, %v2277, 0
    %2793 = vmatprep.subr.mxu0 0.0
    %2794 = vmatpush1.msra.mxu0 %v1621
    %2795 = vmatprep.subr.mxu0 0.0
    %2796 = vmatpush1.msra.mxu0 0.0
    %2797 = vmatprep.subr.mxu0 0.0
    %2798 = vmatpush1.msra.mxu0 0.0
    %2799 = vmatprep.subr.mxu0 0.0
    %2800 = vmatpush1.msra.mxu0 0.0
    %2801 = vmatprep.subr.mxu0 0.0
    %2802 = vmatpush1.msra.mxu0 0.0
    %2803 = vmatprep.subr.mxu0 0.0
    %2804 = vmatpush1.msra.mxu0 0.0
    %2805 = vmatprep.subr.mxu0 0.0
    %2806 = vmatpush1.msra.mxu0 0.0
    %2807 = vmatprep.subr.mxu0 0.0
    %2808 = vmatpush1.msra.mxu0 0.0
    %2809 = vmatprep.subr.mxu0 0.0
    %2810 = vmatpush1.msra.mxu0 0.0
    %2811 = vmatprep.subr.mxu0 0.0
    %2812 = vmatpush1.msra.mxu0 0.0
    %2813 = vmatprep.subr.mxu0 0.0
    %2814 = vmatpush1.msra.mxu0 0.0
    %2815 = vmatprep.subr.mxu0 0.0
    %2816 = vmatpush1.msra.mxu0 0.0
    %2817 = vmatprep.subr.mxu0 0.0
    %2818 = vmatpush1.msra.mxu0 0.0
    %2819 = vmatprep.subr.mxu0 0.0
    %2820 = vmatpush1.msra.mxu0 0.0
    %2821 = vmatprep.subr.mxu0 0.0
    %2822 = vmatpush1.msra.mxu0 0.0
    %2823 = vmatprep.subr.mxu0 0.0
    %2824 = vmatpush1.msra.mxu0 0.0
    %2825 = vmatprep.subr.mxu0 0.0
    %2826 = vmatpush1.msra.mxu0 0.0
    %2827 = vmatprep.subr.mxu0 0.0
    %2828 = vmatpush1.msra.mxu0 0.0
    %2829 = vmatprep.subr.mxu0 0.0
    %2830 = vmatpush1.msra.mxu0 0.0
    %2831 = vmatprep.subr.mxu0 0.0
    %2832 = vmatpush1.msra.mxu0 0.0
    %2833 = vmatprep.subr.mxu0 0.0
    %2834 = vmatpush1.msra.mxu0 0.0
    %2835 = vmatprep.subr.mxu0 0.0
    %2836 = vmatpush1.msra.mxu0 0.0
    %2837 = vmatprep.subr.mxu0 0.0
    %2838 = vmatpush1.msra.mxu0 0.0
    %2839 = vmatprep.subr.mxu0 0.0
    %2840 = vmatpush1.msra.mxu0 0.0
    %2841 = vmatprep.subr.mxu0 0.0
    %2842 = vmatpush1.msra.mxu0 0.0
    %2843 = vmatprep.subr.mxu0 0.0
    %2844 = vmatpush1.msra.mxu0 0.0
    %2845 = vmatprep.subr.mxu0 0.0
    %2846 = vmatpush1.msra.mxu0 0.0
    %2847 = vmatprep.subr.mxu0 0.0
    %2848 = vmatpush1.msra.mxu0 0.0
    %2849 = vmatprep.subr.mxu0 0.0
    %2850 = vmatpush1.msra.mxu0 0.0
    %2851 = vmatprep.subr.mxu0 0.0
    %2852 = vmatpush1.msra.mxu0 0.0
    %2853 = vmatprep.subr.mxu0 0.0
    %2854 = vmatpush1.msra.mxu0 0.0
    %2855 = vmatprep.subr.mxu0 0.0
    %2856 = vmatpush1.msra.mxu0 0.0
    %2857 = vmatprep.mubr.f32.mxu0 0.0
    %2858 = vmatmul.mubr.f32.gmra.mrb[0].mxu0 %v2791
    %v2859 = vpop.f32.mrb[0].mxu0
    %v2860 = vadd.f32 0.0, %v2859
    %v2861 = vpop.f32.mrb[0].mxu0
    %2862 = vdwg.mxu0
    %v2863 = vmul.f32 %v2349, %v1091
    %v2864 = vmul.f32 %v2422, %v1161
    %v2865 = vmul.f32 %v2495, %v1231
    %v2866 = vmul.f32 %v2568, %v1301
    %v2867 = vmul.f32 %v2641, %v1371
    %v2868 = vmul.f32 %v2714, %v1441
    %v2869 = vmul.f32 %v2787, %v1511
    %v2870 = vmul.f32 %v2860, %v1581
    %vm2871 = vcmask 257024
    %v2872 = vsel %vm2871, %v2863, 0.0
    %v2873 = vsel %vm2871, %v2864, 0.0
    %v2874 = vadd.f32 %v2872, %v2873
    %v2875 = vsel %vm2871, %v2865, 0.0
    %v2876 = vadd.f32 %v2874, %v2875
    %v2877 = vsel %vm2871, %v2866, 0.0
    %v2878 = vadd.f32 %v2876, %v2877
    %v2879 = vsel %vm2871, %v2867, 0.0
    %v2880 = vadd.f32 %v2878, %v2879
    %v2881 = vsel %vm2871, %v2868, 0.0
    %v2882 = vadd.f32 %v2880, %v2881
    %v2883 = vsel %vm2871, %v2869, 0.0
    %v2884 = vadd.f32 %v2882, %v2883
    %v2885 = vsel %vm2871, %v2870, 0.0
    %v2886 = vadd.f32 %v2884, %v2885
    %v2887 = vld [vmem:[#allocation19] sm:$0xff]
    %v2888 = vld [vmem:[#allocation19 + $0x8] sm:$0xff]
    %v2889 = vld [vmem:[#allocation19 + $0x10] sm:$0xff]
    %v2890 = vld [vmem:[#allocation19 + $0x18] sm:$0xff]
    %v2891 = vld [vmem:[#allocation20] sm:$0x1]
    %v2893 = vlaneseq
    %v2894 = vshrl.u32 %v2893, 7
    %v2895 = vsub.s32 0, %v2894
    %v2896 = vrot.slane %v2891, %v2895
    %v2899 = vsel %vm343, %v2886, 0
    %2901 = vmatprep.subr.mxu0 0.0
    %2902 = vmatpush1.msra.mxu0 %v2887
    %2903 = vmatprep.subr.mxu0 0.0
    %2904 = vmatpush1.msra.mxu0 %v2888
    %2905 = vmatprep.subr.mxu0 0.0
    %2906 = vmatpush1.msra.mxu0 %v2889
    %2907 = vmatprep.subr.mxu0 0.0
    %2908 = vmatpush1.msra.mxu0 %v2890
    %2909 = vmatprep.subr.mxu0 0.0
    %2910 = vmatpush1.msra.mxu0 0.0
    %2911 = vmatprep.subr.mxu0 0.0
    %2912 = vmatpush1.msra.mxu0 0.0
    %2913 = vmatprep.subr.mxu0 0.0
    %2914 = vmatpush1.msra.mxu0 0.0
    %2915 = vmatprep.subr.mxu0 0.0
    %2916 = vmatpush1.msra.mxu0 0.0
    %2917 = vmatprep.subr.mxu0 0.0
    %2918 = vmatpush1.msra.mxu0 0.0
    %2919 = vmatprep.subr.mxu0 0.0
    %2920 = vmatpush1.msra.mxu0 0.0
    %2921 = vmatprep.subr.mxu0 0.0
    %2922 = vmatpush1.msra.mxu0 0.0
    %2923 = vmatprep.subr.mxu0 0.0
    %2924 = vmatpush1.msra.mxu0 0.0
    %2925 = vmatprep.subr.mxu0 0.0
    %2926 = vmatpush1.msra.mxu0 0.0
    %2927 = vmatprep.subr.mxu0 0.0
    %2928 = vmatpush1.msra.mxu0 0.0
    %2929 = vmatprep.subr.mxu0 0.0
    %2930 = vmatpush1.msra.mxu0 0.0
    %2931 = vmatprep.subr.mxu0 0.0
    %2932 = vmatpush1.msra.mxu0 0.0
    %2933 = vmatprep.subr.mxu0 0.0
    %2934 = vmatpush1.msra.mxu0 0.0
    %2935 = vmatprep.subr.mxu0 0.0
    %2936 = vmatpush1.msra.mxu0 0.0
    %2937 = vmatprep.subr.mxu0 0.0
    %2938 = vmatpush1.msra.mxu0 0.0
    %2939 = vmatprep.subr.mxu0 0.0
    %2940 = vmatpush1.msra.mxu0 0.0
    %2941 = vmatprep.subr.mxu0 0.0
    %2942 = vmatpush1.msra.mxu0 0.0
    %2943 = vmatprep.subr.mxu0 0.0
    %2944 = vmatpush1.msra.mxu0 0.0
    %2945 = vmatprep.subr.mxu0 0.0
    %2946 = vmatpush1.msra.mxu0 0.0
    %2947 = vmatprep.subr.mxu0 0.0
    %2948 = vmatpush1.msra.mxu0 0.0
    %2949 = vmatprep.subr.mxu0 0.0
    %2950 = vmatpush1.msra.mxu0 0.0
    %2951 = vmatprep.subr.mxu0 0.0
    %2952 = vmatpush1.msra.mxu0 0.0
    %2953 = vmatprep.subr.mxu0 0.0
    %2954 = vmatpush1.msra.mxu0 0.0
    %2955 = vmatprep.subr.mxu0 0.0
    %2956 = vmatpush1.msra.mxu0 0.0
    %2957 = vmatprep.subr.mxu0 0.0
    %2958 = vmatpush1.msra.mxu0 0.0
    %2959 = vmatprep.subr.mxu0 0.0
    %2960 = vmatpush1.msra.mxu0 0.0
    %2961 = vmatprep.subr.mxu0 0.0
    %2962 = vmatpush1.msra.mxu0 0.0
    %2963 = vmatprep.subr.mxu0 0.0
    %2964 = vmatpush1.msra.mxu0 0.0
    %2965 = vmatprep.mubr.f32.mxu0 0.0
    %2966 = vmatmul.mubr.f32.gmra.mrb[0].mxu0 %v2899
    %v2967 = vpop.f32.mrb[0].mxu0
    %v2968 = vadd.f32 %v2896, %v2967
    %v2969 = vpop.f32.mrb[0].mxu0
    %2970 = vdwg.mxu0
    %v2971 = vld [vmem:[#allocation2] sm:$0xf]
    %v2972 = vld [vmem:[#allocation8] sm:$0xf]
    %v2973 = vld [vmem:[#allocation10] sm:$0xf]
    %v2974 = vld [vmem:[#allocation22] sm:$0xff]
    %v2975 = vld [vmem:[#allocation22 + $0x8] sm:$0xff]
    %v2976 = vld [vmem:[#allocation22 + $0x10] sm:$0xff]
    %v2977 = vld [vmem:[#allocation22 + $0x18] sm:$0xff]
    %v2978 = vld [vmem:[#allocation23] sm:$0xff]
    %v2979 = vld [vmem:[#allocation23 + $0x8] sm:$0xff]
    %v2980 = vld [vmem:[#allocation23 + $0x10] sm:$0xff]
    %v2981 = vld [vmem:[#allocation23 + $0x18] sm:$0xff]
    %v2983 = vsel %vm343, %v2968, 0
    %2985 = vmatprep.subr.mxu0 0.0
    %2986 = vmatpush1.msra.mxu0 %v2978
    %2987 = vmatprep.subr.mxu0 0.0
    %2988 = vmatpush1.msra.mxu0 %v2979
    %2989 = vmatprep.subr.mxu0 0.0
    %2990 = vmatpush1.msra.mxu0 %v2980
    %2991 = vmatprep.subr.mxu0 0.0
    %2992 = vmatpush1.msra.mxu0 %v2981
    %2993 = vmatprep.subr.mxu0 0.0
    %2994 = vmatpush1.msra.mxu0 0.0
    %2995 = vmatprep.subr.mxu0 0.0
    %2996 = vmatpush1.msra.mxu0 0.0
    %2997 = vmatprep.subr.mxu0 0.0
    %2998 = vmatpush1.msra.mxu0 0.0
    %2999 = vmatprep.subr.mxu0 0.0
    %3000 = vmatpush1.msra.mxu0 0.0
    %3001 = vmatprep.subr.mxu0 0.0
    %3002 = vmatpush1.msra.mxu0 0.0
    %3003 = vmatprep.subr.mxu0 0.0
    %3004 = vmatpush1.msra.mxu0 0.0
    %3005 = vmatprep.subr.mxu0 0.0
    %3006 = vmatpush1.msra.mxu0 0.0
    %3007 = vmatprep.subr.mxu0 0.0
    %3008 = vmatpush1.msra.mxu0 0.0
    %3009 = vmatprep.subr.mxu0 0.0
    %3010 = vmatpush1.msra.mxu0 0.0
    %3011 = vmatprep.subr.mxu0 0.0
    %3012 = vmatpush1.msra.mxu0 0.0
    %3013 = vmatprep.subr.mxu0 0.0
    %3014 = vmatpush1.msra.mxu0 0.0
    %3015 = vmatprep.subr.mxu0 0.0
    %3016 = vmatpush1.msra.mxu0 0.0
    %3017 = vmatprep.subr.mxu0 0.0
    %3018 = vmatpush1.msra.mxu0 0.0
    %3019 = vmatprep.subr.mxu0 0.0
    %3020 = vmatpush1.msra.mxu0 0.0
    %3021 = vmatprep.subr.mxu0 0.0
    %3022 = vmatpush1.msra.mxu0 0.0
    %3023 = vmatprep.subr.mxu0 0.0
    %3024 = vmatpush1.msra.mxu0 0.0
    %3025 = vmatprep.subr.mxu0 0.0
    %3026 = vmatpush1.msra.mxu0 0.0
    %3027 = vmatprep.subr.mxu0 0.0
    %3028 = vmatpush1.msra.mxu0 0.0
    %3029 = vmatprep.subr.mxu0 0.0
    %3030 = vmatpush1.msra.mxu0 0.0
    %3031 = vmatprep.subr.mxu0 0.0
    %3032 = vmatpush1.msra.mxu0 0.0
    %3033 = vmatprep.subr.mxu0 0.0
    %3034 = vmatpush1.msra.mxu0 0.0
    %3035 = vmatprep.subr.mxu0 0.0
    %3036 = vmatpush1.msra.mxu0 0.0
    %3037 = vmatprep.subr.mxu0 0.0
    %3038 = vmatpush1.msra.mxu0 0.0
    %3039 = vmatprep.subr.mxu0 0.0
    %3040 = vmatpush1.msra.mxu0 0.0
    %3041 = vmatprep.subr.mxu0 0.0
    %3042 = vmatpush1.msra.mxu0 0.0
    %3043 = vmatprep.subr.mxu0 0.0
    %3044 = vmatpush1.msra.mxu0 0.0
    %3045 = vmatprep.subr.mxu0 0.0
    %3046 = vmatpush1.msra.mxu0 0.0
    %3047 = vmatprep.subr.mxu0 0.0
    %3048 = vmatpush1.msra.mxu0 0.0
    %3049 = vmatprep.mubr.f32.mxu0 0.0
    %3050 = vmatmul.mubr.f32.gmra.mrb[0].mxu0 %v2983
    %v3051 = vpop.f32.mrb[0].mxu0
    %v3052 = vadd.f32 0.0, %v3051
    %v3053 = vpop.f32.mrb[0].mxu0
    %3054 = vdwg.mxu0
    %v3056 = vsel %vm343, %v2971, 0
    %3058 = vmatprep.subr.mxu0 0.0
    %3059 = vmatpush1.msra.mxu0 %v2974
    %3060 = vmatprep.subr.mxu0 0.0
    %3061 = vmatpush1.msra.mxu0 %v2975
    %3062 = vmatprep.subr.mxu0 0.0
    %3063 = vmatpush1.msra.mxu0 %v2976
    %3064 = vmatprep.subr.mxu0 0.0
    %3065 = vmatpush1.msra.mxu0 %v2977
    %3066 = vmatprep.subr.mxu0 0.0
    %3067 = vmatpush1.msra.mxu0 0.0
    %3068 = vmatprep.subr.mxu0 0.0
    %3069 = vmatpush1.msra.mxu0 0.0
    %3070 = vmatprep.subr.mxu0 0.0
    %3071 = vmatpush1.msra.mxu0 0.0
    %3072 = vmatprep.subr.mxu0 0.0
    %3073 = vmatpush1.msra.mxu0 0.0
    %3074 = vmatprep.subr.mxu0 0.0
    %3075 = vmatpush1.msra.mxu0 0.0
    %3076 = vmatprep.subr.mxu0 0.0
    %3077 = vmatpush1.msra.mxu0 0.0
    %3078 = vmatprep.subr.mxu0 0.0
    %3079 = vmatpush1.msra.mxu0 0.0
    %3080 = vmatprep.subr.mxu0 0.0
    %3081 = vmatpush1.msra.mxu0 0.0
    %3082 = vmatprep.subr.mxu0 0.0
    %3083 = vmatpush1.msra.mxu0 0.0
    %3084 = vmatprep.subr.mxu0 0.0
    %3085 = vmatpush1.msra.mxu0 0.0
    %3086 = vmatprep.subr.mxu0 0.0
    %3087 = vmatpush1.msra.mxu0 0.0
    %3088 = vmatprep.subr.mxu0 0.0
    %3089 = vmatpush1.msra.mxu0 0.0
    %3090 = vmatprep.subr.mxu0 0.0
    %3091 = vmatpush1.msra.mxu0 0.0
    %3092 = vmatprep.subr.mxu0 0.0
    %3093 = vmatpush1.msra.mxu0 0.0
    %3094 = vmatprep.subr.mxu0 0.0
    %3095 = vmatpush1.msra.mxu0 0.0
    %3096 = vmatprep.subr.mxu0 0.0
    %3097 = vmatpush1.msra.mxu0 0.0
    %3098 = vmatprep.subr.mxu0 0.0
    %3099 = vmatpush1.msra.mxu0 0.0
    %3100 = vmatprep.subr.mxu0 0.0
    %3101 = vmatpush1.msra.mxu0 0.0
    %3102 = vmatprep.subr.mxu0 0.0
    %3103 = vmatpush1.msra.mxu0 0.0
    %3104 = vmatprep.subr.mxu0 0.0
    %3105 = vmatpush1.msra.mxu0 0.0
    %3106 = vmatprep.subr.mxu0 0.0
    %3107 = vmatpush1.msra.mxu0 0.0
    %3108 = vmatprep.subr.mxu0 0.0
    %3109 = vmatpush1.msra.mxu0 0.0
    %3110 = vmatprep.subr.mxu0 0.0
    %3111 = vmatpush1.msra.mxu0 0.0
    %3112 = vmatprep.subr.mxu0 0.0
    %3113 = vmatpush1.msra.mxu0 0.0
    %3114 = vmatprep.subr.mxu0 0.0
    %3115 = vmatpush1.msra.mxu0 0.0
    %3116 = vmatprep.subr.mxu0 0.0
    %3117 = vmatpush1.msra.mxu0 0.0
    %3118 = vmatprep.subr.mxu0 0.0
    %3119 = vmatpush1.msra.mxu0 0.0
    %3120 = vmatprep.subr.mxu0 0.0
    %3121 = vmatpush1.msra.mxu0 0.0
    %3122 = vmatprep.mubr.f32.mxu0 0.0
    %3123 = vmatmul.mubr.f32.gmra.mrb[0].mxu0 %v3056
    %v3124 = vpop.f32.mrb[0].mxu0
    %v3125 = vadd.f32 %v3052, %v3124
    %v3126 = vpop.f32.mrb[0].mxu0
    %3127 = vdwg.mxu0
    %v3128 = vld [vmem:[#allocation25] sm:$0x1]
    %v3130 = vlaneseq
    %v3131 = vshrl.u32 %v3130, 7
    %v3132 = vsub.s32 0, %v3131
    %v3133 = vrot.slane %v3128, %v3132
    %v3135 = vadd.f32 %v3125, %v3133
    %s3136 = scalar_lea.vmem [#allocation22], 32
    %v3137 = vld [vmem:[%s3136] sm:$0xff]
    %v3138 = vld [vmem:[%s3136 + $0x8] sm:$0xff]
    %v3139 = vld [vmem:[%s3136 + $0x10] sm:$0xff]
    %v3140 = vld [vmem:[%s3136 + $0x18] sm:$0xff]
    %s3141 = scalar_lea.vmem [#allocation23], 32
    %v3142 = vld [vmem:[%s3141] sm:$0xff]
    %v3143 = vld [vmem:[%s3141 + $0x8] sm:$0xff]
    %v3144 = vld [vmem:[%s3141 + $0x10] sm:$0xff]
    %v3145 = vld [vmem:[%s3141 + $0x18] sm:$0xff]
    %3146 = vmatprep.subr.mxu0 0.0
    %3147 = vmatpush1.msra.mxu0 %v3142
    %3148 = vmatprep.subr.mxu0 0.0
    %3149 = vmatpush1.msra.mxu0 %v3143
    %3150 = vmatprep.subr.mxu0 0.0
    %3151 = vmatpush1.msra.mxu0 %v3144
    %3152 = vmatprep.subr.mxu0 0.0
    %3153 = vmatpush1.msra.mxu0 %v3145
    %3154 = vmatprep.subr.mxu0 0.0
    %3155 = vmatpush1.msra.mxu0 0.0
    %3156 = vmatprep.subr.mxu0 0.0
    %3157 = vmatpush1.msra.mxu0 0.0
    %3158 = vmatprep.subr.mxu0 0.0
    %3159 = vmatpush1.msra.mxu0 0.0
    %3160 = vmatprep.subr.mxu0 0.0
    %3161 = vmatpush1.msra.mxu0 0.0
    %3162 = vmatprep.subr.mxu0 0.0
    %3163 = vmatpush1.msra.mxu0 0.0
    %3164 = vmatprep.subr.mxu0 0.0
    %3165 = vmatpush1.msra.mxu0 0.0
    %3166 = vmatprep.subr.mxu0 0.0
    %3167 = vmatpush1.msra.mxu0 0.0
    %3168 = vmatprep.subr.mxu0 0.0
    %3169 = vmatpush1.msra.mxu0 0.0
    %3170 = vmatprep.subr.mxu0 0.0
    %3171 = vmatpush1.msra.mxu0 0.0
    %3172 = vmatprep.subr.mxu0 0.0
    %3173 = vmatpush1.msra.mxu0 0.0
    %3174 = vmatprep.subr.mxu0 0.0
    %3175 = vmatpush1.msra.mxu0 0.0
    %3176 = vmatprep.subr.mxu0 0.0
    %3177 = vmatpush1.msra.mxu0 0.0
    %3178 = vmatprep.subr.mxu0 0.0
    %3179 = vmatpush1.msra.mxu0 0.0
    %3180 = vmatprep.subr.mxu0 0.0
    %3181 = vmatpush1.msra.mxu0 0.0
    %3182 = vmatprep.subr.mxu0 0.0
    %3183 = vmatpush1.msra.mxu0 0.0
    %3184 = vmatprep.subr.mxu0 0.0
    %3185 = vmatpush1.msra.mxu0 0.0
    %3186 = vmatprep.subr.mxu0 0.0
    %3187 = vmatpush1.msra.mxu0 0.0
    %3188 = vmatprep.subr.mxu0 0.0
    %3189 = vmatpush1.msra.mxu0 0.0
    %3190 = vmatprep.subr.mxu0 0.0
    %3191 = vmatpush1.msra.mxu0 0.0
    %3192 = vmatprep.subr.mxu0 0.0
    %3193 = vmatpush1.msra.mxu0 0.0
    %3194 = vmatprep.subr.mxu0 0.0
    %3195 = vmatpush1.msra.mxu0 0.0
    %3196 = vmatprep.subr.mxu0 0.0
    %3197 = vmatpush1.msra.mxu0 0.0
    %3198 = vmatprep.subr.mxu0 0.0
    %3199 = vmatpush1.msra.mxu0 0.0
    %3200 = vmatprep.subr.mxu0 0.0
    %3201 = vmatpush1.msra.mxu0 0.0
    %3202 = vmatprep.subr.mxu0 0.0
    %3203 = vmatpush1.msra.mxu0 0.0
    %3204 = vmatprep.subr.mxu0 0.0
    %3205 = vmatpush1.msra.mxu0 0.0
    %3206 = vmatprep.subr.mxu0 0.0
    %3207 = vmatpush1.msra.mxu0 0.0
    %3208 = vmatprep.subr.mxu0 0.0
    %3209 = vmatpush1.msra.mxu0 0.0
    %3210 = vmatprep.mubr.f32.mxu0 0.0
    %3211 = vmatmul.mubr.f32.gmra.mrb[0].mxu0 %v2983
    %v3212 = vpop.f32.mrb[0].mxu0
    %v3213 = vadd.f32 0.0, %v3212
    %v3214 = vpop.f32.mrb[0].mxu0
    %3215 = vdwg.mxu0
    %3216 = vmatprep.subr.mxu0 0.0
    %3217 = vmatpush1.msra.mxu0 %v3137
    %3218 = vmatprep.subr.mxu0 0.0
    %3219 = vmatpush1.msra.mxu0 %v3138
    %3220 = vmatprep.subr.mxu0 0.0
    %3221 = vmatpush1.msra.mxu0 %v3139
    %3222 = vmatprep.subr.mxu0 0.0
    %3223 = vmatpush1.msra.mxu0 %v3140
    %3224 = vmatprep.subr.mxu0 0.0
    %3225 = vmatpush1.msra.mxu0 0.0
    %3226 = vmatprep.subr.mxu0 0.0
    %3227 = vmatpush1.msra.mxu0 0.0
    %3228 = vmatprep.subr.mxu0 0.0
    %3229 = vmatpush1.msra.mxu0 0.0
    %3230 = vmatprep.subr.mxu0 0.0
    %3231 = vmatpush1.msra.mxu0 0.0
    %3232 = vmatprep.subr.mxu0 0.0
    %3233 = vmatpush1.msra.mxu0 0.0
    %3234 = vmatprep.subr.mxu0 0.0
    %3235 = vmatpush1.msra.mxu0 0.0
    %3236 = vmatprep.subr.mxu0 0.0
    %3237 = vmatpush1.msra.mxu0 0.0
    %3238 = vmatprep.subr.mxu0 0.0
    %3239 = vmatpush1.msra.mxu0 0.0
    %3240 = vmatprep.subr.mxu0 0.0
    %3241 = vmatpush1.msra.mxu0 0.0
    %3242 = vmatprep.subr.mxu0 0.0
    %3243 = vmatpush1.msra.mxu0 0.0
    %3244 = vmatprep.subr.mxu0 0.0
    %3245 = vmatpush1.msra.mxu0 0.0
    %3246 = vmatprep.subr.mxu0 0.0
    %3247 = vmatpush1.msra.mxu0 0.0
    %3248 = vmatprep.subr.mxu0 0.0
    %3249 = vmatpush1.msra.mxu0 0.0
    %3250 = vmatprep.subr.mxu0 0.0
    %3251 = vmatpush1.msra.mxu0 0.0
    %3252 = vmatprep.subr.mxu0 0.0
    %3253 = vmatpush1.msra.mxu0 0.0
    %3254 = vmatprep.subr.mxu0 0.0
    %3255 = vmatpush1.msra.mxu0 0.0
    %3256 = vmatprep.subr.mxu0 0.0
    %3257 = vmatpush1.msra.mxu0 0.0
    %3258 = vmatprep.subr.mxu0 0.0
    %3259 = vmatpush1.msra.mxu0 0.0
    %3260 = vmatprep.subr.mxu0 0.0
    %3261 = vmatpush1.msra.mxu0 0.0
    %3262 = vmatprep.subr.mxu0 0.0
    %3263 = vmatpush1.msra.mxu0 0.0
    %3264 = vmatprep.subr.mxu0 0.0
    %3265 = vmatpush1.msra.mxu0 0.0
    %3266 = vmatprep.subr.mxu0 0.0
    %3267 = vmatpush1.msra.mxu0 0.0
    %3268 = vmatprep.subr.mxu0 0.0
    %3269 = vmatpush1.msra.mxu0 0.0
    %3270 = vmatprep.subr.mxu0 0.0
    %3271 = vmatpush1.msra.mxu0 0.0
    %3272 = vmatprep.subr.mxu0 0.0
    %3273 = vmatpush1.msra.mxu0 0.0
    %3274 = vmatprep.subr.mxu0 0.0
    %3275 = vmatpush1.msra.mxu0 0.0
    %3276 = vmatprep.subr.mxu0 0.0
    %3277 = vmatpush1.msra.mxu0 0.0
    %3278 = vmatprep.subr.mxu0 0.0
    %3279 = vmatpush1.msra.mxu0 0.0
    %3280 = vmatprep.mubr.f32.mxu0 0.0
    %3281 = vmatmul.mubr.f32.gmra.mrb[0].mxu0 %v3056
    %v3282 = vpop.f32.mrb[0].mxu0
    %v3283 = vadd.f32 %v3213, %v3282
    %v3284 = vpop.f32.mrb[0].mxu0
    %3285 = vdwg.mxu0
    %s3286 = scalar_lea.vmem [#allocation25], 1
    %v3287 = vld [vmem:[%s3286] sm:$0x1]
    %v3289 = vlaneseq
    %v3290 = vshrl.u32 %v3289, 7
    %v3291 = vsub.s32 0, %v3290
    %v3292 = vrot.slane %v3287, %v3291
    %v3294 = vadd.f32 %v3283, %v3292
    %s3295 = scalar_lea.vmem [#allocation22], 64
    %v3296 = vld [vmem:[%s3295] sm:$0xff]
    %v3297 = vld [vmem:[%s3295 + $0x8] sm:$0xff]
    %v3298 = vld [vmem:[%s3295 + $0x10] sm:$0xff]
    %v3299 = vld [vmem:[%s3295 + $0x18] sm:$0xff]
    %s3300 = scalar_lea.vmem [#allocation23], 64
    %v3301 = vld [vmem:[%s3300] sm:$0xff]
    %v3302 = vld [vmem:[%s3300 + $0x8] sm:$0xff]
    %v3303 = vld [vmem:[%s3300 + $0x10] sm:$0xff]
    %v3304 = vld [vmem:[%s3300 + $0x18] sm:$0xff]
    %3305 = vmatprep.subr.mxu0 0.0
    %3306 = vmatpush1.msra.mxu0 %v3301
    %3307 = vmatprep.subr.mxu0 0.0
    %3308 = vmatpush1.msra.mxu0 %v3302
    %3309 = vmatprep.subr.mxu0 0.0
    %3310 = vmatpush1.msra.mxu0 %v3303
    %3311 = vmatprep.subr.mxu0 0.0
    %3312 = vmatpush1.msra.mxu0 %v3304
    %3313 = vmatprep.subr.mxu0 0.0
    %3314 = vmatpush1.msra.mxu0 0.0
    %3315 = vmatprep.subr.mxu0 0.0
    %3316 = vmatpush1.msra.mxu0 0.0
    %3317 = vmatprep.subr.mxu0 0.0
    %3318 = vmatpush1.msra.mxu0 0.0
    %3319 = vmatprep.subr.mxu0 0.0
    %3320 = vmatpush1.msra.mxu0 0.0
    %3321 = vmatprep.subr.mxu0 0.0
    %3322 = vmatpush1.msra.mxu0 0.0
    %3323 = vmatprep.subr.mxu0 0.0
    %3324 = vmatpush1.msra.mxu0 0.0
    %3325 = vmatprep.subr.mxu0 0.0
    %3326 = vmatpush1.msra.mxu0 0.0
    %3327 = vmatprep.subr.mxu0 0.0
    %3328 = vmatpush1.msra.mxu0 0.0
    %3329 = vmatprep.subr.mxu0 0.0
    %3330 = vmatpush1.msra.mxu0 0.0
    %3331 = vmatprep.subr.mxu0 0.0
    %3332 = vmatpush1.msra.mxu0 0.0
    %3333 = vmatprep.subr.mxu0 0.0
    %3334 = vmatpush1.msra.mxu0 0.0
    %3335 = vmatprep.subr.mxu0 0.0
    %3336 = vmatpush1.msra.mxu0 0.0
    %3337 = vmatprep.subr.mxu0 0.0
    %3338 = vmatpush1.msra.mxu0 0.0
    %3339 = vmatprep.subr.mxu0 0.0
    %3340 = vmatpush1.msra.mxu0 0.0
    %3341 = vmatprep.subr.mxu0 0.0
    %3342 = vmatpush1.msra.mxu0 0.0
    %3343 = vmatprep.subr.mxu0 0.0
    %3344 = vmatpush1.msra.mxu0 0.0
    %3345 = vmatprep.subr.mxu0 0.0
    %3346 = vmatpush1.msra.mxu0 0.0
    %3347 = vmatprep.subr.mxu0 0.0
    %3348 = vmatpush1.msra.mxu0 0.0
    %3349 = vmatprep.subr.mxu0 0.0
    %3350 = vmatpush1.msra.mxu0 0.0
    %3351 = vmatprep.subr.mxu0 0.0
    %3352 = vmatpush1.msra.mxu0 0.0
    %3353 = vmatprep.subr.mxu0 0.0
    %3354 = vmatpush1.msra.mxu0 0.0
    %3355 = vmatprep.subr.mxu0 0.0
    %3356 = vmatpush1.msra.mxu0 0.0
    %3357 = vmatprep.subr.mxu0 0.0
    %3358 = vmatpush1.msra.mxu0 0.0
    %3359 = vmatprep.subr.mxu0 0.0
    %3360 = vmatpush1.msra.mxu0 0.0
    %3361 = vmatprep.subr.mxu0 0.0
    %3362 = vmatpush1.msra.mxu0 0.0
    %3363 = vmatprep.subr.mxu0 0.0
    %3364 = vmatpush1.msra.mxu0 0.0
    %3365 = vmatprep.subr.mxu0 0.0
    %3366 = vmatpush1.msra.mxu0 0.0
    %3367 = vmatprep.subr.mxu0 0.0
    %3368 = vmatpush1.msra.mxu0 0.0
    %3369 = vmatprep.mubr.f32.mxu0 0.0
    %3370 = vmatmul.mubr.f32.gmra.mrb[0].mxu0 %v2983
    %v3371 = vpop.f32.mrb[0].mxu0
    %v3372 = vadd.f32 0.0, %v3371
    %v3373 = vpop.f32.mrb[0].mxu0
    %3374 = vdwg.mxu0
    %3375 = vmatprep.subr.mxu0 0.0
    %3376 = vmatpush1.msra.mxu0 %v3296
    %3377 = vmatprep.subr.mxu0 0.0
    %3378 = vmatpush1.msra.mxu0 %v3297
    %3379 = vmatprep.subr.mxu0 0.0
    %3380 = vmatpush1.msra.mxu0 %v3298
    %3381 = vmatprep.subr.mxu0 0.0
    %3382 = vmatpush1.msra.mxu0 %v3299
    %3383 = vmatprep.subr.mxu0 0.0
    %3384 = vmatpush1.msra.mxu0 0.0
    %3385 = vmatprep.subr.mxu0 0.0
    %3386 = vmatpush1.msra.mxu0 0.0
    %3387 = vmatprep.subr.mxu0 0.0
    %3388 = vmatpush1.msra.mxu0 0.0
    %3389 = vmatprep.subr.mxu0 0.0
    %3390 = vmatpush1.msra.mxu0 0.0
    %3391 = vmatprep.subr.mxu0 0.0
    %3392 = vmatpush1.msra.mxu0 0.0
    %3393 = vmatprep.subr.mxu0 0.0
    %3394 = vmatpush1.msra.mxu0 0.0
    %3395 = vmatprep.subr.mxu0 0.0
    %3396 = vmatpush1.msra.mxu0 0.0
    %3397 = vmatprep.subr.mxu0 0.0
    %3398 = vmatpush1.msra.mxu0 0.0
    %3399 = vmatprep.subr.mxu0 0.0
    %3400 = vmatpush1.msra.mxu0 0.0
    %3401 = vmatprep.subr.mxu0 0.0
    %3402 = vmatpush1.msra.mxu0 0.0
    %3403 = vmatprep.subr.mxu0 0.0
    %3404 = vmatpush1.msra.mxu0 0.0
    %3405 = vmatprep.subr.mxu0 0.0
    %3406 = vmatpush1.msra.mxu0 0.0
    %3407 = vmatprep.subr.mxu0 0.0
    %3408 = vmatpush1.msra.mxu0 0.0
    %3409 = vmatprep.subr.mxu0 0.0
    %3410 = vmatpush1.msra.mxu0 0.0
    %3411 = vmatprep.subr.mxu0 0.0
    %3412 = vmatpush1.msra.mxu0 0.0
    %3413 = vmatprep.subr.mxu0 0.0
    %3414 = vmatpush1.msra.mxu0 0.0
    %3415 = vmatprep.subr.mxu0 0.0
    %3416 = vmatpush1.msra.mxu0 0.0
    %3417 = vmatprep.subr.mxu0 0.0
    %3418 = vmatpush1.msra.mxu0 0.0
    %3419 = vmatprep.subr.mxu0 0.0
    %3420 = vmatpush1.msra.mxu0 0.0
    %3421 = vmatprep.subr.mxu0 0.0
    %3422 = vmatpush1.msra.mxu0 0.0
    %3423 = vmatprep.subr.mxu0 0.0
    %3424 = vmatpush1.msra.mxu0 0.0
    %3425 = vmatprep.subr.mxu0 0.0
    %3426 = vmatpush1.msra.mxu0 0.0
    %3427 = vmatprep.subr.mxu0 0.0
    %3428 = vmatpush1.msra.mxu0 0.0
    %3429 = vmatprep.subr.mxu0 0.0
    %3430 = vmatpush1.msra.mxu0 0.0
    %3431 = vmatprep.subr.mxu0 0.0
    %3432 = vmatpush1.msra.mxu0 0.0
    %3433 = vmatprep.subr.mxu0 0.0
    %3434 = vmatpush1.msra.mxu0 0.0
    %3435 = vmatprep.subr.mxu0 0.0
    %3436 = vmatpush1.msra.mxu0 0.0
    %3437 = vmatprep.subr.mxu0 0.0
    %3438 = vmatpush1.msra.mxu0 0.0
    %3439 = vmatprep.mubr.f32.mxu0 0.0
    %3440 = vmatmul.mubr.f32.gmra.mrb[0].mxu0 %v3056
    %v3441 = vpop.f32.mrb[0].mxu0
    %v3442 = vadd.f32 %v3372, %v3441
    %v3443 = vpop.f32.mrb[0].mxu0
    %3444 = vdwg.mxu0
    %s3445 = scalar_lea.vmem [#allocation25], 2
    %v3446 = vld [vmem:[%s3445] sm:$0x1]
    %v3448 = vlaneseq
    %v3449 = vshrl.u32 %v3448, 7
    %v3450 = vsub.s32 0, %v3449
    %v3451 = vrot.slane %v3446, %v3450
    %v3453 = vadd.f32 %v3442, %v3451
    %v3454 = vld [vmem:[#allocation26] sm:$0xff]
    %v3455 = vld [vmem:[#allocation26 + $0x8] sm:$0xff]
    %v3456 = vld [vmem:[#allocation26 + $0x10] sm:$0xff]
    %v3457 = vld [vmem:[#allocation26 + $0x18] sm:$0xff]
    %v3458 = vld [vmem:[#allocation28] sm:$0x1]
    %v3460 = vlaneseq
    %v3461 = vshrl.u32 %v3460, 7
    %v3462 = vsub.s32 0, %v3461
    %v3463 = vrot.slane %v3458, %v3462
    %v3466 = vsel %vm343, %v2972, 0
    %3468 = vmatprep.subr.mxu0 0.0
    %3469 = vmatpush1.msra.mxu0 %v3454
    %3470 = vmatprep.subr.mxu0 0.0
    %3471 = vmatpush1.msra.mxu0 %v3455
    %3472 = vmatprep.subr.mxu0 0.0
    %3473 = vmatpush1.msra.mxu0 %v3456
    %3474 = vmatprep.subr.mxu0 0.0
    %3475 = vmatpush1.msra.mxu0 %v3457
    %3476 = vmatprep.subr.mxu0 0.0
    %3477 = vmatpush1.msra.mxu0 0.0
    %3478 = vmatprep.subr.mxu0 0.0
    %3479 = vmatpush1.msra.mxu0 0.0
    %3480 = vmatprep.subr.mxu0 0.0
    %3481 = vmatpush1.msra.mxu0 0.0
    %3482 = vmatprep.subr.mxu0 0.0
    %3483 = vmatpush1.msra.mxu0 0.0
    %3484 = vmatprep.subr.mxu0 0.0
    %3485 = vmatpush1.msra.mxu0 0.0
    %3486 = vmatprep.subr.mxu0 0.0
    %3487 = vmatpush1.msra.mxu0 0.0
    %3488 = vmatprep.subr.mxu0 0.0
    %3489 = vmatpush1.msra.mxu0 0.0
    %3490 = vmatprep.subr.mxu0 0.0
    %3491 = vmatpush1.msra.mxu0 0.0
    %3492 = vmatprep.subr.mxu0 0.0
    %3493 = vmatpush1.msra.mxu0 0.0
    %3494 = vmatprep.subr.mxu0 0.0
    %3495 = vmatpush1.msra.mxu0 0.0
    %3496 = vmatprep.subr.mxu0 0.0
    %3497 = vmatpush1.msra.mxu0 0.0
    %3498 = vmatprep.subr.mxu0 0.0
    %3499 = vmatpush1.msra.mxu0 0.0
    %3500 = vmatprep.subr.mxu0 0.0
    %3501 = vmatpush1.msra.mxu0 0.0
    %3502 = vmatprep.subr.mxu0 0.0
    %3503 = vmatpush1.msra.mxu0 0.0
    %3504 = vmatprep.subr.mxu0 0.0
    %3505 = vmatpush1.msra.mxu0 0.0
    %3506 = vmatprep.subr.mxu0 0.0
    %3507 = vmatpush1.msra.mxu0 0.0
    %3508 = vmatprep.subr.mxu0 0.0
    %3509 = vmatpush1.msra.mxu0 0.0
    %3510 = vmatprep.subr.mxu0 0.0
    %3511 = vmatpush1.msra.mxu0 0.0
    %3512 = vmatprep.subr.mxu0 0.0
    %3513 = vmatpush1.msra.mxu0 0.0
    %3514 = vmatprep.subr.mxu0 0.0
    %3515 = vmatpush1.msra.mxu0 0.0
    %3516 = vmatprep.subr.mxu0 0.0
    %3517 = vmatpush1.msra.mxu0 0.0
    %3518 = vmatprep.subr.mxu0 0.0
    %3519 = vmatpush1.msra.mxu0 0.0
    %3520 = vmatprep.subr.mxu0 0.0
    %3521 = vmatpush1.msra.mxu0 0.0
    %3522 = vmatprep.subr.mxu0 0.0
    %3523 = vmatpush1.msra.mxu0 0.0
    %3524 = vmatprep.subr.mxu0 0.0
    %3525 = vmatpush1.msra.mxu0 0.0
    %3526 = vmatprep.subr.mxu0 0.0
    %3527 = vmatpush1.msra.mxu0 0.0
    %3528 = vmatprep.subr.mxu0 0.0
    %3529 = vmatpush1.msra.mxu0 0.0
    %3530 = vmatprep.subr.mxu0 0.0
    %3531 = vmatpush1.msra.mxu0 0.0
    %3532 = vmatprep.mubr.f32.mxu0 0.0
    %3533 = vmatmul.mubr.f32.gmra.mrb[0].mxu0 %v3466
    %v3534 = vpop.f32.mrb[0].mxu0
    %v3535 = vadd.f32 %v3463, %v3534
    %v3536 = vpop.f32.mrb[0].mxu0
    %3537 = vdwg.mxu0
    %s3538 = scalar_lea.vmem [#allocation26], 32
    %v3539 = vld [vmem:[%s3538] sm:$0xff]
    %v3540 = vld [vmem:[%s3538 + $0x8] sm:$0xff]
    %v3541 = vld [vmem:[%s3538 + $0x10] sm:$0xff]
    %v3542 = vld [vmem:[%s3538 + $0x18] sm:$0xff]
    %s3543 = scalar_lea.vmem [#allocation28], 1
    %v3544 = vld [vmem:[%s3543] sm:$0x1]
    %v3546 = vlaneseq
    %v3547 = vshrl.u32 %v3546, 7
    %v3548 = vsub.s32 0, %v3547
    %v3549 = vrot.slane %v3544, %v3548
    %3551 = vmatprep.subr.mxu0 0.0
    %3552 = vmatpush1.msra.mxu0 %v3539
    %3553 = vmatprep.subr.mxu0 0.0
    %3554 = vmatpush1.msra.mxu0 %v3540
    %3555 = vmatprep.subr.mxu0 0.0
    %3556 = vmatpush1.msra.mxu0 %v3541
    %3557 = vmatprep.subr.mxu0 0.0
    %3558 = vmatpush1.msra.mxu0 %v3542
    %3559 = vmatprep.subr.mxu0 0.0
    %3560 = vmatpush1.msra.mxu0 0.0
    %3561 = vmatprep.subr.mxu0 0.0
    %3562 = vmatpush1.msra.mxu0 0.0
    %3563 = vmatprep.subr.mxu0 0.0
    %3564 = vmatpush1.msra.mxu0 0.0
    %3565 = vmatprep.subr.mxu0 0.0
    %3566 = vmatpush1.msra.mxu0 0.0
    %3567 = vmatprep.subr.mxu0 0.0
    %3568 = vmatpush1.msra.mxu0 0.0
    %3569 = vmatprep.subr.mxu0 0.0
    %3570 = vmatpush1.msra.mxu0 0.0
    %3571 = vmatprep.subr.mxu0 0.0
    %3572 = vmatpush1.msra.mxu0 0.0
    %3573 = vmatprep.subr.mxu0 0.0
    %3574 = vmatpush1.msra.mxu0 0.0
    %3575 = vmatprep.subr.mxu0 0.0
    %3576 = vmatpush1.msra.mxu0 0.0
    %3577 = vmatprep.subr.mxu0 0.0
    %3578 = vmatpush1.msra.mxu0 0.0
    %3579 = vmatprep.subr.mxu0 0.0
    %3580 = vmatpush1.msra.mxu0 0.0
    %3581 = vmatprep.subr.mxu0 0.0
    %3582 = vmatpush1.msra.mxu0 0.0
    %3583 = vmatprep.subr.mxu0 0.0
    %3584 = vmatpush1.msra.mxu0 0.0
    %3585 = vmatprep.subr.mxu0 0.0
    %3586 = vmatpush1.msra.mxu0 0.0
    %3587 = vmatprep.subr.mxu0 0.0
    %3588 = vmatpush1.msra.mxu0 0.0
    %3589 = vmatprep.subr.mxu0 0.0
    %3590 = vmatpush1.msra.mxu0 0.0
    %3591 = vmatprep.subr.mxu0 0.0
    %3592 = vmatpush1.msra.mxu0 0.0
    %3593 = vmatprep.subr.mxu0 0.0
    %3594 = vmatpush1.msra.mxu0 0.0
    %3595 = vmatprep.subr.mxu0 0.0
    %3596 = vmatpush1.msra.mxu0 0.0
    %3597 = vmatprep.subr.mxu0 0.0
    %3598 = vmatpush1.msra.mxu0 0.0
    %3599 = vmatprep.subr.mxu0 0.0
    %3600 = vmatpush1.msra.mxu0 0.0
    %3601 = vmatprep.subr.mxu0 0.0
    %3602 = vmatpush1.msra.mxu0 0.0
    %3603 = vmatprep.subr.mxu0 0.0
    %3604 = vmatpush1.msra.mxu0 0.0
    %3605 = vmatprep.subr.mxu0 0.0
    %3606 = vmatpush1.msra.mxu0 0.0
    %3607 = vmatprep.subr.mxu0 0.0
    %3608 = vmatpush1.msra.mxu0 0.0
    %3609 = vmatprep.subr.mxu0 0.0
    %3610 = vmatpush1.msra.mxu0 0.0
    %3611 = vmatprep.subr.mxu0 0.0
    %3612 = vmatpush1.msra.mxu0 0.0
    %3613 = vmatprep.subr.mxu0 0.0
    %3614 = vmatpush1.msra.mxu0 0.0
    %3615 = vmatprep.mubr.f32.mxu0 0.0
    %3616 = vmatmul.mubr.f32.gmra.mrb[0].mxu0 %v3466
    %v3617 = vpop.f32.mrb[0].mxu0
    %v3618 = vadd.f32 %v3549, %v3617
    %v3619 = vpop.f32.mrb[0].mxu0
    %3620 = vdwg.mxu0
    %s3621 = scalar_lea.vmem [#allocation26], 64
    %v3622 = vld [vmem:[%s3621] sm:$0xff]
    %v3623 = vld [vmem:[%s3621 + $0x8] sm:$0xff]
    %v3624 = vld [vmem:[%s3621 + $0x10] sm:$0xff]
    %v3625 = vld [vmem:[%s3621 + $0x18] sm:$0xff]
    %s3626 = scalar_lea.vmem [#allocation28], 2
    %v3627 = vld [vmem:[%s3626] sm:$0x1]
    %v3629 = vlaneseq
    %v3630 = vshrl.u32 %v3629, 7
    %v3631 = vsub.s32 0, %v3630
    %v3632 = vrot.slane %v3627, %v3631
    %3634 = vmatprep.subr.mxu0 0.0
    %3635 = vmatpush1.msra.mxu0 %v3622
    %3636 = vmatprep.subr.mxu0 0.0
    %3637 = vmatpush1.msra.mxu0 %v3623
    %3638 = vmatprep.subr.mxu0 0.0
    %3639 = vmatpush1.msra.mxu0 %v3624
    %3640 = vmatprep.subr.mxu0 0.0
    %3641 = vmatpush1.msra.mxu0 %v3625
    %3642 = vmatprep.subr.mxu0 0.0
    %3643 = vmatpush1.msra.mxu0 0.0
    %3644 = vmatprep.subr.mxu0 0.0
    %3645 = vmatpush1.msra.mxu0 0.0
    %3646 = vmatprep.subr.mxu0 0.0
    %3647 = vmatpush1.msra.mxu0 0.0
    %3648 = vmatprep.subr.mxu0 0.0
    %3649 = vmatpush1.msra.mxu0 0.0
    %3650 = vmatprep.subr.mxu0 0.0
    %3651 = vmatpush1.msra.mxu0 0.0
    %3652 = vmatprep.subr.mxu0 0.0
    %3653 = vmatpush1.msra.mxu0 0.0
    %3654 = vmatprep.subr.mxu0 0.0
    %3655 = vmatpush1.msra.mxu0 0.0
    %3656 = vmatprep.subr.mxu0 0.0
    %3657 = vmatpush1.msra.mxu0 0.0
    %3658 = vmatprep.subr.mxu0 0.0
    %3659 = vmatpush1.msra.mxu0 0.0
    %3660 = vmatprep.subr.mxu0 0.0
    %3661 = vmatpush1.msra.mxu0 0.0
    %3662 = vmatprep.subr.mxu0 0.0
    %3663 = vmatpush1.msra.mxu0 0.0
    %3664 = vmatprep.subr.mxu0 0.0
    %3665 = vmatpush1.msra.mxu0 0.0
    %3666 = vmatprep.subr.mxu0 0.0
    %3667 = vmatpush1.msra.mxu0 0.0
    %3668 = vmatprep.subr.mxu0 0.0
    %3669 = vmatpush1.msra.mxu0 0.0
    %3670 = vmatprep.subr.mxu0 0.0
    %3671 = vmatpush1.msra.mxu0 0.0
    %3672 = vmatprep.subr.mxu0 0.0
    %3673 = vmatpush1.msra.mxu0 0.0
    %3674 = vmatprep.subr.mxu0 0.0
    %3675 = vmatpush1.msra.mxu0 0.0
    %3676 = vmatprep.subr.mxu0 0.0
    %3677 = vmatpush1.msra.mxu0 0.0
    %3678 = vmatprep.subr.mxu0 0.0
    %3679 = vmatpush1.msra.mxu0 0.0
    %3680 = vmatprep.subr.mxu0 0.0
    %3681 = vmatpush1.msra.mxu0 0.0
    %3682 = vmatprep.subr.mxu0 0.0
    %3683 = vmatpush1.msra.mxu0 0.0
    %3684 = vmatprep.subr.mxu0 0.0
    %3685 = vmatpush1.msra.mxu0 0.0
    %3686 = vmatprep.subr.mxu0 0.0
    %3687 = vmatpush1.msra.mxu0 0.0
    %3688 = vmatprep.subr.mxu0 0.0
    %3689 = vmatpush1.msra.mxu0 0.0
    %3690 = vmatprep.subr.mxu0 0.0
    %3691 = vmatpush1.msra.mxu0 0.0
    %3692 = vmatprep.subr.mxu0 0.0
    %3693 = vmatpush1.msra.mxu0 0.0
    %3694 = vmatprep.subr.mxu0 0.0
    %3695 = vmatpush1.msra.mxu0 0.0
    %3696 = vmatprep.subr.mxu0 0.0
    %3697 = vmatpush1.msra.mxu0 0.0
    %3698 = vmatprep.mubr.f32.mxu0 0.0
    %3699 = vmatmul.mubr.f32.gmra.mrb[0].mxu0 %v3466
    %v3700 = vpop.f32.mrb[0].mxu0
    %v3701 = vadd.f32 %v3632, %v3700
    %v3702 = vpop.f32.mrb[0].mxu0
    %3703 = vdwg.mxu0
    %v3704 = vadd.f32 %v3135, %v3535
    %v3705 = vsub.f32 0.0, %v3704
    %v3706 = vmul.f32 %v3705, 1.442695
    %v3707 = vpow.pop %v3706
    %v3708 = vadd.f32 %v3707, 1.0
    %v3709 = vrcp.pop %v3708
    %v3710 = vadd.f32 %v3294, %v3618
    %v3711 = vsub.f32 0.0, %v3710
    %v3712 = vmul.f32 %v3711, 1.442695
    %v3713 = vpow.pop %v3712
    %v3714 = vadd.f32 %v3713, 1.0
    %v3715 = vrcp.pop %v3714
    %v3716 = vmul.f32 %v3709, %v3701
    %v3717 = vadd.f32 %v3453, %v3716
    %v3718 = vtanh.pop %v3717
    %v3719 = vsub.f32 1.0, %v3715
    %v3720 = vmul.f32 %v3719, %v3718
    %v3721 = vmul.f32 %v3715, %v2972
    %v3722 = vadd.f32 %v3720, %v3721
    %v3723 = vld [vmem:[#allocation29] sm:$0xff]
    %v3724 = vld [vmem:[#allocation29 + $0x8] sm:$0xff]
    %v3725 = vld [vmem:[#allocation29 + $0x10] sm:$0xff]
    %v3726 = vld [vmem:[#allocation29 + $0x18] sm:$0xff]
    %v3727 = vld [vmem:[%s19] sm:$0x1]
    %v3729 = vlaneseq
    %v3730 = vshrl.u32 %v3729, 7
    %v3731 = vsub.s32 0, %v3730
    %v3732 = vrot.slane %v3727, %v3731
    %v3735 = vsel %vm343, %v3722, 0
    %3737 = vmatprep.subr.mxu0 0.0
    %3738 = vmatpush1.msra.mxu0 %v3723
    %3739 = vmatprep.subr.mxu0 0.0
    %3740 = vmatpush1.msra.mxu0 %v3724
    %3741 = vmatprep.subr.mxu0 0.0
    %3742 = vmatpush1.msra.mxu0 %v3725
    %3743 = vmatprep.subr.mxu0 0.0
    %3744 = vmatpush1.msra.mxu0 %v3726
    %3745 = vmatprep.subr.mxu0 0.0
    %3746 = vmatpush1.msra.mxu0 0.0
    %3747 = vmatprep.subr.mxu0 0.0
    %3748 = vmatpush1.msra.mxu0 0.0
    %3749 = vmatprep.subr.mxu0 0.0
    %3750 = vmatpush1.msra.mxu0 0.0
    %3751 = vmatprep.subr.mxu0 0.0
    %3752 = vmatpush1.msra.mxu0 0.0
    %3753 = vmatprep.subr.mxu0 0.0
    %3754 = vmatpush1.msra.mxu0 0.0
    %3755 = vmatprep.subr.mxu0 0.0
    %3756 = vmatpush1.msra.mxu0 0.0
    %3757 = vmatprep.subr.mxu0 0.0
    %3758 = vmatpush1.msra.mxu0 0.0
    %3759 = vmatprep.subr.mxu0 0.0
    %3760 = vmatpush1.msra.mxu0 0.0
    %3761 = vmatprep.subr.mxu0 0.0
    %3762 = vmatpush1.msra.mxu0 0.0
    %3763 = vmatprep.subr.mxu0 0.0
    %3764 = vmatpush1.msra.mxu0 0.0
    %3765 = vmatprep.subr.mxu0 0.0
    %3766 = vmatpush1.msra.mxu0 0.0
    %3767 = vmatprep.subr.mxu0 0.0
    %3768 = vmatpush1.msra.mxu0 0.0
    %3769 = vmatprep.subr.mxu0 0.0
    %3770 = vmatpush1.msra.mxu0 0.0
    %3771 = vmatprep.subr.mxu0 0.0
    %3772 = vmatpush1.msra.mxu0 0.0
    %3773 = vmatprep.subr.mxu0 0.0
    %3774 = vmatpush1.msra.mxu0 0.0
    %3775 = vmatprep.subr.mxu0 0.0
    %3776 = vmatpush1.msra.mxu0 0.0
    %3777 = vmatprep.subr.mxu0 0.0
    %3778 = vmatpush1.msra.mxu0 0.0
    %3779 = vmatprep.subr.mxu0 0.0
    %3780 = vmatpush1.msra.mxu0 0.0
    %3781 = vmatprep.subr.mxu0 0.0
    %3782 = vmatpush1.msra.mxu0 0.0
    %3783 = vmatprep.subr.mxu0 0.0
    %3784 = vmatpush1.msra.mxu0 0.0
    %3785 = vmatprep.subr.mxu0 0.0
    %3786 = vmatpush1.msra.mxu0 0.0
    %3787 = vmatprep.subr.mxu0 0.0
    %3788 = vmatpush1.msra.mxu0 0.0
    %3789 = vmatprep.subr.mxu0 0.0
    %3790 = vmatpush1.msra.mxu0 0.0
    %3791 = vmatprep.subr.mxu0 0.0
    %3792 = vmatpush1.msra.mxu0 0.0
    %3793 = vmatprep.subr.mxu0 0.0
    %3794 = vmatpush1.msra.mxu0 0.0
    %3795 = vmatprep.subr.mxu0 0.0
    %3796 = vmatpush1.msra.mxu0 0.0
    %3797 = vmatprep.subr.mxu0 0.0
    %3798 = vmatpush1.msra.mxu0 0.0
    %3799 = vmatprep.subr.mxu0 0.0
    %3800 = vmatpush1.msra.mxu0 0.0
    %3801 = vmatprep.mubr.f32.mxu0 0.0
    %3802 = vmatmul.mubr.f32.gmra.mrb[0].mxu0 %v3735
    %v3803 = vpop.f32.mrb[0].mxu0
    %v3804 = vadd.f32 %v3732, %v3803
    %v3805 = vpop.f32.mrb[0].mxu0
    %3806 = vdwg.mxu0
    %s3807 = scalar_lea.vmem [#allocation29], 32
    %v3808 = vld [vmem:[%s3807] sm:$0xff]
    %v3809 = vld [vmem:[%s3807 + $0x8] sm:$0xff]
    %v3810 = vld [vmem:[%s3807 + $0x10] sm:$0xff]
    %v3811 = vld [vmem:[%s3807 + $0x18] sm:$0xff]
    %s3812 = scalar_lea.vmem %s19, 1
    %v3813 = vld [vmem:[%s3812] sm:$0x1]
    %v3815 = vlaneseq
    %v3816 = vshrl.u32 %v3815, 7
    %v3817 = vsub.s32 0, %v3816
    %v3818 = vrot.slane %v3813, %v3817
    %3820 = vmatprep.subr.mxu0 0.0
    %3821 = vmatpush1.msra.mxu0 %v3808
    %3822 = vmatprep.subr.mxu0 0.0
    %3823 = vmatpush1.msra.mxu0 %v3809
    %3824 = vmatprep.subr.mxu0 0.0
    %3825 = vmatpush1.msra.mxu0 %v3810
    %3826 = vmatprep.subr.mxu0 0.0
    %3827 = vmatpush1.msra.mxu0 %v3811
    %3828 = vmatprep.subr.mxu0 0.0
    %3829 = vmatpush1.msra.mxu0 0.0
    %3830 = vmatprep.subr.mxu0 0.0
    %3831 = vmatpush1.msra.mxu0 0.0
    %3832 = vmatprep.subr.mxu0 0.0
    %3833 = vmatpush1.msra.mxu0 0.0
    %3834 = vmatprep.subr.mxu0 0.0
    %3835 = vmatpush1.msra.mxu0 0.0
    %3836 = vmatprep.subr.mxu0 0.0
    %3837 = vmatpush1.msra.mxu0 0.0
    %3838 = vmatprep.subr.mxu0 0.0
    %3839 = vmatpush1.msra.mxu0 0.0
    %3840 = vmatprep.subr.mxu0 0.0
    %3841 = vmatpush1.msra.mxu0 0.0
    %3842 = vmatprep.subr.mxu0 0.0
    %3843 = vmatpush1.msra.mxu0 0.0
    %3844 = vmatprep.subr.mxu0 0.0
    %3845 = vmatpush1.msra.mxu0 0.0
    %3846 = vmatprep.subr.mxu0 0.0
    %3847 = vmatpush1.msra.mxu0 0.0
    %3848 = vmatprep.subr.mxu0 0.0
    %3849 = vmatpush1.msra.mxu0 0.0
    %3850 = vmatprep.subr.mxu0 0.0
    %3851 = vmatpush1.msra.mxu0 0.0
    %3852 = vmatprep.subr.mxu0 0.0
    %3853 = vmatpush1.msra.mxu0 0.0
    %3854 = vmatprep.subr.mxu0 0.0
    %3855 = vmatpush1.msra.mxu0 0.0
    %3856 = vmatprep.subr.mxu0 0.0
    %3857 = vmatpush1.msra.mxu0 0.0
    %3858 = vmatprep.subr.mxu0 0.0
    %3859 = vmatpush1.msra.mxu0 0.0
    %3860 = vmatprep.subr.mxu0 0.0
    %3861 = vmatpush1.msra.mxu0 0.0
    %3862 = vmatprep.subr.mxu0 0.0
    %3863 = vmatpush1.msra.mxu0 0.0
    %3864 = vmatprep.subr.mxu0 0.0
    %3865 = vmatpush1.msra.mxu0 0.0
    %3866 = vmatprep.subr.mxu0 0.0
    %3867 = vmatpush1.msra.mxu0 0.0
    %3868 = vmatprep.subr.mxu0 0.0
    %3869 = vmatpush1.msra.mxu0 0.0
    %3870 = vmatprep.subr.mxu0 0.0
    %3871 = vmatpush1.msra.mxu0 0.0
    %3872 = vmatprep.subr.mxu0 0.0
    %3873 = vmatpush1.msra.mxu0 0.0
    %3874 = vmatprep.subr.mxu0 0.0
    %3875 = vmatpush1.msra.mxu0 0.0
    %3876 = vmatprep.subr.mxu0 0.0
    %3877 = vmatpush1.msra.mxu0 0.0
    %3878 = vmatprep.subr.mxu0 0.0
    %3879 = vmatpush1.msra.mxu0 0.0
    %3880 = vmatprep.subr.mxu0 0.0
    %3881 = vmatpush1.msra.mxu0 0.0
    %3882 = vmatprep.subr.mxu0 0.0
    %3883 = vmatpush1.msra.mxu0 0.0
    %3884 = vmatprep.mubr.f32.mxu0 0.0
    %3885 = vmatmul.mubr.f32.gmra.mrb[0].mxu0 %v3735
    %v3886 = vpop.f32.mrb[0].mxu0
    %v3887 = vadd.f32 %v3818, %v3886
    %v3888 = vpop.f32.mrb[0].mxu0
    %3889 = vdwg.mxu0
    %s3890 = scalar_lea.vmem [#allocation29], 64
    %v3891 = vld [vmem:[%s3890] sm:$0xff]
    %v3892 = vld [vmem:[%s3890 + $0x8] sm:$0xff]
    %v3893 = vld [vmem:[%s3890 + $0x10] sm:$0xff]
    %v3894 = vld [vmem:[%s3890 + $0x18] sm:$0xff]
    %s3895 = scalar_lea.vmem %s19, 2
    %v3896 = vld [vmem:[%s3895] sm:$0x1]
    %v3898 = vlaneseq
    %v3899 = vshrl.u32 %v3898, 7
    %v3900 = vsub.s32 0, %v3899
    %v3901 = vrot.slane %v3896, %v3900
    %3903 = vmatprep.subr.mxu0 0.0
    %3904 = vmatpush1.msra.mxu0 %v3891
    %3905 = vmatprep.subr.mxu0 0.0
    %3906 = vmatpush1.msra.mxu0 %v3892
    %3907 = vmatprep.subr.mxu0 0.0
    %3908 = vmatpush1.msra.mxu0 %v3893
    %3909 = vmatprep.subr.mxu0 0.0
    %3910 = vmatpush1.msra.mxu0 %v3894
    %3911 = vmatprep.subr.mxu0 0.0
    %3912 = vmatpush1.msra.mxu0 0.0
    %3913 = vmatprep.subr.mxu0 0.0
    %3914 = vmatpush1.msra.mxu0 0.0
    %3915 = vmatprep.subr.mxu0 0.0
    %3916 = vmatpush1.msra.mxu0 0.0
    %3917 = vmatprep.subr.mxu0 0.0
    %3918 = vmatpush1.msra.mxu0 0.0
    %3919 = vmatprep.subr.mxu0 0.0
    %3920 = vmatpush1.msra.mxu0 0.0
    %3921 = vmatprep.subr.mxu0 0.0
    %3922 = vmatpush1.msra.mxu0 0.0
    %3923 = vmatprep.subr.mxu0 0.0
    %3924 = vmatpush1.msra.mxu0 0.0
    %3925 = vmatprep.subr.mxu0 0.0
    %3926 = vmatpush1.msra.mxu0 0.0
    %3927 = vmatprep.subr.mxu0 0.0
    %3928 = vmatpush1.msra.mxu0 0.0
    %3929 = vmatprep.subr.mxu0 0.0
    %3930 = vmatpush1.msra.mxu0 0.0
    %3931 = vmatprep.subr.mxu0 0.0
    %3932 = vmatpush1.msra.mxu0 0.0
    %3933 = vmatprep.subr.mxu0 0.0
    %3934 = vmatpush1.msra.mxu0 0.0
    %3935 = vmatprep.subr.mxu0 0.0
    %3936 = vmatpush1.msra.mxu0 0.0
    %3937 = vmatprep.subr.mxu0 0.0
    %3938 = vmatpush1.msra.mxu0 0.0
    %3939 = vmatprep.subr.mxu0 0.0
    %3940 = vmatpush1.msra.mxu0 0.0
    %3941 = vmatprep.subr.mxu0 0.0
    %3942 = vmatpush1.msra.mxu0 0.0
    %3943 = vmatprep.subr.mxu0 0.0
    %3944 = vmatpush1.msra.mxu0 0.0
    %3945 = vmatprep.subr.mxu0 0.0
    %3946 = vmatpush1.msra.mxu0 0.0
    %3947 = vmatprep.subr.mxu0 0.0
    %3948 = vmatpush1.msra.mxu0 0.0
    %3949 = vmatprep.subr.mxu0 0.0
    %3950 = vmatpush1.msra.mxu0 0.0
    %3951 = vmatprep.subr.mxu0 0.0
    %3952 = vmatpush1.msra.mxu0 0.0
    %3953 = vmatprep.subr.mxu0 0.0
    %3954 = vmatpush1.msra.mxu0 0.0
    %3955 = vmatprep.subr.mxu0 0.0
    %3956 = vmatpush1.msra.mxu0 0.0
    %3957 = vmatprep.subr.mxu0 0.0
    %3958 = vmatpush1.msra.mxu0 0.0
    %3959 = vmatprep.subr.mxu0 0.0
    %3960 = vmatpush1.msra.mxu0 0.0
    %3961 = vmatprep.subr.mxu0 0.0
    %3962 = vmatpush1.msra.mxu0 0.0
    %3963 = vmatprep.subr.mxu0 0.0
    %3964 = vmatpush1.msra.mxu0 0.0
    %3965 = vmatprep.subr.mxu0 0.0
    %3966 = vmatpush1.msra.mxu0 0.0
    %3967 = vmatprep.mubr.f32.mxu0 0.0
    %3968 = vmatmul.mubr.f32.gmra.mrb[0].mxu0 %v3735
    %v3969 = vpop.f32.mrb[0].mxu0
    %v3970 = vadd.f32 %v3901, %v3969
    %v3971 = vpop.f32.mrb[0].mxu0
    %3972 = vdwg.mxu0
    %v3973 = vld [vmem:[#allocation31] sm:$0xff]
    %v3974 = vld [vmem:[#allocation31 + $0x8] sm:$0xff]
    %v3975 = vld [vmem:[#allocation31 + $0x10] sm:$0xff]
    %v3976 = vld [vmem:[#allocation31 + $0x18] sm:$0xff]
    %v3977 = vld [vmem:[%s21] sm:$0x1]
    %v3979 = vlaneseq
    %v3980 = vshrl.u32 %v3979, 7
    %v3981 = vsub.s32 0, %v3980
    %v3982 = vrot.slane %v3977, %v3981
    %v3985 = vsel %vm343, %v2973, 0
    %3987 = vmatprep.subr.mxu0 0.0
    %3988 = vmatpush1.msra.mxu0 %v3973
    %3989 = vmatprep.subr.mxu0 0.0
    %3990 = vmatpush1.msra.mxu0 %v3974
    %3991 = vmatprep.subr.mxu0 0.0
    %3992 = vmatpush1.msra.mxu0 %v3975
    %3993 = vmatprep.subr.mxu0 0.0
    %3994 = vmatpush1.msra.mxu0 %v3976
    %3995 = vmatprep.subr.mxu0 0.0
    %3996 = vmatpush1.msra.mxu0 0.0
    %3997 = vmatprep.subr.mxu0 0.0
    %3998 = vmatpush1.msra.mxu0 0.0
    %3999 = vmatprep.subr.mxu0 0.0
    %4000 = vmatpush1.msra.mxu0 0.0
    %4001 = vmatprep.subr.mxu0 0.0
    %4002 = vmatpush1.msra.mxu0 0.0
    %4003 = vmatprep.subr.mxu0 0.0
    %4004 = vmatpush1.msra.mxu0 0.0
    %4005 = vmatprep.subr.mxu0 0.0
    %4006 = vmatpush1.msra.mxu0 0.0
    %4007 = vmatprep.subr.mxu0 0.0
    %4008 = vmatpush1.msra.mxu0 0.0
    %4009 = vmatprep.subr.mxu0 0.0
    %4010 = vmatpush1.msra.mxu0 0.0
    %4011 = vmatprep.subr.mxu0 0.0
    %4012 = vmatpush1.msra.mxu0 0.0
    %4013 = vmatprep.subr.mxu0 0.0
    %4014 = vmatpush1.msra.mxu0 0.0
    %4015 = vmatprep.subr.mxu0 0.0
    %4016 = vmatpush1.msra.mxu0 0.0
    %4017 = vmatprep.subr.mxu0 0.0
    %4018 = vmatpush1.msra.mxu0 0.0
    %4019 = vmatprep.subr.mxu0 0.0
    %4020 = vmatpush1.msra.mxu0 0.0
    %4021 = vmatprep.subr.mxu0 0.0
    %4022 = vmatpush1.msra.mxu0 0.0
    %4023 = vmatprep.subr.mxu0 0.0
    %4024 = vmatpush1.msra.mxu0 0.0
    %4025 = vmatprep.subr.mxu0 0.0
    %4026 = vmatpush1.msra.mxu0 0.0
    %4027 = vmatprep.subr.mxu0 0.0
    %4028 = vmatpush1.msra.mxu0 0.0
    %4029 = vmatprep.subr.mxu0 0.0
    %4030 = vmatpush1.msra.mxu0 0.0
    %4031 = vmatprep.subr.mxu0 0.0
    %4032 = vmatpush1.msra.mxu0 0.0
    %4033 = vmatprep.subr.mxu0 0.0
    %4034 = vmatpush1.msra.mxu0 0.0
    %4035 = vmatprep.subr.mxu0 0.0
    %4036 = vmatpush1.msra.mxu0 0.0
    %4037 = vmatprep.subr.mxu0 0.0
    %4038 = vmatpush1.msra.mxu0 0.0
    %4039 = vmatprep.subr.mxu0 0.0
    %4040 = vmatpush1.msra.mxu0 0.0
    %4041 = vmatprep.subr.mxu0 0.0
    %4042 = vmatpush1.msra.mxu0 0.0
    %4043 = vmatprep.subr.mxu0 0.0
    %4044 = vmatpush1.msra.mxu0 0.0
    %4045 = vmatprep.subr.mxu0 0.0
    %4046 = vmatpush1.msra.mxu0 0.0
    %4047 = vmatprep.subr.mxu0 0.0
    %4048 = vmatpush1.msra.mxu0 0.0
    %4049 = vmatprep.subr.mxu0 0.0
    %4050 = vmatpush1.msra.mxu0 0.0
    %4051 = vmatprep.mubr.f32.mxu0 0.0
    %4052 = vmatmul.mubr.f32.gmra.mrb[0].mxu0 %v3985
    %v4053 = vpop.f32.mrb[0].mxu0
    %v4054 = vadd.f32 %v3982, %v4053
    %v4055 = vpop.f32.mrb[0].mxu0
    %4056 = vdwg.mxu0
    %s4057 = scalar_lea.vmem [#allocation31], 32
    %v4058 = vld [vmem:[%s4057] sm:$0xff]
    %v4059 = vld [vmem:[%s4057 + $0x8] sm:$0xff]
    %v4060 = vld [vmem:[%s4057 + $0x10] sm:$0xff]
    %v4061 = vld [vmem:[%s4057 + $0x18] sm:$0xff]
    %s4062 = scalar_lea.vmem %s21, 1
    %v4063 = vld [vmem:[%s4062] sm:$0x1]
    %v4065 = vlaneseq
    %v4066 = vshrl.u32 %v4065, 7
    %v4067 = vsub.s32 0, %v4066
    %v4068 = vrot.slane %v4063, %v4067
    %4070 = vmatprep.subr.mxu0 0.0
    %4071 = vmatpush1.msra.mxu0 %v4058
    %4072 = vmatprep.subr.mxu0 0.0
    %4073 = vmatpush1.msra.mxu0 %v4059
    %4074 = vmatprep.subr.mxu0 0.0
    %4075 = vmatpush1.msra.mxu0 %v4060
    %4076 = vmatprep.subr.mxu0 0.0
    %4077 = vmatpush1.msra.mxu0 %v4061
    %4078 = vmatprep.subr.mxu0 0.0
    %4079 = vmatpush1.msra.mxu0 0.0
    %4080 = vmatprep.subr.mxu0 0.0
    %4081 = vmatpush1.msra.mxu0 0.0
    %4082 = vmatprep.subr.mxu0 0.0
    %4083 = vmatpush1.msra.mxu0 0.0
    %4084 = vmatprep.subr.mxu0 0.0
    %4085 = vmatpush1.msra.mxu0 0.0
    %4086 = vmatprep.subr.mxu0 0.0
    %4087 = vmatpush1.msra.mxu0 0.0
    %4088 = vmatprep.subr.mxu0 0.0
    %4089 = vmatpush1.msra.mxu0 0.0
    %4090 = vmatprep.subr.mxu0 0.0
    %4091 = vmatpush1.msra.mxu0 0.0
    %4092 = vmatprep.subr.mxu0 0.0
    %4093 = vmatpush1.msra.mxu0 0.0
    %4094 = vmatprep.subr.mxu0 0.0
    %4095 = vmatpush1.msra.mxu0 0.0
    %4096 = vmatprep.subr.mxu0 0.0
    %4097 = vmatpush1.msra.mxu0 0.0
    %4098 = vmatprep.subr.mxu0 0.0
    %4099 = vmatpush1.msra.mxu0 0.0
    %4100 = vmatprep.subr.mxu0 0.0
    %4101 = vmatpush1.msra.mxu0 0.0
    %4102 = vmatprep.subr.mxu0 0.0
    %4103 = vmatpush1.msra.mxu0 0.0
    %4104 = vmatprep.subr.mxu0 0.0
    %4105 = vmatpush1.msra.mxu0 0.0
    %4106 = vmatprep.subr.mxu0 0.0
    %4107 = vmatpush1.msra.mxu0 0.0
    %4108 = vmatprep.subr.mxu0 0.0
    %4109 = vmatpush1.msra.mxu0 0.0
    %4110 = vmatprep.subr.mxu0 0.0
    %4111 = vmatpush1.msra.mxu0 0.0
    %4112 = vmatprep.subr.mxu0 0.0
    %4113 = vmatpush1.msra.mxu0 0.0
    %4114 = vmatprep.subr.mxu0 0.0
    %4115 = vmatpush1.msra.mxu0 0.0
    %4116 = vmatprep.subr.mxu0 0.0
    %4117 = vmatpush1.msra.mxu0 0.0
    %4118 = vmatprep.subr.mxu0 0.0
    %4119 = vmatpush1.msra.mxu0 0.0
    %4120 = vmatprep.subr.mxu0 0.0
    %4121 = vmatpush1.msra.mxu0 0.0
    %4122 = vmatprep.subr.mxu0 0.0
    %4123 = vmatpush1.msra.mxu0 0.0
    %4124 = vmatprep.subr.mxu0 0.0
    %4125 = vmatpush1.msra.mxu0 0.0
    %4126 = vmatprep.subr.mxu0 0.0
    %4127 = vmatpush1.msra.mxu0 0.0
    %4128 = vmatprep.subr.mxu0 0.0
    %4129 = vmatpush1.msra.mxu0 0.0
    %4130 = vmatprep.subr.mxu0 0.0
    %4131 = vmatpush1.msra.mxu0 0.0
    %4132 = vmatprep.subr.mxu0 0.0
    %4133 = vmatpush1.msra.mxu0 0.0
    %4134 = vmatprep.mubr.f32.mxu0 0.0
    %4135 = vmatmul.mubr.f32.gmra.mrb[0].mxu0 %v3985
    %v4136 = vpop.f32.mrb[0].mxu0
    %v4137 = vadd.f32 %v4068, %v4136
    %v4138 = vpop.f32.mrb[0].mxu0
    %4139 = vdwg.mxu0
    %s4140 = scalar_lea.vmem [#allocation31], 64
    %v4141 = vld [vmem:[%s4140] sm:$0xff]
    %v4142 = vld [vmem:[%s4140 + $0x8] sm:$0xff]
    %v4143 = vld [vmem:[%s4140 + $0x10] sm:$0xff]
    %v4144 = vld [vmem:[%s4140 + $0x18] sm:$0xff]
    %s4145 = scalar_lea.vmem %s21, 2
    %v4146 = vld [vmem:[%s4145] sm:$0x1]
    %v4148 = vlaneseq
    %v4149 = vshrl.u32 %v4148, 7
    %v4150 = vsub.s32 0, %v4149
    %v4151 = vrot.slane %v4146, %v4150
    %4153 = vmatprep.subr.mxu0 0.0
    %4154 = vmatpush1.msra.mxu0 %v4141
    %4155 = vmatprep.subr.mxu0 0.0
    %4156 = vmatpush1.msra.mxu0 %v4142
    %4157 = vmatprep.subr.mxu0 0.0
    %4158 = vmatpush1.msra.mxu0 %v4143
    %4159 = vmatprep.subr.mxu0 0.0
    %4160 = vmatpush1.msra.mxu0 %v4144
    %4161 = vmatprep.subr.mxu0 0.0
    %4162 = vmatpush1.msra.mxu0 0.0
    %4163 = vmatprep.subr.mxu0 0.0
    %4164 = vmatpush1.msra.mxu0 0.0
    %4165 = vmatprep.subr.mxu0 0.0
    %4166 = vmatpush1.msra.mxu0 0.0
    %4167 = vmatprep.subr.mxu0 0.0
    %4168 = vmatpush1.msra.mxu0 0.0
    %4169 = vmatprep.subr.mxu0 0.0
    %4170 = vmatpush1.msra.mxu0 0.0
    %4171 = vmatprep.subr.mxu0 0.0
    %4172 = vmatpush1.msra.mxu0 0.0
    %4173 = vmatprep.subr.mxu0 0.0
    %4174 = vmatpush1.msra.mxu0 0.0
    %4175 = vmatprep.subr.mxu0 0.0
    %4176 = vmatpush1.msra.mxu0 0.0
    %4177 = vmatprep.subr.mxu0 0.0
    %4178 = vmatpush1.msra.mxu0 0.0
    %4179 = vmatprep.subr.mxu0 0.0
    %4180 = vmatpush1.msra.mxu0 0.0
    %4181 = vmatprep.subr.mxu0 0.0
    %4182 = vmatpush1.msra.mxu0 0.0
    %4183 = vmatprep.subr.mxu0 0.0
    %4184 = vmatpush1.msra.mxu0 0.0
    %4185 = vmatprep.subr.mxu0 0.0
    %4186 = vmatpush1.msra.mxu0 0.0
    %4187 = vmatprep.subr.mxu0 0.0
    %4188 = vmatpush1.msra.mxu0 0.0
    %4189 = vmatprep.subr.mxu0 0.0
    %4190 = vmatpush1.msra.mxu0 0.0
    %4191 = vmatprep.subr.mxu0 0.0
    %4192 = vmatpush1.msra.mxu0 0.0
    %4193 = vmatprep.subr.mxu0 0.0
    %4194 = vmatpush1.msra.mxu0 0.0
    %4195 = vmatprep.subr.mxu0 0.0
    %4196 = vmatpush1.msra.mxu0 0.0
    %4197 = vmatprep.subr.mxu0 0.0
    %4198 = vmatpush1.msra.mxu0 0.0
    %4199 = vmatprep.subr.mxu0 0.0
    %4200 = vmatpush1.msra.mxu0 0.0
    %4201 = vmatprep.subr.mxu0 0.0
    %4202 = vmatpush1.msra.mxu0 0.0
    %4203 = vmatprep.subr.mxu0 0.0
    %4204 = vmatpush1.msra.mxu0 0.0
    %4205 = vmatprep.subr.mxu0 0.0
    %4206 = vmatpush1.msra.mxu0 0.0
    %4207 = vmatprep.subr.mxu0 0.0
    %4208 = vmatpush1.msra.mxu0 0.0
    %4209 = vmatprep.subr.mxu0 0.0
    %4210 = vmatpush1.msra.mxu0 0.0
    %4211 = vmatprep.subr.mxu0 0.0
    %4212 = vmatpush1.msra.mxu0 0.0
    %4213 = vmatprep.subr.mxu0 0.0
    %4214 = vmatpush1.msra.mxu0 0.0
    %4215 = vmatprep.subr.mxu0 0.0
    %4216 = vmatpush1.msra.mxu0 0.0
    %4217 = vmatprep.mubr.f32.mxu0 0.0
    %4218 = vmatmul.mubr.f32.gmra.mrb[0].mxu0 %v3985
    %v4219 = vpop.f32.mrb[0].mxu0
    %v4220 = vadd.f32 %v4151, %v4219
    %v4221 = vpop.f32.mrb[0].mxu0
    %4222 = vdwg.mxu0
    %v4223 = vadd.f32 %v3804, %v4054
    %v4224 = vsub.f32 0.0, %v4223
    %v4225 = vmul.f32 %v4224, 1.442695
    %v4226 = vpow.pop %v4225
    %v4227 = vadd.f32 %v4226, 1.0
    %v4228 = vrcp.pop %v4227
    %v4229 = vadd.f32 %v3887, %v4137
    %v4230 = vsub.f32 0.0, %v4229
    %v4231 = vmul.f32 %v4230, 1.442695
    %v4232 = vpow.pop %v4231
    %v4233 = vadd.f32 %v4232, 1.0
    %v4234 = vrcp.pop %v4233
    %v4235 = vmul.f32 %v4228, %v4220
    %v4236 = vadd.f32 %v3970, %v4235
    %v4237 = vtanh.pop %v4236
    %v4238 = vsub.f32 1.0, %v4234
    %v4239 = vmul.f32 %v4238, %v4237
    %v4240 = vmul.f32 %v4234, %v2973
    %v4241 = vadd.f32 %v4239, %v4240
    %v4242 = vld [vmem:[%s22] sm:$0xff]
    %v4243 = vld [vmem:[%s22 + $0x8] sm:$0xff]
    %v4244 = vld [vmem:[%s22 + $0x10] sm:$0xff]
    %v4245 = vld [vmem:[%s22 + $0x18] sm:$0xff]
    %v4246 = vld [vmem:[%s23] sm:$0x1]
    %v4248 = vlaneseq
    %v4249 = vshrl.u32 %v4248, 7
    %v4250 = vsub.s32 0, %v4249
    %v4251 = vrot.slane %v4246, %v4250
    %v4254 = vsel %vm343, %v4241, 0
    %4256 = vmatprep.subr.mxu0 0.0
    %4257 = vmatpush1.msra.mxu0 %v4242
    %4258 = vmatprep.subr.mxu0 0.0
    %4259 = vmatpush1.msra.mxu0 %v4243
    %4260 = vmatprep.subr.mxu0 0.0
    %4261 = vmatpush1.msra.mxu0 %v4244
    %4262 = vmatprep.subr.mxu0 0.0
    %4263 = vmatpush1.msra.mxu0 %v4245
    %4264 = vmatprep.subr.mxu0 0.0
    %4265 = vmatpush1.msra.mxu0 0.0
    %4266 = vmatprep.subr.mxu0 0.0
    %4267 = vmatpush1.msra.mxu0 0.0
    %4268 = vmatprep.subr.mxu0 0.0
    %4269 = vmatpush1.msra.mxu0 0.0
    %4270 = vmatprep.subr.mxu0 0.0
    %4271 = vmatpush1.msra.mxu0 0.0
    %4272 = vmatprep.subr.mxu0 0.0
    %4273 = vmatpush1.msra.mxu0 0.0
    %4274 = vmatprep.subr.mxu0 0.0
    %4275 = vmatpush1.msra.mxu0 0.0
    %4276 = vmatprep.subr.mxu0 0.0
    %4277 = vmatpush1.msra.mxu0 0.0
    %4278 = vmatprep.subr.mxu0 0.0
    %4279 = vmatpush1.msra.mxu0 0.0
    %4280 = vmatprep.subr.mxu0 0.0
    %4281 = vmatpush1.msra.mxu0 0.0
    %4282 = vmatprep.subr.mxu0 0.0
    %4283 = vmatpush1.msra.mxu0 0.0
    %4284 = vmatprep.subr.mxu0 0.0
    %4285 = vmatpush1.msra.mxu0 0.0
    %4286 = vmatprep.subr.mxu0 0.0
    %4287 = vmatpush1.msra.mxu0 0.0
    %4288 = vmatprep.subr.mxu0 0.0
    %4289 = vmatpush1.msra.mxu0 0.0
    %4290 = vmatprep.subr.mxu0 0.0
    %4291 = vmatpush1.msra.mxu0 0.0
    %4292 = vmatprep.subr.mxu0 0.0
    %4293 = vmatpush1.msra.mxu0 0.0
    %4294 = vmatprep.subr.mxu0 0.0
    %4295 = vmatpush1.msra.mxu0 0.0
    %4296 = vmatprep.subr.mxu0 0.0
    %4297 = vmatpush1.msra.mxu0 0.0
    %4298 = vmatprep.subr.mxu0 0.0
    %4299 = vmatpush1.msra.mxu0 0.0
    %4300 = vmatprep.subr.mxu0 0.0
    %4301 = vmatpush1.msra.mxu0 0.0
    %4302 = vmatprep.subr.mxu0 0.0
    %4303 = vmatpush1.msra.mxu0 0.0
    %4304 = vmatprep.subr.mxu0 0.0
    %4305 = vmatpush1.msra.mxu0 0.0
    %4306 = vmatprep.subr.mxu0 0.0
    %4307 = vmatpush1.msra.mxu0 0.0
    %4308 = vmatprep.subr.mxu0 0.0
    %4309 = vmatpush1.msra.mxu0 0.0
    %4310 = vmatprep.subr.mxu0 0.0
    %4311 = vmatpush1.msra.mxu0 0.0
    %4312 = vmatprep.subr.mxu0 0.0
    %4313 = vmatpush1.msra.mxu0 0.0
    %4314 = vmatprep.subr.mxu0 0.0
    %4315 = vmatpush1.msra.mxu0 0.0
    %4316 = vmatprep.subr.mxu0 0.0
    %4317 = vmatpush1.msra.mxu0 0.0
    %4318 = vmatprep.subr.mxu0 0.0
    %4319 = vmatpush1.msra.mxu0 0.0
    %4320 = vmatprep.mubr.f32.mxu0 0.0
    %4321 = vmatmul.mubr.f32.gmra.mrb[0].mxu0 %v4254
    %v4322 = vpop.f32.mrb[0].mxu0
    %v4323 = vadd.f32 %v4251, %v4322
    %v4324 = vpop.f32.mrb[0].mxu0
    %4325 = vdwg.mxu0
    %vm4326 = vcmask 519168
    %v4327 = vsel %vm4326, %v4323, -inf
    %4328 = vmax.xlane.f32.xlu0 %v4327
    %v4329 = vpop.xlane.xlu0 %4328
    %v4330 = vsub.f32 %v4323, %v4329
    %v4331 = vmul.f32 %v4330, 1.442695
    %v4332 = vpow.pop %v4331
    %v4333 = vsel %vm4326, %v4332, 0.0
    %4334 = vadd.xlane.f32.xlu0 %v4333
    %v4335 = vpop.xlane.xlu0 %4334
    %v4336 = vlog2.pop %v4335
    %v4337 = vmul.f32 %v4336, 0.6931472
    %v4338 = vsub.f32 %v4330, %v4337
    %4339 = vst.msk [vmem:[#allocation32] sm:$0xf] %vm4326, %v4338
    %4340 = vst.msk [vmem:[#allocation33] sm:$0xf] %vm2871, %v3722
    %4341 = vst.msk [vmem:[#allocation35] sm:$0xf] %vm2871, %v4241
    // Predicated region
    $region174: #{tpu_custom_call.1} parent=1 // pred_check
      _
    $region175: #{tpu_custom_call.1} parent=1 // pred_check_branch
      %4343 = sbr.rel (0) target = $region177
    $region176: #{tpu_custom_call.1} parent=1 // pred_region
      %s4345 = ssub.s32 64, 64
      %4346 = vsyncadd [#allocation4], %s4345
      %s4348 = sshll.u32 [#allocation32], 4
      %s4349 = int_to_ptr.vmem [resolvable:$true] %s4348
      %4351 = dma.vmem_to_hbm [thread:$0]  %s4349, 64, %s24, [#allocation4]
    $region177: #{tpu_custom_call.1} parent=1 // pred_fallthru
      _
    // Predicated region
    $region178: #{tpu_custom_call.1} parent=1 // pred_check
      _
    $region179: #{tpu_custom_call.1} parent=1 // pred_check_branch
      %4353 = sbr.rel (0) target = $region181
    $region180: #{tpu_custom_call.1} parent=1 // pred_region
      %s4355 = ssub.s32 64, 64
      %4356 = vsyncadd [#allocation34], %s4355
      %s4358 = sshll.u32 [#allocation33], 4
      %s4359 = int_to_ptr.vmem [resolvable:$true] %s4358
      %4361 = dma.vmem_to_hbm [thread:$0]  %s4359, 64, %s25, [#allocation34]
    $region181: #{tpu_custom_call.1} parent=1 // pred_fallthru
      _
    // Predicated region
    $region182: #{tpu_custom_call.1} parent=1 // pred_check
      _
    $region183: #{tpu_custom_call.1} parent=1 // pred_check_branch
      %4363 = sbr.rel (0) target = $region185
    $region184: #{tpu_custom_call.1} parent=1 // pred_region
      %s4365 = ssub.s32 64, 64
      %4366 = vsyncadd [#allocation34], %s4365
      %s4368 = sshll.u32 [#allocation35], 4
      %s4369 = int_to_ptr.vmem [resolvable:$true] %s4368
      %4371 = dma.vmem_to_hbm [thread:$0]  %s4369, 64, %s26, [#allocation34]
    $region185: #{tpu_custom_call.1} parent=1 // pred_fallthru
      _
    // Predicated region
    $region186: #{tpu_custom_call.1} parent=1 // pred_check
      _
    $region187: #{tpu_custom_call.1} parent=1 // pred_check_branch
      %4373 = sbr.rel (0) target = $region189
    $region188: #{tpu_custom_call.1} parent=1 // pred_region
      %4374 = dma.done [#allocation4], 64
    $region189: #{tpu_custom_call.1} parent=1 // pred_fallthru
      _
    // Predicated region
    $region190: #{tpu_custom_call.1} parent=1 // pred_check
      _
    $region191: #{tpu_custom_call.1} parent=1 // pred_check_branch
      %4376 = sbr.rel (0) target = $region193
    $region192: #{tpu_custom_call.1} parent=1 // pred_region
      %4377 = dma.done [#allocation34], 64
    $region193: #{tpu_custom_call.1} parent=1 // pred_fallthru
      _
    // Predicated region
    $region194: #{tpu_custom_call.1} parent=1 // pred_check
      _
    $region195: #{tpu_custom_call.1} parent=1 // pred_check_branch
      %4379 = sbr.rel (0) target = $region197
    $region196: #{tpu_custom_call.1} parent=1 // pred_region
      %4380 = dma.done [#allocation34], 64
    $region197: #{tpu_custom_call.1} parent=1 // pred_fallthru
      _
    %4381 = vsyncpa [#allocation3], 1
    %4382 = vsyncpa [#allocation6], 1
    %4383 = vsyncpa [#allocation9], 1
    %4384 = vsyncpa [#allocation12], 1
    %4385 = vsyncpa [#allocation15], 1
    %4386 = vsyncpa [#allocation18], 1
    %4387 = vsyncpa [#allocation21], 1
    %4388 = vsyncpa [#allocation24], 1
    %4389 = vsyncpa [#allocation27], 1
    %4390 = vsyncpa [#allocation30], 1
    %4391 = vsyncpa [#allocation4], 1
    %4392 = vsyncpa [#allocation34], 1

</llo_original>
